<compile_context>
chip_gen: v7x
topology: tpu7x:2x2x1
jax: 0.10.0
libtpu: 0.0.40
codegen_flags: <defaults>
</compile_context>

<pallas_src>
import jax
import jax.numpy as jnp
from jax.experimental import pallas as pl
from jax.experimental.pallas import tpu as pltpu


def _se_gate_kernel(xse_ref, w_ref, xin_ref, out_ref):
    # 1x1 conv on a 1x1 spatial input == matvec.  Bias is the last column of w
    # (x_se's last element is the constant 1.0), so no separate bias add.
    # bf16 * f32 promotes to f32, so the accumulation stays f32.
    se = jnp.sum(w_ref[...] * xse_ref[...], axis=-1, keepdims=True)   # (blk, 1) f32
    gate = jax.nn.sigmoid(se)                                         # (blk, 1)
    # Broadcast the per-channel gate across the H*W lane axis and multiply.
    out_ref[...] = (xin_ref[...] * gate).astype(out_ref.dtype)


def prepare_se_weights(weight, bias, dtype=jnp.bfloat16):
    """One-time (init) prep: fold bias into the weight and cast to bf16.

    weight: (Cout, Cin, 1, 1), bias: (Cout,)  ->  (Cout, Cin + 1) in `dtype`.
    """
    Cout, Cin = weight.shape[0], weight.shape[1]
    w = weight.reshape(Cout, Cin)                       # native orientation
    w_aug = jnp.concatenate([w, bias.reshape(Cout, 1)], axis=1)
    return w_aug.astype(dtype)


def _num_cout_blocks(cout):
    """2 blocks (one per TensorCore) on v7x-class chips, 1 otherwise."""
    nblk = 1
    try:
        kind = jax.devices()[0].device_kind.lower()
        if "v7" in kind:
            nblk = 2
    except Exception:
        pass
    while nblk > 1 and (cout % nblk or (cout // nblk) % 8):
        nblk -= 1
    return nblk


def se_gate(x_se_nchw, x_in_nchw, w_aug):
    """x_se_nchw: (1, Cin, 1, 1); x_in_nchw: (1, Cout, H, W);
    w_aug: (Cout, Cin+1) bias-folded weight  -> returns (1, Cout, H, W)."""
    N, Cin, _, _ = x_se_nchw.shape
    _, Cout, H, W = x_in_nchw.shape
    assert N == 1
    Ck = w_aug.shape[1]
    assert Ck == Cin + 1
    HW = H * W

    # Free views (N == 1 NCHW) + a tiny (1,) constant append for the bias term.
    x_se = jnp.concatenate(
        [x_se_nchw.reshape(1, Cin), jnp.ones((1, 1), x_se_nchw.dtype)], axis=1)
    x_in = x_in_nchw.reshape(Cout, HW)

    nblk = _num_cout_blocks(Cout)
    blk = Cout // nblk

    bytes_accessed = (x_se.size * x_se.dtype.itemsize
                      + w_aug.size * w_aug.dtype.itemsize
                      + 2 * x_in.size * x_in.dtype.itemsize)
    cost = pl.CostEstimate(
        flops=2 * Cout * Ck + Cout * HW,
        transcendentals=Cout,
        bytes_accessed=bytes_accessed,
    )

    out = pl.pallas_call(
        _se_gate_kernel,
        out_shape=jax.ShapeDtypeStruct((Cout, HW), x_in.dtype),
        grid=(nblk,),
        in_specs=[
            pl.BlockSpec((1, Ck), lambda i: (0, 0)),      # broadcast SE vector
            pl.BlockSpec((blk, Ck), lambda i: (i, 0)),    # bias-folded weight
            pl.BlockSpec((blk, HW), lambda i: (i, 0)),    # feature map
        ],
        out_specs=pl.BlockSpec((blk, HW), lambda i: (i, 0)),
        compiler_params=pltpu.CompilerParams(
            dimension_semantics=("parallel",)),
        cost_estimate=cost,
    )(x_se, w_aug, x_in)

    return out.reshape(1, Cout, H, W)                     # free view back to NCHW


if __name__ == "__main__":
    key = jax.random.PRNGKey(0)
    k1, k2, k3, k4 = jax.random.split(key, 4)

    Cin, Cout, H, W = 96, 2304, 7, 7
    x664 = jax.random.normal(k1, (1, Cin, 1, 1), dtype=jnp.float32)    # SE input
    x661 = jax.random.normal(k2, (1, Cout, H, W), dtype=jnp.float32)   # feature map
    weight = jax.random.normal(k3, (Cout, Cin, 1, 1), dtype=jnp.float32) * 0.02
    bias = jax.random.normal(k4, (Cout,), dtype=jnp.float32) * 0.02

    # One-time init-path prep (outside the per-call path / jit).
    w_aug = prepare_se_weights(weight, bias, dtype=jnp.bfloat16)

    fn = jax.jit(se_gate)
    out = jax.block_until_ready(fn(x664, x661, w_aug))

    # plain-JAX f32 reference (matches the torch module's forward); the kernel
    # keeps weights in bf16 with f32 accumulation, so loosen the tolerance to
    # bf16-rounding level.
    se_ref = jnp.einsum('oc,c->o', weight.reshape(Cout, Cin), x664.reshape(Cin)) + bias
    ref = jax.nn.sigmoid(se_ref).reshape(1, Cout, 1, 1) * x661
    assert out.shape == (1, Cout, H, W)
    assert jnp.allclose(out, ref, atol=1e-2, rtol=1e-2)

    print("KERNEL_OK")
</pallas_src>

<mosaic_0001>
module attributes {stable_mosaic.version = 11 : i64} {
  func.func @_se_gate_kernel(%arg0: i32, %arg1: memref<1x97xf32, #tpu.memory_space<vmem>>, %arg2: memref<2304x97xbf16, #tpu.memory_space<vmem>>, %arg3: memref<2304x49xf32, #tpu.memory_space<vmem>>, %arg4: memref<2304x49xf32, #tpu.memory_space<vmem>>) attributes {dimension_semantics = [#tpu.dimension_semantics<parallel>], iteration_bounds = array<i64: 1>, scalar_prefetch = 0 : i64, scratch_operands = 0 : i64, tpu.core_type = #tpu.core_type<tc>, window_params = [{pipeline_mode = #tpu.pipeline_mode<synchronous>, transform_indices = @transform_0, window_bounds = array<i64: 1, 97>}, {transform_indices = @transform_1, window_bounds = array<i64: 2304, 97>}, {transform_indices = @transform_2, window_bounds = array<i64: 2304, 49>}, {transform_indices = @transform_3, window_bounds = array<i64: 2304, 49>}]} {
    %c0 = arith.constant 0 : index
    %c0_0 = arith.constant 0 : index
    %0 = vector.load %arg2[%c0, %c0_0] : memref<2304x97xbf16, #tpu.memory_space<vmem>>, vector<2304x97xbf16>
    %c0_1 = arith.constant 0 : index
    %c0_2 = arith.constant 0 : index
    %1 = vector.load %arg1[%c0_1, %c0_2] : memref<1x97xf32, #tpu.memory_space<vmem>>, vector<1x97xf32>
    %2 = arith.extf %0 : vector<2304x97xbf16> to vector<2304x97xf32>
    %3 = vector.broadcast %1 : vector<1x97xf32> to vector<2304x97xf32>
    %4 = arith.mulf %2, %3 : vector<2304x97xf32>
    %cst = arith.constant dense<0.000000e+00> : vector<2304xf32>
    %5 = vector.multi_reduction <add>, %4, %cst [1] : vector<2304x97xf32> to vector<2304xf32>
    %6 = vector.shape_cast %5 : vector<2304xf32> to vector<2304x1xf32>
    %7 = arith.negf %6 : vector<2304x1xf32>
    %8 = math.exp %7 : vector<2304x1xf32>
    %cst_3 = arith.constant 1.000000e+00 : f32
    %9 = vector.broadcast %cst_3 : f32 to vector<2304x1xf32>
    %10 = arith.addf %9, %8 : vector<2304x1xf32>
    %11 = arith.divf %9, %10 : vector<2304x1xf32>
    %c0_4 = arith.constant 0 : index
    %c0_5 = arith.constant 0 : index
    %12 = vector.load %arg3[%c0_4, %c0_5] : memref<2304x49xf32, #tpu.memory_space<vmem>>, vector<2304x49xf32>
    %13 = vector.broadcast %11 : vector<2304x1xf32> to vector<2304x49xf32>
    %14 = arith.mulf %12, %13 : vector<2304x49xf32>
    %c0_6 = arith.constant 0 : index
    %c0_7 = arith.constant 0 : index
    %15 = vector.load %arg4[%c0_6, %c0_7] : memref<2304x49xf32, #tpu.memory_space<vmem>>, vector<2304x49xf32>
    tpu.vector_store %arg4[%c0_6, %c0_7], %14 {strides = array<i32>} : memref<2304x49xf32, #tpu.memory_space<vmem>>, vector<2304x49xf32>,
    return
  }
  func.func @transform_0(%arg0: i32) -> (i32, i32) {
    %c0_i32 = arith.constant 0 : i32
    %c0_i32_0 = arith.constant 0 : i32
    %c0_i32_1 = arith.constant 0 : i32
    return %c0_i32, %c0_i32_0 : i32, i32
  }
  func.func @transform_1(%arg0: i32) -> (i32, i32) {
    %c0_i32 = arith.constant 0 : i32
    %c0_i32_0 = arith.constant 0 : i32
    return %arg0, %c0_i32 : i32, i32
  }
  func.func @transform_2(%arg0: i32) -> (i32, i32) {
    %c0_i32 = arith.constant 0 : i32
    %c0_i32_0 = arith.constant 0 : i32
    return %arg0, %c0_i32 : i32, i32
  }
  func.func @transform_3(%arg0: i32) -> (i32, i32) {
    %c0_i32 = arith.constant 0 : i32
    %c0_i32_0 = arith.constant 0 : i32
    return %arg0, %c0_i32 : i32, i32
  }
}

</mosaic_0001>

<llo_original>
// kernel: se_gate.1
$region0: #{se_gate.1}
  #allocation0 [shape = 'u32[]', space=smem, size = 0x4, offset = 0x4, fixed_abs, tag = 'smem constant byte address 0x4 - core index']
  #allocation1 [shape = 'u32[144,128]{1,0:T(1,128)}', space=vmem, size = 0x12000, scoped, tag = 'internal scratch']
  %s0 = inlined_call_operand.vmem [shape: f32[1,97], index: 0, kind: input, shape index: {}]
  %s1 = inlined_call_operand.vmem [shape: bf16[2304,97], index: 1, kind: input, shape index: {}]
  %s2 = inlined_call_operand.vmem [shape: f32[2304,49], index: 2, kind: input, shape index: {}]
  %s3 = inlined_call_operand.vmem [shape: f32[2304,49], index: 3, kind: output, shape index: {}]
  %s4 = sld [smem:[#allocation0]]
  $region22: #{se_gate.1} parent=0
    _
  %s6 = ssub.s32 1, %s4
  %s7 = scalar_select 0, %s6, %s4
  // Predicated region
  $region2: #{se_gate.1} parent=0 // pred_check
    _
  $region3: #{se_gate.1} parent=0 // pred_check_branch
    %9 = sbr.rel (0) target = $region5
  $region4: #{se_gate.1} parent=0 // pred_region
    _
  $region5: #{se_gate.1} parent=0 // pred_fallthru
    _
  // Predicated region
  $region6: #{se_gate.1} parent=0 // pred_check
    _
  $region7: #{se_gate.1} parent=0 // pred_check_branch
    %11 = sbr.rel (0) target = $region9
  $region8: #{se_gate.1} parent=0 // pred_region
    _
  $region9: #{se_gate.1} parent=0 // pred_fallthru
    _
  // Predicated region
  $region10: #{se_gate.1} parent=0 // pred_check
    _
  $region11: #{se_gate.1} parent=0 // pred_check_branch
    %13 = sbr.rel (0) target = $region13
  $region12: #{se_gate.1} parent=0 // pred_region
    _
  $region13: #{se_gate.1} parent=0 // pred_fallthru
    _
  %v14 = vld [vmem:[%s1] sm:$0xf]
  %v15 = vld [vmem:[%s1 + $0x4] sm:$0xf]
  %v16 = vld [vmem:[%s1 + $0x8] sm:$0xf]
  %v17 = vld [vmem:[%s1 + $0xc] sm:$0xf]
  %v18 = vld [vmem:[%s1 + $0x10] sm:$0xf]
  %v19 = vld [vmem:[%s1 + $0x14] sm:$0xf]
  %v20 = vld [vmem:[%s1 + $0x18] sm:$0xf]
  %v21 = vld [vmem:[%s1 + $0x1c] sm:$0xf]
  %v22 = vld [vmem:[%s1 + $0x20] sm:$0xf]
  %v23 = vld [vmem:[%s1 + $0x24] sm:$0xf]
  %v24 = vld [vmem:[%s1 + $0x28] sm:$0xf]
  %v25 = vld [vmem:[%s1 + $0x2c] sm:$0xf]
  %v26 = vld [vmem:[%s1 + $0x30] sm:$0xf]
  %v27 = vld [vmem:[%s1 + $0x34] sm:$0xf]
  %v28 = vld [vmem:[%s1 + $0x38] sm:$0xf]
  %v29 = vld [vmem:[%s1 + $0x3c] sm:$0xf]
  %v30 = vld [vmem:[%s1 + $0x40] sm:$0xf]
  %v31 = vld [vmem:[%s1 + $0x44] sm:$0xf]
  %v32 = vld [vmem:[%s1 + $0x48] sm:$0xf]
  %v33 = vld [vmem:[%s1 + $0x4c] sm:$0xf]
  %v34 = vld [vmem:[%s1 + $0x50] sm:$0xf]
  %v35 = vld [vmem:[%s1 + $0x54] sm:$0xf]
  %v36 = vld [vmem:[%s1 + $0x58] sm:$0xf]
  %v37 = vld [vmem:[%s1 + $0x5c] sm:$0xf]
  %v38 = vld [vmem:[%s1 + $0x60] sm:$0xf]
  %v39 = vld [vmem:[%s1 + $0x64] sm:$0xf]
  %v40 = vld [vmem:[%s1 + $0x68] sm:$0xf]
  %v41 = vld [vmem:[%s1 + $0x6c] sm:$0xf]
  %v42 = vld [vmem:[%s1 + $0x70] sm:$0xf]
  %v43 = vld [vmem:[%s1 + $0x74] sm:$0xf]
  %v44 = vld [vmem:[%s1 + $0x78] sm:$0xf]
  %v45 = vld [vmem:[%s1 + $0x7c] sm:$0xf]
  %v46 = vld [vmem:[%s1 + $0x80] sm:$0xf]
  %v47 = vld [vmem:[%s1 + $0x84] sm:$0xf]
  %v48 = vld [vmem:[%s1 + $0x88] sm:$0xf]
  %v49 = vld [vmem:[%s1 + $0x8c] sm:$0xf]
  %v50 = vld [vmem:[%s1 + $0x90] sm:$0xf]
  %v51 = vld [vmem:[%s1 + $0x94] sm:$0xf]
  %v52 = vld [vmem:[%s1 + $0x98] sm:$0xf]
  %v53 = vld [vmem:[%s1 + $0x9c] sm:$0xf]
  %v54 = vld [vmem:[%s1 + $0xa0] sm:$0xf]
  %v55 = vld [vmem:[%s1 + $0xa4] sm:$0xf]
  %v56 = vld [vmem:[%s1 + $0xa8] sm:$0xf]
  %v57 = vld [vmem:[%s1 + $0xac] sm:$0xf]
  %v58 = vld [vmem:[%s1 + $0xb0] sm:$0xf]
  %v59 = vld [vmem:[%s1 + $0xb4] sm:$0xf]
  %v60 = vld [vmem:[%s1 + $0xb8] sm:$0xf]
  %v61 = vld [vmem:[%s1 + $0xbc] sm:$0xf]
  %v62 = vld [vmem:[%s1 + $0xc0] sm:$0xf]
  %v63 = vld [vmem:[%s1 + $0xc4] sm:$0xf]
  %v64 = vld [vmem:[%s1 + $0xc8] sm:$0xf]
  %v65 = vld [vmem:[%s1 + $0xcc] sm:$0xf]
  %v66 = vld [vmem:[%s1 + $0xd0] sm:$0xf]
  %v67 = vld [vmem:[%s1 + $0xd4] sm:$0xf]
  %v68 = vld [vmem:[%s1 + $0xd8] sm:$0xf]
  %v69 = vld [vmem:[%s1 + $0xdc] sm:$0xf]
  %v70 = vld [vmem:[%s1 + $0xe0] sm:$0xf]
  %v71 = vld [vmem:[%s1 + $0xe4] sm:$0xf]
  %v72 = vld [vmem:[%s1 + $0xe8] sm:$0xf]
  %v73 = vld [vmem:[%s1 + $0xec] sm:$0xf]
  %v74 = vld [vmem:[%s1 + $0xf0] sm:$0xf]
  %v75 = vld [vmem:[%s1 + $0xf4] sm:$0xf]
  %v76 = vld [vmem:[%s1 + $0xf8] sm:$0xf]
  %v77 = vld [vmem:[%s1 + $0xfc] sm:$0xf]
  %v78 = vld [vmem:[%s1 + $0x100] sm:$0xf]
  %v79 = vld [vmem:[%s1 + $0x104] sm:$0xf]
  %v80 = vld [vmem:[%s1 + $0x108] sm:$0xf]
  %v81 = vld [vmem:[%s1 + $0x10c] sm:$0xf]
  %v82 = vld [vmem:[%s1 + $0x110] sm:$0xf]
  %v83 = vld [vmem:[%s1 + $0x114] sm:$0xf]
  %v84 = vld [vmem:[%s1 + $0x118] sm:$0xf]
  %v85 = vld [vmem:[%s1 + $0x11c] sm:$0xf]
  %v86 = vld [vmem:[%s1 + $0x120] sm:$0xf]
  %v87 = vld [vmem:[%s1 + $0x124] sm:$0xf]
  %v88 = vld [vmem:[%s1 + $0x128] sm:$0xf]
  %v89 = vld [vmem:[%s1 + $0x12c] sm:$0xf]
  %v90 = vld [vmem:[%s1 + $0x130] sm:$0xf]
  %v91 = vld [vmem:[%s1 + $0x134] sm:$0xf]
  %v92 = vld [vmem:[%s1 + $0x138] sm:$0xf]
  %v93 = vld [vmem:[%s1 + $0x13c] sm:$0xf]
  %v94 = vld [vmem:[%s1 + $0x140] sm:$0xf]
  %v95 = vld [vmem:[%s1 + $0x144] sm:$0xf]
  %v96 = vld [vmem:[%s1 + $0x148] sm:$0xf]
  %v97 = vld [vmem:[%s1 + $0x14c] sm:$0xf]
  %v98 = vld [vmem:[%s1 + $0x150] sm:$0xf]
  %v99 = vld [vmem:[%s1 + $0x154] sm:$0xf]
  %v100 = vld [vmem:[%s1 + $0x158] sm:$0xf]
  %v101 = vld [vmem:[%s1 + $0x15c] sm:$0xf]
  %v102 = vld [vmem:[%s1 + $0x160] sm:$0xf]
  %v103 = vld [vmem:[%s1 + $0x164] sm:$0xf]
  %v104 = vld [vmem:[%s1 + $0x168] sm:$0xf]
  %v105 = vld [vmem:[%s1 + $0x16c] sm:$0xf]
  %v106 = vld [vmem:[%s1 + $0x170] sm:$0xf]
  %v107 = vld [vmem:[%s1 + $0x174] sm:$0xf]
  %v108 = vld [vmem:[%s1 + $0x178] sm:$0xf]
  %v109 = vld [vmem:[%s1 + $0x17c] sm:$0xf]
  %v110 = vld [vmem:[%s1 + $0x180] sm:$0xf]
  %v111 = vld [vmem:[%s1 + $0x184] sm:$0xf]
  %v112 = vld [vmem:[%s1 + $0x188] sm:$0xf]
  %v113 = vld [vmem:[%s1 + $0x18c] sm:$0xf]
  %v114 = vld [vmem:[%s1 + $0x190] sm:$0xf]
  %v115 = vld [vmem:[%s1 + $0x194] sm:$0xf]
  %v116 = vld [vmem:[%s1 + $0x198] sm:$0xf]
  %v117 = vld [vmem:[%s1 + $0x19c] sm:$0xf]
  %v118 = vld [vmem:[%s1 + $0x1a0] sm:$0xf]
  %v119 = vld [vmem:[%s1 + $0x1a4] sm:$0xf]
  %v120 = vld [vmem:[%s1 + $0x1a8] sm:$0xf]
  %v121 = vld [vmem:[%s1 + $0x1ac] sm:$0xf]
  %v122 = vld [vmem:[%s1 + $0x1b0] sm:$0xf]
  %v123 = vld [vmem:[%s1 + $0x1b4] sm:$0xf]
  %v124 = vld [vmem:[%s1 + $0x1b8] sm:$0xf]
  %v125 = vld [vmem:[%s1 + $0x1bc] sm:$0xf]
  %v126 = vld [vmem:[%s1 + $0x1c0] sm:$0xf]
  %v127 = vld [vmem:[%s1 + $0x1c4] sm:$0xf]
  %v128 = vld [vmem:[%s1 + $0x1c8] sm:$0xf]
  %v129 = vld [vmem:[%s1 + $0x1cc] sm:$0xf]
  %v130 = vld [vmem:[%s1 + $0x1d0] sm:$0xf]
  %v131 = vld [vmem:[%s1 + $0x1d4] sm:$0xf]
  %v132 = vld [vmem:[%s1 + $0x1d8] sm:$0xf]
  %v133 = vld [vmem:[%s1 + $0x1dc] sm:$0xf]
  %v134 = vld [vmem:[%s1 + $0x1e0] sm:$0xf]
  %v135 = vld [vmem:[%s1 + $0x1e4] sm:$0xf]
  %v136 = vld [vmem:[%s1 + $0x1e8] sm:$0xf]
  %v137 = vld [vmem:[%s1 + $0x1ec] sm:$0xf]
  %v138 = vld [vmem:[%s1 + $0x1f0] sm:$0xf]
  %v139 = vld [vmem:[%s1 + $0x1f4] sm:$0xf]
  %v140 = vld [vmem:[%s1 + $0x1f8] sm:$0xf]
  %v141 = vld [vmem:[%s1 + $0x1fc] sm:$0xf]
  %v142 = vld [vmem:[%s1 + $0x200] sm:$0xf]
  %v143 = vld [vmem:[%s1 + $0x204] sm:$0xf]
  %v144 = vld [vmem:[%s1 + $0x208] sm:$0xf]
  %v145 = vld [vmem:[%s1 + $0x20c] sm:$0xf]
  %v146 = vld [vmem:[%s1 + $0x210] sm:$0xf]
  %v147 = vld [vmem:[%s1 + $0x214] sm:$0xf]
  %v148 = vld [vmem:[%s1 + $0x218] sm:$0xf]
  %v149 = vld [vmem:[%s1 + $0x21c] sm:$0xf]
  %v150 = vld [vmem:[%s1 + $0x220] sm:$0xf]
  %v151 = vld [vmem:[%s1 + $0x224] sm:$0xf]
  %v152 = vld [vmem:[%s1 + $0x228] sm:$0xf]
  %v153 = vld [vmem:[%s1 + $0x22c] sm:$0xf]
  %v154 = vld [vmem:[%s1 + $0x230] sm:$0xf]
  %v155 = vld [vmem:[%s1 + $0x234] sm:$0xf]
  %v156 = vld [vmem:[%s1 + $0x238] sm:$0xf]
  %v157 = vld [vmem:[%s1 + $0x23c] sm:$0xf]
  %v158 = vld [vmem:[%s1 + $0x240] sm:$0xf]
  %v159 = vld [vmem:[%s1 + $0x244] sm:$0xf]
  %v160 = vld [vmem:[%s1 + $0x248] sm:$0xf]
  %v161 = vld [vmem:[%s1 + $0x24c] sm:$0xf]
  %v162 = vld [vmem:[%s1 + $0x250] sm:$0xf]
  %v163 = vld [vmem:[%s1 + $0x254] sm:$0xf]
  %v164 = vld [vmem:[%s1 + $0x258] sm:$0xf]
  %v165 = vld [vmem:[%s1 + $0x25c] sm:$0xf]
  %v166 = vld [vmem:[%s1 + $0x260] sm:$0xf]
  %v167 = vld [vmem:[%s1 + $0x264] sm:$0xf]
  %v168 = vld [vmem:[%s1 + $0x268] sm:$0xf]
  %v169 = vld [vmem:[%s1 + $0x26c] sm:$0xf]
  %v170 = vld [vmem:[%s1 + $0x270] sm:$0xf]
  %v171 = vld [vmem:[%s1 + $0x274] sm:$0xf]
  %v172 = vld [vmem:[%s1 + $0x278] sm:$0xf]
  %v173 = vld [vmem:[%s1 + $0x27c] sm:$0xf]
  %v174 = vld [vmem:[%s1 + $0x280] sm:$0xf]
  %v175 = vld [vmem:[%s1 + $0x284] sm:$0xf]
  %v176 = vld [vmem:[%s1 + $0x288] sm:$0xf]
  %v177 = vld [vmem:[%s1 + $0x28c] sm:$0xf]
  %v178 = vld [vmem:[%s1 + $0x290] sm:$0xf]
  %v179 = vld [vmem:[%s1 + $0x294] sm:$0xf]
  %v180 = vld [vmem:[%s1 + $0x298] sm:$0xf]
  %v181 = vld [vmem:[%s1 + $0x29c] sm:$0xf]
  %v182 = vld [vmem:[%s1 + $0x2a0] sm:$0xf]
  %v183 = vld [vmem:[%s1 + $0x2a4] sm:$0xf]
  %v184 = vld [vmem:[%s1 + $0x2a8] sm:$0xf]
  %v185 = vld [vmem:[%s1 + $0x2ac] sm:$0xf]
  %v186 = vld [vmem:[%s1 + $0x2b0] sm:$0xf]
  %v187 = vld [vmem:[%s1 + $0x2b4] sm:$0xf]
  %v188 = vld [vmem:[%s1 + $0x2b8] sm:$0xf]
  %v189 = vld [vmem:[%s1 + $0x2bc] sm:$0xf]
  %v190 = vld [vmem:[%s1 + $0x2c0] sm:$0xf]
  %v191 = vld [vmem:[%s1 + $0x2c4] sm:$0xf]
  %v192 = vld [vmem:[%s1 + $0x2c8] sm:$0xf]
  %v193 = vld [vmem:[%s1 + $0x2cc] sm:$0xf]
  %v194 = vld [vmem:[%s1 + $0x2d0] sm:$0xf]
  %v195 = vld [vmem:[%s1 + $0x2d4] sm:$0xf]
  %v196 = vld [vmem:[%s1 + $0x2d8] sm:$0xf]
  %v197 = vld [vmem:[%s1 + $0x2dc] sm:$0xf]
  %v198 = vld [vmem:[%s1 + $0x2e0] sm:$0xf]
  %v199 = vld [vmem:[%s1 + $0x2e4] sm:$0xf]
  %v200 = vld [vmem:[%s1 + $0x2e8] sm:$0xf]
  %v201 = vld [vmem:[%s1 + $0x2ec] sm:$0xf]
  %v202 = vld [vmem:[%s1 + $0x2f0] sm:$0xf]
  %v203 = vld [vmem:[%s1 + $0x2f4] sm:$0xf]
  %v204 = vld [vmem:[%s1 + $0x2f8] sm:$0xf]
  %v205 = vld [vmem:[%s1 + $0x2fc] sm:$0xf]
  %v206 = vld [vmem:[%s1 + $0x300] sm:$0xf]
  %v207 = vld [vmem:[%s1 + $0x304] sm:$0xf]
  %v208 = vld [vmem:[%s1 + $0x308] sm:$0xf]
  %v209 = vld [vmem:[%s1 + $0x30c] sm:$0xf]
  %v210 = vld [vmem:[%s1 + $0x310] sm:$0xf]
  %v211 = vld [vmem:[%s1 + $0x314] sm:$0xf]
  %v212 = vld [vmem:[%s1 + $0x318] sm:$0xf]
  %v213 = vld [vmem:[%s1 + $0x31c] sm:$0xf]
  %v214 = vld [vmem:[%s1 + $0x320] sm:$0xf]
  %v215 = vld [vmem:[%s1 + $0x324] sm:$0xf]
  %v216 = vld [vmem:[%s1 + $0x328] sm:$0xf]
  %v217 = vld [vmem:[%s1 + $0x32c] sm:$0xf]
  %v218 = vld [vmem:[%s1 + $0x330] sm:$0xf]
  %v219 = vld [vmem:[%s1 + $0x334] sm:$0xf]
  %v220 = vld [vmem:[%s1 + $0x338] sm:$0xf]
  %v221 = vld [vmem:[%s1 + $0x33c] sm:$0xf]
  %v222 = vld [vmem:[%s1 + $0x340] sm:$0xf]
  %v223 = vld [vmem:[%s1 + $0x344] sm:$0xf]
  %v224 = vld [vmem:[%s1 + $0x348] sm:$0xf]
  %v225 = vld [vmem:[%s1 + $0x34c] sm:$0xf]
  %v226 = vld [vmem:[%s1 + $0x350] sm:$0xf]
  %v227 = vld [vmem:[%s1 + $0x354] sm:$0xf]
  %v228 = vld [vmem:[%s1 + $0x358] sm:$0xf]
  %v229 = vld [vmem:[%s1 + $0x35c] sm:$0xf]
  %v230 = vld [vmem:[%s1 + $0x360] sm:$0xf]
  %v231 = vld [vmem:[%s1 + $0x364] sm:$0xf]
  %v232 = vld [vmem:[%s1 + $0x368] sm:$0xf]
  %v233 = vld [vmem:[%s1 + $0x36c] sm:$0xf]
  %v234 = vld [vmem:[%s1 + $0x370] sm:$0xf]
  %v235 = vld [vmem:[%s1 + $0x374] sm:$0xf]
  %v236 = vld [vmem:[%s1 + $0x378] sm:$0xf]
  %v237 = vld [vmem:[%s1 + $0x37c] sm:$0xf]
  %v238 = vld [vmem:[%s1 + $0x380] sm:$0xf]
  %v239 = vld [vmem:[%s1 + $0x384] sm:$0xf]
  %v240 = vld [vmem:[%s1 + $0x388] sm:$0xf]
  %v241 = vld [vmem:[%s1 + $0x38c] sm:$0xf]
  %v242 = vld [vmem:[%s1 + $0x390] sm:$0xf]
  %v243 = vld [vmem:[%s1 + $0x394] sm:$0xf]
  %v244 = vld [vmem:[%s1 + $0x398] sm:$0xf]
  %v245 = vld [vmem:[%s1 + $0x39c] sm:$0xf]
  %v246 = vld [vmem:[%s1 + $0x3a0] sm:$0xf]
  %v247 = vld [vmem:[%s1 + $0x3a4] sm:$0xf]
  %v248 = vld [vmem:[%s1 + $0x3a8] sm:$0xf]
  %v249 = vld [vmem:[%s1 + $0x3ac] sm:$0xf]
  %v250 = vld [vmem:[%s1 + $0x3b0] sm:$0xf]
  %v251 = vld [vmem:[%s1 + $0x3b4] sm:$0xf]
  %v252 = vld [vmem:[%s1 + $0x3b8] sm:$0xf]
  %v253 = vld [vmem:[%s1 + $0x3bc] sm:$0xf]
  %v254 = vld [vmem:[%s1 + $0x3c0] sm:$0xf]
  %v255 = vld [vmem:[%s1 + $0x3c4] sm:$0xf]
  %v256 = vld [vmem:[%s1 + $0x3c8] sm:$0xf]
  %v257 = vld [vmem:[%s1 + $0x3cc] sm:$0xf]
  %v258 = vld [vmem:[%s1 + $0x3d0] sm:$0xf]
  %v259 = vld [vmem:[%s1 + $0x3d4] sm:$0xf]
  %v260 = vld [vmem:[%s1 + $0x3d8] sm:$0xf]
  %v261 = vld [vmem:[%s1 + $0x3dc] sm:$0xf]
  %v262 = vld [vmem:[%s1 + $0x3e0] sm:$0xf]
  %v263 = vld [vmem:[%s1 + $0x3e4] sm:$0xf]
  %v264 = vld [vmem:[%s1 + $0x3e8] sm:$0xf]
  %v265 = vld [vmem:[%s1 + $0x3ec] sm:$0xf]
  %v266 = vld [vmem:[%s1 + $0x3f0] sm:$0xf]
  %v267 = vld [vmem:[%s1 + $0x3f4] sm:$0xf]
  %v268 = vld [vmem:[%s1 + $0x3f8] sm:$0xf]
  %v269 = vld [vmem:[%s1 + $0x3fc] sm:$0xf]
  %v270 = vld [vmem:[%s1 + $0x400] sm:$0xf]
  %v271 = vld [vmem:[%s1 + $0x404] sm:$0xf]
  %v272 = vld [vmem:[%s1 + $0x408] sm:$0xf]
  %v273 = vld [vmem:[%s1 + $0x40c] sm:$0xf]
  %v274 = vld [vmem:[%s1 + $0x410] sm:$0xf]
  %v275 = vld [vmem:[%s1 + $0x414] sm:$0xf]
  %v276 = vld [vmem:[%s1 + $0x418] sm:$0xf]
  %v277 = vld [vmem:[%s1 + $0x41c] sm:$0xf]
  %v278 = vld [vmem:[%s1 + $0x420] sm:$0xf]
  %v279 = vld [vmem:[%s1 + $0x424] sm:$0xf]
  %v280 = vld [vmem:[%s1 + $0x428] sm:$0xf]
  %v281 = vld [vmem:[%s1 + $0x42c] sm:$0xf]
  %v282 = vld [vmem:[%s1 + $0x430] sm:$0xf]
  %v283 = vld [vmem:[%s1 + $0x434] sm:$0xf]
  %v284 = vld [vmem:[%s1 + $0x438] sm:$0xf]
  %v285 = vld [vmem:[%s1 + $0x43c] sm:$0xf]
  %v286 = vld [vmem:[%s1 + $0x440] sm:$0xf]
  %v287 = vld [vmem:[%s1 + $0x444] sm:$0xf]
  %v288 = vld [vmem:[%s1 + $0x448] sm:$0xf]
  %v289 = vld [vmem:[%s1 + $0x44c] sm:$0xf]
  %v290 = vld [vmem:[%s1 + $0x450] sm:$0xf]
  %v291 = vld [vmem:[%s1 + $0x454] sm:$0xf]
  %v292 = vld [vmem:[%s1 + $0x458] sm:$0xf]
  %v293 = vld [vmem:[%s1 + $0x45c] sm:$0xf]
  %v294 = vld [vmem:[%s1 + $0x460] sm:$0xf]
  %v295 = vld [vmem:[%s1 + $0x464] sm:$0xf]
  %v296 = vld [vmem:[%s1 + $0x468] sm:$0xf]
  %v297 = vld [vmem:[%s1 + $0x46c] sm:$0xf]
  %v298 = vld [vmem:[%s1 + $0x470] sm:$0xf]
  %v299 = vld [vmem:[%s1 + $0x474] sm:$0xf]
  %v300 = vld [vmem:[%s1 + $0x478] sm:$0xf]
  %v301 = vld [vmem:[%s1 + $0x47c] sm:$0xf]
  %v302 = vld [vmem:[%s0] sm:$0x1]
  %v303 = vunpack.c.l.bf16 %v14
  %v304 = vunpack.c.l.bf16 %v15
  %v305 = vunpack.c.l.bf16 %v16
  %v306 = vunpack.c.l.bf16 %v17
  %v307 = vunpack.c.l.bf16 %v18
  %v308 = vunpack.c.l.bf16 %v19
  %v309 = vunpack.c.l.bf16 %v20
  %v310 = vunpack.c.l.bf16 %v21
  %v311 = vunpack.c.l.bf16 %v22
  %v312 = vunpack.c.l.bf16 %v23
  %v313 = vunpack.c.l.bf16 %v24
  %v314 = vunpack.c.l.bf16 %v25
  %v315 = vunpack.c.l.bf16 %v26
  %v316 = vunpack.c.l.bf16 %v27
  %v317 = vunpack.c.l.bf16 %v28
  %v318 = vunpack.c.l.bf16 %v29
  %v319 = vunpack.c.l.bf16 %v30
  %v320 = vunpack.c.l.bf16 %v31
  %v321 = vunpack.c.l.bf16 %v32
  %v322 = vunpack.c.l.bf16 %v33
  %v323 = vunpack.c.l.bf16 %v34
  %v324 = vunpack.c.l.bf16 %v35
  %v325 = vunpack.c.l.bf16 %v36
  %v326 = vunpack.c.l.bf16 %v37
  %v327 = vunpack.c.l.bf16 %v38
  %v328 = vunpack.c.l.bf16 %v39
  %v329 = vunpack.c.l.bf16 %v40
  %v330 = vunpack.c.l.bf16 %v41
  %v331 = vunpack.c.l.bf16 %v42
  %v332 = vunpack.c.l.bf16 %v43
  %v333 = vunpack.c.l.bf16 %v44
  %v334 = vunpack.c.l.bf16 %v45
  %v335 = vunpack.c.l.bf16 %v46
  %v336 = vunpack.c.l.bf16 %v47
  %v337 = vunpack.c.l.bf16 %v48
  %v338 = vunpack.c.l.bf16 %v49
  %v339 = vunpack.c.l.bf16 %v50
  %v340 = vunpack.c.l.bf16 %v51
  %v341 = vunpack.c.l.bf16 %v52
  %v342 = vunpack.c.l.bf16 %v53
  %v343 = vunpack.c.l.bf16 %v54
  %v344 = vunpack.c.l.bf16 %v55
  %v345 = vunpack.c.l.bf16 %v56
  %v346 = vunpack.c.l.bf16 %v57
  %v347 = vunpack.c.l.bf16 %v58
  %v348 = vunpack.c.l.bf16 %v59
  %v349 = vunpack.c.l.bf16 %v60
  %v350 = vunpack.c.l.bf16 %v61
  %v351 = vunpack.c.l.bf16 %v62
  %v352 = vunpack.c.l.bf16 %v63
  %v353 = vunpack.c.l.bf16 %v64
  %v354 = vunpack.c.l.bf16 %v65
  %v355 = vunpack.c.l.bf16 %v66
  %v356 = vunpack.c.l.bf16 %v67
  %v357 = vunpack.c.l.bf16 %v68
  %v358 = vunpack.c.l.bf16 %v69
  %v359 = vunpack.c.l.bf16 %v70
  %v360 = vunpack.c.l.bf16 %v71
  %v361 = vunpack.c.l.bf16 %v72
  %v362 = vunpack.c.l.bf16 %v73
  %v363 = vunpack.c.l.bf16 %v74
  %v364 = vunpack.c.l.bf16 %v75
  %v365 = vunpack.c.l.bf16 %v76
  %v366 = vunpack.c.l.bf16 %v77
  %v367 = vunpack.c.l.bf16 %v78
  %v368 = vunpack.c.l.bf16 %v79
  %v369 = vunpack.c.l.bf16 %v80
  %v370 = vunpack.c.l.bf16 %v81
  %v371 = vunpack.c.l.bf16 %v82
  %v372 = vunpack.c.l.bf16 %v83
  %v373 = vunpack.c.l.bf16 %v84
  %v374 = vunpack.c.l.bf16 %v85
  %v375 = vunpack.c.l.bf16 %v86
  %v376 = vunpack.c.l.bf16 %v87
  %v377 = vunpack.c.l.bf16 %v88
  %v378 = vunpack.c.l.bf16 %v89
  %v379 = vunpack.c.l.bf16 %v90
  %v380 = vunpack.c.l.bf16 %v91
  %v381 = vunpack.c.l.bf16 %v92
  %v382 = vunpack.c.l.bf16 %v93
  %v383 = vunpack.c.l.bf16 %v94
  %v384 = vunpack.c.l.bf16 %v95
  %v385 = vunpack.c.l.bf16 %v96
  %v386 = vunpack.c.l.bf16 %v97
  %v387 = vunpack.c.l.bf16 %v98
  %v388 = vunpack.c.l.bf16 %v99
  %v389 = vunpack.c.l.bf16 %v100
  %v390 = vunpack.c.l.bf16 %v101
  %v391 = vunpack.c.l.bf16 %v102
  %v392 = vunpack.c.l.bf16 %v103
  %v393 = vunpack.c.l.bf16 %v104
  %v394 = vunpack.c.l.bf16 %v105
  %v395 = vunpack.c.l.bf16 %v106
  %v396 = vunpack.c.l.bf16 %v107
  %v397 = vunpack.c.l.bf16 %v108
  %v398 = vunpack.c.l.bf16 %v109
  %v399 = vunpack.c.l.bf16 %v110
  %v400 = vunpack.c.l.bf16 %v111
  %v401 = vunpack.c.l.bf16 %v112
  %v402 = vunpack.c.l.bf16 %v113
  %v403 = vunpack.c.l.bf16 %v114
  %v404 = vunpack.c.l.bf16 %v115
  %v405 = vunpack.c.l.bf16 %v116
  %v406 = vunpack.c.l.bf16 %v117
  %v407 = vunpack.c.l.bf16 %v118
  %v408 = vunpack.c.l.bf16 %v119
  %v409 = vunpack.c.l.bf16 %v120
  %v410 = vunpack.c.l.bf16 %v121
  %v411 = vunpack.c.l.bf16 %v122
  %v412 = vunpack.c.l.bf16 %v123
  %v413 = vunpack.c.l.bf16 %v124
  %v414 = vunpack.c.l.bf16 %v125
  %v415 = vunpack.c.l.bf16 %v126
  %v416 = vunpack.c.l.bf16 %v127
  %v417 = vunpack.c.l.bf16 %v128
  %v418 = vunpack.c.l.bf16 %v129
  %v419 = vunpack.c.l.bf16 %v130
  %v420 = vunpack.c.l.bf16 %v131
  %v421 = vunpack.c.l.bf16 %v132
  %v422 = vunpack.c.l.bf16 %v133
  %v423 = vunpack.c.l.bf16 %v134
  %v424 = vunpack.c.l.bf16 %v135
  %v425 = vunpack.c.l.bf16 %v136
  %v426 = vunpack.c.l.bf16 %v137
  %v427 = vunpack.c.l.bf16 %v138
  %v428 = vunpack.c.l.bf16 %v139
  %v429 = vunpack.c.l.bf16 %v140
  %v430 = vunpack.c.l.bf16 %v141
  %v431 = vunpack.c.l.bf16 %v142
  %v432 = vunpack.c.l.bf16 %v143
  %v433 = vunpack.c.l.bf16 %v144
  %v434 = vunpack.c.l.bf16 %v145
  %v435 = vunpack.c.l.bf16 %v146
  %v436 = vunpack.c.l.bf16 %v147
  %v437 = vunpack.c.l.bf16 %v148
  %v438 = vunpack.c.l.bf16 %v149
  %v439 = vunpack.c.l.bf16 %v150
  %v440 = vunpack.c.l.bf16 %v151
  %v441 = vunpack.c.l.bf16 %v152
  %v442 = vunpack.c.l.bf16 %v153
  %v443 = vunpack.c.l.bf16 %v154
  %v444 = vunpack.c.l.bf16 %v155
  %v445 = vunpack.c.l.bf16 %v156
  %v446 = vunpack.c.l.bf16 %v157
  %v447 = vunpack.c.l.bf16 %v158
  %v448 = vunpack.c.l.bf16 %v159
  %v449 = vunpack.c.l.bf16 %v160
  %v450 = vunpack.c.l.bf16 %v161
  %v451 = vunpack.c.l.bf16 %v162
  %v452 = vunpack.c.l.bf16 %v163
  %v453 = vunpack.c.l.bf16 %v164
  %v454 = vunpack.c.l.bf16 %v165
  %v455 = vunpack.c.l.bf16 %v166
  %v456 = vunpack.c.l.bf16 %v167
  %v457 = vunpack.c.l.bf16 %v168
  %v458 = vunpack.c.l.bf16 %v169
  %v459 = vunpack.c.l.bf16 %v170
  %v460 = vunpack.c.l.bf16 %v171
  %v461 = vunpack.c.l.bf16 %v172
  %v462 = vunpack.c.l.bf16 %v173
  %v463 = vunpack.c.l.bf16 %v174
  %v464 = vunpack.c.l.bf16 %v175
  %v465 = vunpack.c.l.bf16 %v176
  %v466 = vunpack.c.l.bf16 %v177
  %v467 = vunpack.c.l.bf16 %v178
  %v468 = vunpack.c.l.bf16 %v179
  %v469 = vunpack.c.l.bf16 %v180
  %v470 = vunpack.c.l.bf16 %v181
  %v471 = vunpack.c.l.bf16 %v182
  %v472 = vunpack.c.l.bf16 %v183
  %v473 = vunpack.c.l.bf16 %v184
  %v474 = vunpack.c.l.bf16 %v185
  %v475 = vunpack.c.l.bf16 %v186
  %v476 = vunpack.c.l.bf16 %v187
  %v477 = vunpack.c.l.bf16 %v188
  %v478 = vunpack.c.l.bf16 %v189
  %v479 = vunpack.c.l.bf16 %v190
  %v480 = vunpack.c.l.bf16 %v191
  %v481 = vunpack.c.l.bf16 %v192
  %v482 = vunpack.c.l.bf16 %v193
  %v483 = vunpack.c.l.bf16 %v194
  %v484 = vunpack.c.l.bf16 %v195
  %v485 = vunpack.c.l.bf16 %v196
  %v486 = vunpack.c.l.bf16 %v197
  %v487 = vunpack.c.l.bf16 %v198
  %v488 = vunpack.c.l.bf16 %v199
  %v489 = vunpack.c.l.bf16 %v200
  %v490 = vunpack.c.l.bf16 %v201
  %v491 = vunpack.c.l.bf16 %v202
  %v492 = vunpack.c.l.bf16 %v203
  %v493 = vunpack.c.l.bf16 %v204
  %v494 = vunpack.c.l.bf16 %v205
  %v495 = vunpack.c.l.bf16 %v206
  %v496 = vunpack.c.l.bf16 %v207
  %v497 = vunpack.c.l.bf16 %v208
  %v498 = vunpack.c.l.bf16 %v209
  %v499 = vunpack.c.l.bf16 %v210
  %v500 = vunpack.c.l.bf16 %v211
  %v501 = vunpack.c.l.bf16 %v212
  %v502 = vunpack.c.l.bf16 %v213
  %v503 = vunpack.c.l.bf16 %v214
  %v504 = vunpack.c.l.bf16 %v215
  %v505 = vunpack.c.l.bf16 %v216
  %v506 = vunpack.c.l.bf16 %v217
  %v507 = vunpack.c.l.bf16 %v218
  %v508 = vunpack.c.l.bf16 %v219
  %v509 = vunpack.c.l.bf16 %v220
  %v510 = vunpack.c.l.bf16 %v221
  %v511 = vunpack.c.l.bf16 %v222
  %v512 = vunpack.c.l.bf16 %v223
  %v513 = vunpack.c.l.bf16 %v224
  %v514 = vunpack.c.l.bf16 %v225
  %v515 = vunpack.c.l.bf16 %v226
  %v516 = vunpack.c.l.bf16 %v227
  %v517 = vunpack.c.l.bf16 %v228
  %v518 = vunpack.c.l.bf16 %v229
  %v519 = vunpack.c.l.bf16 %v230
  %v520 = vunpack.c.l.bf16 %v231
  %v521 = vunpack.c.l.bf16 %v232
  %v522 = vunpack.c.l.bf16 %v233
  %v523 = vunpack.c.l.bf16 %v234
  %v524 = vunpack.c.l.bf16 %v235
  %v525 = vunpack.c.l.bf16 %v236
  %v526 = vunpack.c.l.bf16 %v237
  %v527 = vunpack.c.l.bf16 %v238
  %v528 = vunpack.c.l.bf16 %v239
  %v529 = vunpack.c.l.bf16 %v240
  %v530 = vunpack.c.l.bf16 %v241
  %v531 = vunpack.c.l.bf16 %v242
  %v532 = vunpack.c.l.bf16 %v243
  %v533 = vunpack.c.l.bf16 %v244
  %v534 = vunpack.c.l.bf16 %v245
  %v535 = vunpack.c.l.bf16 %v246
  %v536 = vunpack.c.l.bf16 %v247
  %v537 = vunpack.c.l.bf16 %v248
  %v538 = vunpack.c.l.bf16 %v249
  %v539 = vunpack.c.l.bf16 %v250
  %v540 = vunpack.c.l.bf16 %v251
  %v541 = vunpack.c.l.bf16 %v252
  %v542 = vunpack.c.l.bf16 %v253
  %v543 = vunpack.c.l.bf16 %v254
  %v544 = vunpack.c.l.bf16 %v255
  %v545 = vunpack.c.l.bf16 %v256
  %v546 = vunpack.c.l.bf16 %v257
  %v547 = vunpack.c.l.bf16 %v258
  %v548 = vunpack.c.l.bf16 %v259
  %v549 = vunpack.c.l.bf16 %v260
  %v550 = vunpack.c.l.bf16 %v261
  %v551 = vunpack.c.l.bf16 %v262
  %v552 = vunpack.c.l.bf16 %v263
  %v553 = vunpack.c.l.bf16 %v264
  %v554 = vunpack.c.l.bf16 %v265
  %v555 = vunpack.c.l.bf16 %v266
  %v556 = vunpack.c.l.bf16 %v267
  %v557 = vunpack.c.l.bf16 %v268
  %v558 = vunpack.c.l.bf16 %v269
  %v559 = vunpack.c.l.bf16 %v270
  %v560 = vunpack.c.l.bf16 %v271
  %v561 = vunpack.c.l.bf16 %v272
  %v562 = vunpack.c.l.bf16 %v273
  %v563 = vunpack.c.l.bf16 %v274
  %v564 = vunpack.c.l.bf16 %v275
  %v565 = vunpack.c.l.bf16 %v276
  %v566 = vunpack.c.l.bf16 %v277
  %v567 = vunpack.c.l.bf16 %v278
  %v568 = vunpack.c.l.bf16 %v279
  %v569 = vunpack.c.l.bf16 %v280
  %v570 = vunpack.c.l.bf16 %v281
  %v571 = vunpack.c.l.bf16 %v282
  %v572 = vunpack.c.l.bf16 %v283
  %v573 = vunpack.c.l.bf16 %v284
  %v574 = vunpack.c.l.bf16 %v285
  %v575 = vunpack.c.l.bf16 %v286
  %v576 = vunpack.c.l.bf16 %v287
  %v577 = vunpack.c.l.bf16 %v288
  %v578 = vunpack.c.l.bf16 %v289
  %v579 = vunpack.c.l.bf16 %v290
  %v580 = vunpack.c.l.bf16 %v291
  %v581 = vunpack.c.l.bf16 %v292
  %v582 = vunpack.c.l.bf16 %v293
  %v583 = vunpack.c.l.bf16 %v294
  %v584 = vunpack.c.l.bf16 %v295
  %v585 = vunpack.c.l.bf16 %v296
  %v586 = vunpack.c.l.bf16 %v297
  %v587 = vunpack.c.l.bf16 %v298
  %v588 = vunpack.c.l.bf16 %v299
  %v589 = vunpack.c.l.bf16 %v300
  %v590 = vunpack.c.l.bf16 %v301
  %v592 = vlaneseq
  %v593 = vshrl.u32 %v592, 7
  %v594 = vsub.s32 0, %v593
  %v595 = vrot.slane %v302, %v594
  %v597 = vmul.f32 %v303, %v595
  %v598 = vmul.f32 %v304, %v595
  %v599 = vmul.f32 %v305, %v595
  %v600 = vmul.f32 %v306, %v595
  %v601 = vmul.f32 %v307, %v595
  %v602 = vmul.f32 %v308, %v595
  %v603 = vmul.f32 %v309, %v595
  %v604 = vmul.f32 %v310, %v595
  %v605 = vmul.f32 %v311, %v595
  %v606 = vmul.f32 %v312, %v595
  %v607 = vmul.f32 %v313, %v595
  %v608 = vmul.f32 %v314, %v595
  %v609 = vmul.f32 %v315, %v595
  %v610 = vmul.f32 %v316, %v595
  %v611 = vmul.f32 %v317, %v595
  %v612 = vmul.f32 %v318, %v595
  %v613 = vmul.f32 %v319, %v595
  %v614 = vmul.f32 %v320, %v595
  %v615 = vmul.f32 %v321, %v595
  %v616 = vmul.f32 %v322, %v595
  %v617 = vmul.f32 %v323, %v595
  %v618 = vmul.f32 %v324, %v595
  %v619 = vmul.f32 %v325, %v595
  %v620 = vmul.f32 %v326, %v595
  %v621 = vmul.f32 %v327, %v595
  %v622 = vmul.f32 %v328, %v595
  %v623 = vmul.f32 %v329, %v595
  %v624 = vmul.f32 %v330, %v595
  %v625 = vmul.f32 %v331, %v595
  %v626 = vmul.f32 %v332, %v595
  %v627 = vmul.f32 %v333, %v595
  %v628 = vmul.f32 %v334, %v595
  %v629 = vmul.f32 %v335, %v595
  %v630 = vmul.f32 %v336, %v595
  %v631 = vmul.f32 %v337, %v595
  %v632 = vmul.f32 %v338, %v595
  %v633 = vmul.f32 %v339, %v595
  %v634 = vmul.f32 %v340, %v595
  %v635 = vmul.f32 %v341, %v595
  %v636 = vmul.f32 %v342, %v595
  %v637 = vmul.f32 %v343, %v595
  %v638 = vmul.f32 %v344, %v595
  %v639 = vmul.f32 %v345, %v595
  %v640 = vmul.f32 %v346, %v595
  %v641 = vmul.f32 %v347, %v595
  %v642 = vmul.f32 %v348, %v595
  %v643 = vmul.f32 %v349, %v595
  %v644 = vmul.f32 %v350, %v595
  %v645 = vmul.f32 %v351, %v595
  %v646 = vmul.f32 %v352, %v595
  %v647 = vmul.f32 %v353, %v595
  %v648 = vmul.f32 %v354, %v595
  %v649 = vmul.f32 %v355, %v595
  %v650 = vmul.f32 %v356, %v595
  %v651 = vmul.f32 %v357, %v595
  %v652 = vmul.f32 %v358, %v595
  %v653 = vmul.f32 %v359, %v595
  %v654 = vmul.f32 %v360, %v595
  %v655 = vmul.f32 %v361, %v595
  %v656 = vmul.f32 %v362, %v595
  %v657 = vmul.f32 %v363, %v595
  %v658 = vmul.f32 %v364, %v595
  %v659 = vmul.f32 %v365, %v595
  %v660 = vmul.f32 %v366, %v595
  %v661 = vmul.f32 %v367, %v595
  %v662 = vmul.f32 %v368, %v595
  %v663 = vmul.f32 %v369, %v595
  %v664 = vmul.f32 %v370, %v595
  %v665 = vmul.f32 %v371, %v595
  %v666 = vmul.f32 %v372, %v595
  %v667 = vmul.f32 %v373, %v595
  %v668 = vmul.f32 %v374, %v595
  %v669 = vmul.f32 %v375, %v595
  %v670 = vmul.f32 %v376, %v595
  %v671 = vmul.f32 %v377, %v595
  %v672 = vmul.f32 %v378, %v595
  %v673 = vmul.f32 %v379, %v595
  %v674 = vmul.f32 %v380, %v595
  %v675 = vmul.f32 %v381, %v595
  %v676 = vmul.f32 %v382, %v595
  %v677 = vmul.f32 %v383, %v595
  %v678 = vmul.f32 %v384, %v595
  %v679 = vmul.f32 %v385, %v595
  %v680 = vmul.f32 %v386, %v595
  %v681 = vmul.f32 %v387, %v595
  %v682 = vmul.f32 %v388, %v595
  %v683 = vmul.f32 %v389, %v595
  %v684 = vmul.f32 %v390, %v595
  %v685 = vmul.f32 %v391, %v595
  %v686 = vmul.f32 %v392, %v595
  %v687 = vmul.f32 %v393, %v595
  %v688 = vmul.f32 %v394, %v595
  %v689 = vmul.f32 %v395, %v595
  %v690 = vmul.f32 %v396, %v595
  %v691 = vmul.f32 %v397, %v595
  %v692 = vmul.f32 %v398, %v595
  %v693 = vmul.f32 %v399, %v595
  %v694 = vmul.f32 %v400, %v595
  %v695 = vmul.f32 %v401, %v595
  %v696 = vmul.f32 %v402, %v595
  %v697 = vmul.f32 %v403, %v595
  %v698 = vmul.f32 %v404, %v595
  %v699 = vmul.f32 %v405, %v595
  %v700 = vmul.f32 %v406, %v595
  %v701 = vmul.f32 %v407, %v595
  %v702 = vmul.f32 %v408, %v595
  %v703 = vmul.f32 %v409, %v595
  %v704 = vmul.f32 %v410, %v595
  %v705 = vmul.f32 %v411, %v595
  %v706 = vmul.f32 %v412, %v595
  %v707 = vmul.f32 %v413, %v595
  %v708 = vmul.f32 %v414, %v595
  %v709 = vmul.f32 %v415, %v595
  %v710 = vmul.f32 %v416, %v595
  %v711 = vmul.f32 %v417, %v595
  %v712 = vmul.f32 %v418, %v595
  %v713 = vmul.f32 %v419, %v595
  %v714 = vmul.f32 %v420, %v595
  %v715 = vmul.f32 %v421, %v595
  %v716 = vmul.f32 %v422, %v595
  %v717 = vmul.f32 %v423, %v595
  %v718 = vmul.f32 %v424, %v595
  %v719 = vmul.f32 %v425, %v595
  %v720 = vmul.f32 %v426, %v595
  %v721 = vmul.f32 %v427, %v595
  %v722 = vmul.f32 %v428, %v595
  %v723 = vmul.f32 %v429, %v595
  %v724 = vmul.f32 %v430, %v595
  %v725 = vmul.f32 %v431, %v595
  %v726 = vmul.f32 %v432, %v595
  %v727 = vmul.f32 %v433, %v595
  %v728 = vmul.f32 %v434, %v595
  %v729 = vmul.f32 %v435, %v595
  %v730 = vmul.f32 %v436, %v595
  %v731 = vmul.f32 %v437, %v595
  %v732 = vmul.f32 %v438, %v595
  %v733 = vmul.f32 %v439, %v595
  %v734 = vmul.f32 %v440, %v595
  %v735 = vmul.f32 %v441, %v595
  %v736 = vmul.f32 %v442, %v595
  %v737 = vmul.f32 %v443, %v595
  %v738 = vmul.f32 %v444, %v595
  %v739 = vmul.f32 %v445, %v595
  %v740 = vmul.f32 %v446, %v595
  %v741 = vmul.f32 %v447, %v595
  %v742 = vmul.f32 %v448, %v595
  %v743 = vmul.f32 %v449, %v595
  %v744 = vmul.f32 %v450, %v595
  %v745 = vmul.f32 %v451, %v595
  %v746 = vmul.f32 %v452, %v595
  %v747 = vmul.f32 %v453, %v595
  %v748 = vmul.f32 %v454, %v595
  %v749 = vmul.f32 %v455, %v595
  %v750 = vmul.f32 %v456, %v595
  %v751 = vmul.f32 %v457, %v595
  %v752 = vmul.f32 %v458, %v595
  %v753 = vmul.f32 %v459, %v595
  %v754 = vmul.f32 %v460, %v595
  %v755 = vmul.f32 %v461, %v595
  %v756 = vmul.f32 %v462, %v595
  %v757 = vmul.f32 %v463, %v595
  %v758 = vmul.f32 %v464, %v595
  %v759 = vmul.f32 %v465, %v595
  %v760 = vmul.f32 %v466, %v595
  %v761 = vmul.f32 %v467, %v595
  %v762 = vmul.f32 %v468, %v595
  %v763 = vmul.f32 %v469, %v595
  %v764 = vmul.f32 %v470, %v595
  %v765 = vmul.f32 %v471, %v595
  %v766 = vmul.f32 %v472, %v595
  %v767 = vmul.f32 %v473, %v595
  %v768 = vmul.f32 %v474, %v595
  %v769 = vmul.f32 %v475, %v595
  %v770 = vmul.f32 %v476, %v595
  %v771 = vmul.f32 %v477, %v595
  %v772 = vmul.f32 %v478, %v595
  %v773 = vmul.f32 %v479, %v595
  %v774 = vmul.f32 %v480, %v595
  %v775 = vmul.f32 %v481, %v595
  %v776 = vmul.f32 %v482, %v595
  %v777 = vmul.f32 %v483, %v595
  %v778 = vmul.f32 %v484, %v595
  %v779 = vmul.f32 %v485, %v595
  %v780 = vmul.f32 %v486, %v595
  %v781 = vmul.f32 %v487, %v595
  %v782 = vmul.f32 %v488, %v595
  %v783 = vmul.f32 %v489, %v595
  %v784 = vmul.f32 %v490, %v595
  %v785 = vmul.f32 %v491, %v595
  %v786 = vmul.f32 %v492, %v595
  %v787 = vmul.f32 %v493, %v595
  %v788 = vmul.f32 %v494, %v595
  %v789 = vmul.f32 %v495, %v595
  %v790 = vmul.f32 %v496, %v595
  %v791 = vmul.f32 %v497, %v595
  %v792 = vmul.f32 %v498, %v595
  %v793 = vmul.f32 %v499, %v595
  %v794 = vmul.f32 %v500, %v595
  %v795 = vmul.f32 %v501, %v595
  %v796 = vmul.f32 %v502, %v595
  %v797 = vmul.f32 %v503, %v595
  %v798 = vmul.f32 %v504, %v595
  %v799 = vmul.f32 %v505, %v595
  %v800 = vmul.f32 %v506, %v595
  %v801 = vmul.f32 %v507, %v595
  %v802 = vmul.f32 %v508, %v595
  %v803 = vmul.f32 %v509, %v595
  %v804 = vmul.f32 %v510, %v595
  %v805 = vmul.f32 %v511, %v595
  %v806 = vmul.f32 %v512, %v595
  %v807 = vmul.f32 %v513, %v595
  %v808 = vmul.f32 %v514, %v595
  %v809 = vmul.f32 %v515, %v595
  %v810 = vmul.f32 %v516, %v595
  %v811 = vmul.f32 %v517, %v595
  %v812 = vmul.f32 %v518, %v595
  %v813 = vmul.f32 %v519, %v595
  %v814 = vmul.f32 %v520, %v595
  %v815 = vmul.f32 %v521, %v595
  %v816 = vmul.f32 %v522, %v595
  %v817 = vmul.f32 %v523, %v595
  %v818 = vmul.f32 %v524, %v595
  %v819 = vmul.f32 %v525, %v595
  %v820 = vmul.f32 %v526, %v595
  %v821 = vmul.f32 %v527, %v595
  %v822 = vmul.f32 %v528, %v595
  %v823 = vmul.f32 %v529, %v595
  %v824 = vmul.f32 %v530, %v595
  %v825 = vmul.f32 %v531, %v595
  %v826 = vmul.f32 %v532, %v595
  %v827 = vmul.f32 %v533, %v595
  %v828 = vmul.f32 %v534, %v595
  %v829 = vmul.f32 %v535, %v595
  %v830 = vmul.f32 %v536, %v595
  %v831 = vmul.f32 %v537, %v595
  %v832 = vmul.f32 %v538, %v595
  %v833 = vmul.f32 %v539, %v595
  %v834 = vmul.f32 %v540, %v595
  %v835 = vmul.f32 %v541, %v595
  %v836 = vmul.f32 %v542, %v595
  %v837 = vmul.f32 %v543, %v595
  %v838 = vmul.f32 %v544, %v595
  %v839 = vmul.f32 %v545, %v595
  %v840 = vmul.f32 %v546, %v595
  %v841 = vmul.f32 %v547, %v595
  %v842 = vmul.f32 %v548, %v595
  %v843 = vmul.f32 %v549, %v595
  %v844 = vmul.f32 %v550, %v595
  %v845 = vmul.f32 %v551, %v595
  %v846 = vmul.f32 %v552, %v595
  %v847 = vmul.f32 %v553, %v595
  %v848 = vmul.f32 %v554, %v595
  %v849 = vmul.f32 %v555, %v595
  %v850 = vmul.f32 %v556, %v595
  %v851 = vmul.f32 %v557, %v595
  %v852 = vmul.f32 %v558, %v595
  %v853 = vmul.f32 %v559, %v595
  %v854 = vmul.f32 %v560, %v595
  %v855 = vmul.f32 %v561, %v595
  %v856 = vmul.f32 %v562, %v595
  %v857 = vmul.f32 %v563, %v595
  %v858 = vmul.f32 %v564, %v595
  %v859 = vmul.f32 %v565, %v595
  %v860 = vmul.f32 %v566, %v595
  %v861 = vmul.f32 %v567, %v595
  %v862 = vmul.f32 %v568, %v595
  %v863 = vmul.f32 %v569, %v595
  %v864 = vmul.f32 %v570, %v595
  %v865 = vmul.f32 %v571, %v595
  %v866 = vmul.f32 %v572, %v595
  %v867 = vmul.f32 %v573, %v595
  %v868 = vmul.f32 %v574, %v595
  %v869 = vmul.f32 %v575, %v595
  %v870 = vmul.f32 %v576, %v595
  %v871 = vmul.f32 %v577, %v595
  %v872 = vmul.f32 %v578, %v595
  %v873 = vmul.f32 %v579, %v595
  %v874 = vmul.f32 %v580, %v595
  %v875 = vmul.f32 %v581, %v595
  %v876 = vmul.f32 %v582, %v595
  %v877 = vmul.f32 %v583, %v595
  %v878 = vmul.f32 %v584, %v595
  %v879 = vmul.f32 %v585, %v595
  %v880 = vmul.f32 %v586, %v595
  %v881 = vmul.f32 %v587, %v595
  %v882 = vmul.f32 %v588, %v595
  %v883 = vmul.f32 %v589, %v595
  %v884 = vmul.f32 %v590, %v595
  %vm885 = vcmask 793600
  %v886 = vsel %vm885, %v597, 0.0
  %887 = vadd.xlane.f32.xlu0 %v886
  %v888 = vpop.xlane.xlu0 %887
  %v889 = vsel %vm885, %v598, 0.0
  %890 = vadd.xlane.f32.xlu0 %v889
  %v891 = vpop.xlane.xlu0 %890
  %v892 = vsel %vm885, %v599, 0.0
  %893 = vadd.xlane.f32.xlu0 %v892
  %v894 = vpop.xlane.xlu0 %893
  %v895 = vsel %vm885, %v600, 0.0
  %896 = vadd.xlane.f32.xlu0 %v895
  %v897 = vpop.xlane.xlu0 %896
  %v898 = vsel %vm885, %v601, 0.0
  %899 = vadd.xlane.f32.xlu0 %v898
  %v900 = vpop.xlane.xlu0 %899
  %v901 = vsel %vm885, %v602, 0.0
  %902 = vadd.xlane.f32.xlu0 %v901
  %v903 = vpop.xlane.xlu0 %902
  %v904 = vsel %vm885, %v603, 0.0
  %905 = vadd.xlane.f32.xlu0 %v904
  %v906 = vpop.xlane.xlu0 %905
  %v907 = vsel %vm885, %v604, 0.0
  %908 = vadd.xlane.f32.xlu0 %v907
  %v909 = vpop.xlane.xlu0 %908
  %v910 = vsel %vm885, %v605, 0.0
  %911 = vadd.xlane.f32.xlu0 %v910
  %v912 = vpop.xlane.xlu0 %911
  %v913 = vsel %vm885, %v606, 0.0
  %914 = vadd.xlane.f32.xlu0 %v913
  %v915 = vpop.xlane.xlu0 %914
  %v916 = vsel %vm885, %v607, 0.0
  %917 = vadd.xlane.f32.xlu0 %v916
  %v918 = vpop.xlane.xlu0 %917
  %v919 = vsel %vm885, %v608, 0.0
  %920 = vadd.xlane.f32.xlu0 %v919
  %v921 = vpop.xlane.xlu0 %920
  %v922 = vsel %vm885, %v609, 0.0
  %923 = vadd.xlane.f32.xlu0 %v922
  %v924 = vpop.xlane.xlu0 %923
  %v925 = vsel %vm885, %v610, 0.0
  %926 = vadd.xlane.f32.xlu0 %v925
  %v927 = vpop.xlane.xlu0 %926
  %v928 = vsel %vm885, %v611, 0.0
  %929 = vadd.xlane.f32.xlu0 %v928
  %v930 = vpop.xlane.xlu0 %929
  %v931 = vsel %vm885, %v612, 0.0
  %932 = vadd.xlane.f32.xlu0 %v931
  %v933 = vpop.xlane.xlu0 %932
  %v934 = vsel %vm885, %v613, 0.0
  %935 = vadd.xlane.f32.xlu0 %v934
  %v936 = vpop.xlane.xlu0 %935
  %v937 = vsel %vm885, %v614, 0.0
  %938 = vadd.xlane.f32.xlu0 %v937
  %v939 = vpop.xlane.xlu0 %938
  %v940 = vsel %vm885, %v615, 0.0
  %941 = vadd.xlane.f32.xlu0 %v940
  %v942 = vpop.xlane.xlu0 %941
  %v943 = vsel %vm885, %v616, 0.0
  %944 = vadd.xlane.f32.xlu0 %v943
  %v945 = vpop.xlane.xlu0 %944
  %v946 = vsel %vm885, %v617, 0.0
  %947 = vadd.xlane.f32.xlu0 %v946
  %v948 = vpop.xlane.xlu0 %947
  %v949 = vsel %vm885, %v618, 0.0
  %950 = vadd.xlane.f32.xlu0 %v949
  %v951 = vpop.xlane.xlu0 %950
  %v952 = vsel %vm885, %v619, 0.0
  %953 = vadd.xlane.f32.xlu0 %v952
  %v954 = vpop.xlane.xlu0 %953
  %v955 = vsel %vm885, %v620, 0.0
  %956 = vadd.xlane.f32.xlu0 %v955
  %v957 = vpop.xlane.xlu0 %956
  %v958 = vsel %vm885, %v621, 0.0
  %959 = vadd.xlane.f32.xlu0 %v958
  %v960 = vpop.xlane.xlu0 %959
  %v961 = vsel %vm885, %v622, 0.0
  %962 = vadd.xlane.f32.xlu0 %v961
  %v963 = vpop.xlane.xlu0 %962
  %v964 = vsel %vm885, %v623, 0.0
  %965 = vadd.xlane.f32.xlu0 %v964
  %v966 = vpop.xlane.xlu0 %965
  %v967 = vsel %vm885, %v624, 0.0
  %968 = vadd.xlane.f32.xlu0 %v967
  %v969 = vpop.xlane.xlu0 %968
  %v970 = vsel %vm885, %v625, 0.0
  %971 = vadd.xlane.f32.xlu0 %v970
  %v972 = vpop.xlane.xlu0 %971
  %v973 = vsel %vm885, %v626, 0.0
  %974 = vadd.xlane.f32.xlu0 %v973
  %v975 = vpop.xlane.xlu0 %974
  %v976 = vsel %vm885, %v627, 0.0
  %977 = vadd.xlane.f32.xlu0 %v976
  %v978 = vpop.xlane.xlu0 %977
  %v979 = vsel %vm885, %v628, 0.0
  %980 = vadd.xlane.f32.xlu0 %v979
  %v981 = vpop.xlane.xlu0 %980
  %v982 = vsel %vm885, %v629, 0.0
  %983 = vadd.xlane.f32.xlu0 %v982
  %v984 = vpop.xlane.xlu0 %983
  %v985 = vsel %vm885, %v630, 0.0
  %986 = vadd.xlane.f32.xlu0 %v985
  %v987 = vpop.xlane.xlu0 %986
  %v988 = vsel %vm885, %v631, 0.0
  %989 = vadd.xlane.f32.xlu0 %v988
  %v990 = vpop.xlane.xlu0 %989
  %v991 = vsel %vm885, %v632, 0.0
  %992 = vadd.xlane.f32.xlu0 %v991
  %v993 = vpop.xlane.xlu0 %992
  %v994 = vsel %vm885, %v633, 0.0
  %995 = vadd.xlane.f32.xlu0 %v994
  %v996 = vpop.xlane.xlu0 %995
  %v997 = vsel %vm885, %v634, 0.0
  %998 = vadd.xlane.f32.xlu0 %v997
  %v999 = vpop.xlane.xlu0 %998
  %v1000 = vsel %vm885, %v635, 0.0
  %1001 = vadd.xlane.f32.xlu0 %v1000
  %v1002 = vpop.xlane.xlu0 %1001
  %v1003 = vsel %vm885, %v636, 0.0
  %1004 = vadd.xlane.f32.xlu0 %v1003
  %v1005 = vpop.xlane.xlu0 %1004
  %v1006 = vsel %vm885, %v637, 0.0
  %1007 = vadd.xlane.f32.xlu0 %v1006
  %v1008 = vpop.xlane.xlu0 %1007
  %v1009 = vsel %vm885, %v638, 0.0
  %1010 = vadd.xlane.f32.xlu0 %v1009
  %v1011 = vpop.xlane.xlu0 %1010
  %v1012 = vsel %vm885, %v639, 0.0
  %1013 = vadd.xlane.f32.xlu0 %v1012
  %v1014 = vpop.xlane.xlu0 %1013
  %v1015 = vsel %vm885, %v640, 0.0
  %1016 = vadd.xlane.f32.xlu0 %v1015
  %v1017 = vpop.xlane.xlu0 %1016
  %v1018 = vsel %vm885, %v641, 0.0
  %1019 = vadd.xlane.f32.xlu0 %v1018
  %v1020 = vpop.xlane.xlu0 %1019
  %v1021 = vsel %vm885, %v642, 0.0
  %1022 = vadd.xlane.f32.xlu0 %v1021
  %v1023 = vpop.xlane.xlu0 %1022
  %v1024 = vsel %vm885, %v643, 0.0
  %1025 = vadd.xlane.f32.xlu0 %v1024
  %v1026 = vpop.xlane.xlu0 %1025
  %v1027 = vsel %vm885, %v644, 0.0
  %1028 = vadd.xlane.f32.xlu0 %v1027
  %v1029 = vpop.xlane.xlu0 %1028
  %v1030 = vsel %vm885, %v645, 0.0
  %1031 = vadd.xlane.f32.xlu0 %v1030
  %v1032 = vpop.xlane.xlu0 %1031
  %v1033 = vsel %vm885, %v646, 0.0
  %1034 = vadd.xlane.f32.xlu0 %v1033
  %v1035 = vpop.xlane.xlu0 %1034
  %v1036 = vsel %vm885, %v647, 0.0
  %1037 = vadd.xlane.f32.xlu0 %v1036
  %v1038 = vpop.xlane.xlu0 %1037
  %v1039 = vsel %vm885, %v648, 0.0
  %1040 = vadd.xlane.f32.xlu0 %v1039
  %v1041 = vpop.xlane.xlu0 %1040
  %v1042 = vsel %vm885, %v649, 0.0
  %1043 = vadd.xlane.f32.xlu0 %v1042
  %v1044 = vpop.xlane.xlu0 %1043
  %v1045 = vsel %vm885, %v650, 0.0
  %1046 = vadd.xlane.f32.xlu0 %v1045
  %v1047 = vpop.xlane.xlu0 %1046
  %v1048 = vsel %vm885, %v651, 0.0
  %1049 = vadd.xlane.f32.xlu0 %v1048
  %v1050 = vpop.xlane.xlu0 %1049
  %v1051 = vsel %vm885, %v652, 0.0
  %1052 = vadd.xlane.f32.xlu0 %v1051
  %v1053 = vpop.xlane.xlu0 %1052
  %v1054 = vsel %vm885, %v653, 0.0
  %1055 = vadd.xlane.f32.xlu0 %v1054
  %v1056 = vpop.xlane.xlu0 %1055
  %v1057 = vsel %vm885, %v654, 0.0
  %1058 = vadd.xlane.f32.xlu0 %v1057
  %v1059 = vpop.xlane.xlu0 %1058
  %v1060 = vsel %vm885, %v655, 0.0
  %1061 = vadd.xlane.f32.xlu0 %v1060
  %v1062 = vpop.xlane.xlu0 %1061
  %v1063 = vsel %vm885, %v656, 0.0
  %1064 = vadd.xlane.f32.xlu0 %v1063
  %v1065 = vpop.xlane.xlu0 %1064
  %v1066 = vsel %vm885, %v657, 0.0
  %1067 = vadd.xlane.f32.xlu0 %v1066
  %v1068 = vpop.xlane.xlu0 %1067
  %v1069 = vsel %vm885, %v658, 0.0
  %1070 = vadd.xlane.f32.xlu0 %v1069
  %v1071 = vpop.xlane.xlu0 %1070
  %v1072 = vsel %vm885, %v659, 0.0
  %1073 = vadd.xlane.f32.xlu0 %v1072
  %v1074 = vpop.xlane.xlu0 %1073
  %v1075 = vsel %vm885, %v660, 0.0
  %1076 = vadd.xlane.f32.xlu0 %v1075
  %v1077 = vpop.xlane.xlu0 %1076
  %v1078 = vsel %vm885, %v661, 0.0
  %1079 = vadd.xlane.f32.xlu0 %v1078
  %v1080 = vpop.xlane.xlu0 %1079
  %v1081 = vsel %vm885, %v662, 0.0
  %1082 = vadd.xlane.f32.xlu0 %v1081
  %v1083 = vpop.xlane.xlu0 %1082
  %v1084 = vsel %vm885, %v663, 0.0
  %1085 = vadd.xlane.f32.xlu0 %v1084
  %v1086 = vpop.xlane.xlu0 %1085
  %v1087 = vsel %vm885, %v664, 0.0
  %1088 = vadd.xlane.f32.xlu0 %v1087
  %v1089 = vpop.xlane.xlu0 %1088
  %v1090 = vsel %vm885, %v665, 0.0
  %1091 = vadd.xlane.f32.xlu0 %v1090
  %v1092 = vpop.xlane.xlu0 %1091
  %v1093 = vsel %vm885, %v666, 0.0
  %1094 = vadd.xlane.f32.xlu0 %v1093
  %v1095 = vpop.xlane.xlu0 %1094
  %v1096 = vsel %vm885, %v667, 0.0
  %1097 = vadd.xlane.f32.xlu0 %v1096
  %v1098 = vpop.xlane.xlu0 %1097
  %v1099 = vsel %vm885, %v668, 0.0
  %1100 = vadd.xlane.f32.xlu0 %v1099
  %v1101 = vpop.xlane.xlu0 %1100
  %v1102 = vsel %vm885, %v669, 0.0
  %1103 = vadd.xlane.f32.xlu0 %v1102
  %v1104 = vpop.xlane.xlu0 %1103
  %v1105 = vsel %vm885, %v670, 0.0
  %1106 = vadd.xlane.f32.xlu0 %v1105
  %v1107 = vpop.xlane.xlu0 %1106
  %v1108 = vsel %vm885, %v671, 0.0
  %1109 = vadd.xlane.f32.xlu0 %v1108
  %v1110 = vpop.xlane.xlu0 %1109
  %v1111 = vsel %vm885, %v672, 0.0
  %1112 = vadd.xlane.f32.xlu0 %v1111
  %v1113 = vpop.xlane.xlu0 %1112
  %v1114 = vsel %vm885, %v673, 0.0
  %1115 = vadd.xlane.f32.xlu0 %v1114
  %v1116 = vpop.xlane.xlu0 %1115
  %v1117 = vsel %vm885, %v674, 0.0
  %1118 = vadd.xlane.f32.xlu0 %v1117
  %v1119 = vpop.xlane.xlu0 %1118
  %v1120 = vsel %vm885, %v675, 0.0
  %1121 = vadd.xlane.f32.xlu0 %v1120
  %v1122 = vpop.xlane.xlu0 %1121
  %v1123 = vsel %vm885, %v676, 0.0
  %1124 = vadd.xlane.f32.xlu0 %v1123
  %v1125 = vpop.xlane.xlu0 %1124
  %v1126 = vsel %vm885, %v677, 0.0
  %1127 = vadd.xlane.f32.xlu0 %v1126
  %v1128 = vpop.xlane.xlu0 %1127
  %v1129 = vsel %vm885, %v678, 0.0
  %1130 = vadd.xlane.f32.xlu0 %v1129
  %v1131 = vpop.xlane.xlu0 %1130
  %v1132 = vsel %vm885, %v679, 0.0
  %1133 = vadd.xlane.f32.xlu0 %v1132
  %v1134 = vpop.xlane.xlu0 %1133
  %v1135 = vsel %vm885, %v680, 0.0
  %1136 = vadd.xlane.f32.xlu0 %v1135
  %v1137 = vpop.xlane.xlu0 %1136
  %v1138 = vsel %vm885, %v681, 0.0
  %1139 = vadd.xlane.f32.xlu0 %v1138
  %v1140 = vpop.xlane.xlu0 %1139
  %v1141 = vsel %vm885, %v682, 0.0
  %1142 = vadd.xlane.f32.xlu0 %v1141
  %v1143 = vpop.xlane.xlu0 %1142
  %v1144 = vsel %vm885, %v683, 0.0
  %1145 = vadd.xlane.f32.xlu0 %v1144
  %v1146 = vpop.xlane.xlu0 %1145
  %v1147 = vsel %vm885, %v684, 0.0
  %1148 = vadd.xlane.f32.xlu0 %v1147
  %v1149 = vpop.xlane.xlu0 %1148
  %v1150 = vsel %vm885, %v685, 0.0
  %1151 = vadd.xlane.f32.xlu0 %v1150
  %v1152 = vpop.xlane.xlu0 %1151
  %v1153 = vsel %vm885, %v686, 0.0
  %1154 = vadd.xlane.f32.xlu0 %v1153
  %v1155 = vpop.xlane.xlu0 %1154
  %v1156 = vsel %vm885, %v687, 0.0
  %1157 = vadd.xlane.f32.xlu0 %v1156
  %v1158 = vpop.xlane.xlu0 %1157
  %v1159 = vsel %vm885, %v688, 0.0
  %1160 = vadd.xlane.f32.xlu0 %v1159
  %v1161 = vpop.xlane.xlu0 %1160
  %v1162 = vsel %vm885, %v689, 0.0
  %1163 = vadd.xlane.f32.xlu0 %v1162
  %v1164 = vpop.xlane.xlu0 %1163
  %v1165 = vsel %vm885, %v690, 0.0
  %1166 = vadd.xlane.f32.xlu0 %v1165
  %v1167 = vpop.xlane.xlu0 %1166
  %v1168 = vsel %vm885, %v691, 0.0
  %1169 = vadd.xlane.f32.xlu0 %v1168
  %v1170 = vpop.xlane.xlu0 %1169
  %v1171 = vsel %vm885, %v692, 0.0
  %1172 = vadd.xlane.f32.xlu0 %v1171
  %v1173 = vpop.xlane.xlu0 %1172
  %v1174 = vsel %vm885, %v693, 0.0
  %1175 = vadd.xlane.f32.xlu0 %v1174
  %v1176 = vpop.xlane.xlu0 %1175
  %v1177 = vsel %vm885, %v694, 0.0
  %1178 = vadd.xlane.f32.xlu0 %v1177
  %v1179 = vpop.xlane.xlu0 %1178
  %v1180 = vsel %vm885, %v695, 0.0
  %1181 = vadd.xlane.f32.xlu0 %v1180
  %v1182 = vpop.xlane.xlu0 %1181
  %v1183 = vsel %vm885, %v696, 0.0
  %1184 = vadd.xlane.f32.xlu0 %v1183
  %v1185 = vpop.xlane.xlu0 %1184
  %v1186 = vsel %vm885, %v697, 0.0
  %1187 = vadd.xlane.f32.xlu0 %v1186
  %v1188 = vpop.xlane.xlu0 %1187
  %v1189 = vsel %vm885, %v698, 0.0
  %1190 = vadd.xlane.f32.xlu0 %v1189
  %v1191 = vpop.xlane.xlu0 %1190
  %v1192 = vsel %vm885, %v699, 0.0
  %1193 = vadd.xlane.f32.xlu0 %v1192
  %v1194 = vpop.xlane.xlu0 %1193
  %v1195 = vsel %vm885, %v700, 0.0
  %1196 = vadd.xlane.f32.xlu0 %v1195
  %v1197 = vpop.xlane.xlu0 %1196
  %v1198 = vsel %vm885, %v701, 0.0
  %1199 = vadd.xlane.f32.xlu0 %v1198
  %v1200 = vpop.xlane.xlu0 %1199
  %v1201 = vsel %vm885, %v702, 0.0
  %1202 = vadd.xlane.f32.xlu0 %v1201
  %v1203 = vpop.xlane.xlu0 %1202
  %v1204 = vsel %vm885, %v703, 0.0
  %1205 = vadd.xlane.f32.xlu0 %v1204
  %v1206 = vpop.xlane.xlu0 %1205
  %v1207 = vsel %vm885, %v704, 0.0
  %1208 = vadd.xlane.f32.xlu0 %v1207
  %v1209 = vpop.xlane.xlu0 %1208
  %v1210 = vsel %vm885, %v705, 0.0
  %1211 = vadd.xlane.f32.xlu0 %v1210
  %v1212 = vpop.xlane.xlu0 %1211
  %v1213 = vsel %vm885, %v706, 0.0
  %1214 = vadd.xlane.f32.xlu0 %v1213
  %v1215 = vpop.xlane.xlu0 %1214
  %v1216 = vsel %vm885, %v707, 0.0
  %1217 = vadd.xlane.f32.xlu0 %v1216
  %v1218 = vpop.xlane.xlu0 %1217
  %v1219 = vsel %vm885, %v708, 0.0
  %1220 = vadd.xlane.f32.xlu0 %v1219
  %v1221 = vpop.xlane.xlu0 %1220
  %v1222 = vsel %vm885, %v709, 0.0
  %1223 = vadd.xlane.f32.xlu0 %v1222
  %v1224 = vpop.xlane.xlu0 %1223
  %v1225 = vsel %vm885, %v710, 0.0
  %1226 = vadd.xlane.f32.xlu0 %v1225
  %v1227 = vpop.xlane.xlu0 %1226
  %v1228 = vsel %vm885, %v711, 0.0
  %1229 = vadd.xlane.f32.xlu0 %v1228
  %v1230 = vpop.xlane.xlu0 %1229
  %v1231 = vsel %vm885, %v712, 0.0
  %1232 = vadd.xlane.f32.xlu0 %v1231
  %v1233 = vpop.xlane.xlu0 %1232
  %v1234 = vsel %vm885, %v713, 0.0
  %1235 = vadd.xlane.f32.xlu0 %v1234
  %v1236 = vpop.xlane.xlu0 %1235
  %v1237 = vsel %vm885, %v714, 0.0
  %1238 = vadd.xlane.f32.xlu0 %v1237
  %v1239 = vpop.xlane.xlu0 %1238
  %v1240 = vsel %vm885, %v715, 0.0
  %1241 = vadd.xlane.f32.xlu0 %v1240
  %v1242 = vpop.xlane.xlu0 %1241
  %v1243 = vsel %vm885, %v716, 0.0
  %1244 = vadd.xlane.f32.xlu0 %v1243
  %v1245 = vpop.xlane.xlu0 %1244
  %v1246 = vsel %vm885, %v717, 0.0
  %1247 = vadd.xlane.f32.xlu0 %v1246
  %v1248 = vpop.xlane.xlu0 %1247
  %v1249 = vsel %vm885, %v718, 0.0
  %1250 = vadd.xlane.f32.xlu0 %v1249
  %v1251 = vpop.xlane.xlu0 %1250
  %v1252 = vsel %vm885, %v719, 0.0
  %1253 = vadd.xlane.f32.xlu0 %v1252
  %v1254 = vpop.xlane.xlu0 %1253
  %v1255 = vsel %vm885, %v720, 0.0
  %1256 = vadd.xlane.f32.xlu0 %v1255
  %v1257 = vpop.xlane.xlu0 %1256
  %v1258 = vsel %vm885, %v721, 0.0
  %1259 = vadd.xlane.f32.xlu0 %v1258
  %v1260 = vpop.xlane.xlu0 %1259
  %v1261 = vsel %vm885, %v722, 0.0
  %1262 = vadd.xlane.f32.xlu0 %v1261
  %v1263 = vpop.xlane.xlu0 %1262
  %v1264 = vsel %vm885, %v723, 0.0
  %1265 = vadd.xlane.f32.xlu0 %v1264
  %v1266 = vpop.xlane.xlu0 %1265
  %v1267 = vsel %vm885, %v724, 0.0
  %1268 = vadd.xlane.f32.xlu0 %v1267
  %v1269 = vpop.xlane.xlu0 %1268
  %v1270 = vsel %vm885, %v725, 0.0
  %1271 = vadd.xlane.f32.xlu0 %v1270
  %v1272 = vpop.xlane.xlu0 %1271
  %v1273 = vsel %vm885, %v726, 0.0
  %1274 = vadd.xlane.f32.xlu0 %v1273
  %v1275 = vpop.xlane.xlu0 %1274
  %v1276 = vsel %vm885, %v727, 0.0
  %1277 = vadd.xlane.f32.xlu0 %v1276
  %v1278 = vpop.xlane.xlu0 %1277
  %v1279 = vsel %vm885, %v728, 0.0
  %1280 = vadd.xlane.f32.xlu0 %v1279
  %v1281 = vpop.xlane.xlu0 %1280
  %v1282 = vsel %vm885, %v729, 0.0
  %1283 = vadd.xlane.f32.xlu0 %v1282
  %v1284 = vpop.xlane.xlu0 %1283
  %v1285 = vsel %vm885, %v730, 0.0
  %1286 = vadd.xlane.f32.xlu0 %v1285
  %v1287 = vpop.xlane.xlu0 %1286
  %v1288 = vsel %vm885, %v731, 0.0
  %1289 = vadd.xlane.f32.xlu0 %v1288
  %v1290 = vpop.xlane.xlu0 %1289
  %v1291 = vsel %vm885, %v732, 0.0
  %1292 = vadd.xlane.f32.xlu0 %v1291
  %v1293 = vpop.xlane.xlu0 %1292
  %v1294 = vsel %vm885, %v733, 0.0
  %1295 = vadd.xlane.f32.xlu0 %v1294
  %v1296 = vpop.xlane.xlu0 %1295
  %v1297 = vsel %vm885, %v734, 0.0
  %1298 = vadd.xlane.f32.xlu0 %v1297
  %v1299 = vpop.xlane.xlu0 %1298
  %v1300 = vsel %vm885, %v735, 0.0
  %1301 = vadd.xlane.f32.xlu0 %v1300
  %v1302 = vpop.xlane.xlu0 %1301
  %v1303 = vsel %vm885, %v736, 0.0
  %1304 = vadd.xlane.f32.xlu0 %v1303
  %v1305 = vpop.xlane.xlu0 %1304
  %v1306 = vsel %vm885, %v737, 0.0
  %1307 = vadd.xlane.f32.xlu0 %v1306
  %v1308 = vpop.xlane.xlu0 %1307
  %v1309 = vsel %vm885, %v738, 0.0
  %1310 = vadd.xlane.f32.xlu0 %v1309
  %v1311 = vpop.xlane.xlu0 %1310
  %v1312 = vsel %vm885, %v739, 0.0
  %1313 = vadd.xlane.f32.xlu0 %v1312
  %v1314 = vpop.xlane.xlu0 %1313
  %v1315 = vsel %vm885, %v740, 0.0
  %1316 = vadd.xlane.f32.xlu0 %v1315
  %v1317 = vpop.xlane.xlu0 %1316
  %v1318 = vsel %vm885, %v741, 0.0
  %1319 = vadd.xlane.f32.xlu0 %v1318
  %v1320 = vpop.xlane.xlu0 %1319
  %v1321 = vsel %vm885, %v742, 0.0
  %1322 = vadd.xlane.f32.xlu0 %v1321
  %v1323 = vpop.xlane.xlu0 %1322
  %v1324 = vsel %vm885, %v743, 0.0
  %1325 = vadd.xlane.f32.xlu0 %v1324
  %v1326 = vpop.xlane.xlu0 %1325
  %v1327 = vsel %vm885, %v744, 0.0
  %1328 = vadd.xlane.f32.xlu0 %v1327
  %v1329 = vpop.xlane.xlu0 %1328
  %v1330 = vsel %vm885, %v745, 0.0
  %1331 = vadd.xlane.f32.xlu0 %v1330
  %v1332 = vpop.xlane.xlu0 %1331
  %v1333 = vsel %vm885, %v746, 0.0
  %1334 = vadd.xlane.f32.xlu0 %v1333
  %v1335 = vpop.xlane.xlu0 %1334
  %v1336 = vsel %vm885, %v747, 0.0
  %1337 = vadd.xlane.f32.xlu0 %v1336
  %v1338 = vpop.xlane.xlu0 %1337
  %v1339 = vsel %vm885, %v748, 0.0
  %1340 = vadd.xlane.f32.xlu0 %v1339
  %v1341 = vpop.xlane.xlu0 %1340
  %v1342 = vsel %vm885, %v749, 0.0
  %1343 = vadd.xlane.f32.xlu0 %v1342
  %v1344 = vpop.xlane.xlu0 %1343
  %v1345 = vsel %vm885, %v750, 0.0
  %1346 = vadd.xlane.f32.xlu0 %v1345
  %v1347 = vpop.xlane.xlu0 %1346
  %v1348 = vsel %vm885, %v751, 0.0
  %1349 = vadd.xlane.f32.xlu0 %v1348
  %v1350 = vpop.xlane.xlu0 %1349
  %v1351 = vsel %vm885, %v752, 0.0
  %1352 = vadd.xlane.f32.xlu0 %v1351
  %v1353 = vpop.xlane.xlu0 %1352
  %v1354 = vsel %vm885, %v753, 0.0
  %1355 = vadd.xlane.f32.xlu0 %v1354
  %v1356 = vpop.xlane.xlu0 %1355
  %v1357 = vsel %vm885, %v754, 0.0
  %1358 = vadd.xlane.f32.xlu0 %v1357
  %v1359 = vpop.xlane.xlu0 %1358
  %v1360 = vsel %vm885, %v755, 0.0
  %1361 = vadd.xlane.f32.xlu0 %v1360
  %v1362 = vpop.xlane.xlu0 %1361
  %v1363 = vsel %vm885, %v756, 0.0
  %1364 = vadd.xlane.f32.xlu0 %v1363
  %v1365 = vpop.xlane.xlu0 %1364
  %v1366 = vsel %vm885, %v757, 0.0
  %1367 = vadd.xlane.f32.xlu0 %v1366
  %v1368 = vpop.xlane.xlu0 %1367
  %v1369 = vsel %vm885, %v758, 0.0
  %1370 = vadd.xlane.f32.xlu0 %v1369
  %v1371 = vpop.xlane.xlu0 %1370
  %v1372 = vsel %vm885, %v759, 0.0
  %1373 = vadd.xlane.f32.xlu0 %v1372
  %v1374 = vpop.xlane.xlu0 %1373
  %v1375 = vsel %vm885, %v760, 0.0
  %1376 = vadd.xlane.f32.xlu0 %v1375
  %v1377 = vpop.xlane.xlu0 %1376
  %v1378 = vsel %vm885, %v761, 0.0
  %1379 = vadd.xlane.f32.xlu0 %v1378
  %v1380 = vpop.xlane.xlu0 %1379
  %v1381 = vsel %vm885, %v762, 0.0
  %1382 = vadd.xlane.f32.xlu0 %v1381
  %v1383 = vpop.xlane.xlu0 %1382
  %v1384 = vsel %vm885, %v763, 0.0
  %1385 = vadd.xlane.f32.xlu0 %v1384
  %v1386 = vpop.xlane.xlu0 %1385
  %v1387 = vsel %vm885, %v764, 0.0
  %1388 = vadd.xlane.f32.xlu0 %v1387
  %v1389 = vpop.xlane.xlu0 %1388
  %v1390 = vsel %vm885, %v765, 0.0
  %1391 = vadd.xlane.f32.xlu0 %v1390
  %v1392 = vpop.xlane.xlu0 %1391
  %v1393 = vsel %vm885, %v766, 0.0
  %1394 = vadd.xlane.f32.xlu0 %v1393
  %v1395 = vpop.xlane.xlu0 %1394
  %v1396 = vsel %vm885, %v767, 0.0
  %1397 = vadd.xlane.f32.xlu0 %v1396
  %v1398 = vpop.xlane.xlu0 %1397
  %v1399 = vsel %vm885, %v768, 0.0
  %1400 = vadd.xlane.f32.xlu0 %v1399
  %v1401 = vpop.xlane.xlu0 %1400
  %v1402 = vsel %vm885, %v769, 0.0
  %1403 = vadd.xlane.f32.xlu0 %v1402
  %v1404 = vpop.xlane.xlu0 %1403
  %v1405 = vsel %vm885, %v770, 0.0
  %1406 = vadd.xlane.f32.xlu0 %v1405
  %v1407 = vpop.xlane.xlu0 %1406
  %v1408 = vsel %vm885, %v771, 0.0
  %1409 = vadd.xlane.f32.xlu0 %v1408
  %v1410 = vpop.xlane.xlu0 %1409
  %v1411 = vsel %vm885, %v772, 0.0
  %1412 = vadd.xlane.f32.xlu0 %v1411
  %v1413 = vpop.xlane.xlu0 %1412
  %v1414 = vsel %vm885, %v773, 0.0
  %1415 = vadd.xlane.f32.xlu0 %v1414
  %v1416 = vpop.xlane.xlu0 %1415
  %v1417 = vsel %vm885, %v774, 0.0
  %1418 = vadd.xlane.f32.xlu0 %v1417
  %v1419 = vpop.xlane.xlu0 %1418
  %v1420 = vsel %vm885, %v775, 0.0
  %1421 = vadd.xlane.f32.xlu0 %v1420
  %v1422 = vpop.xlane.xlu0 %1421
  %v1423 = vsel %vm885, %v776, 0.0
  %1424 = vadd.xlane.f32.xlu0 %v1423
  %v1425 = vpop.xlane.xlu0 %1424
  %v1426 = vsel %vm885, %v777, 0.0
  %1427 = vadd.xlane.f32.xlu0 %v1426
  %v1428 = vpop.xlane.xlu0 %1427
  %v1429 = vsel %vm885, %v778, 0.0
  %1430 = vadd.xlane.f32.xlu0 %v1429
  %v1431 = vpop.xlane.xlu0 %1430
  %v1432 = vsel %vm885, %v779, 0.0
  %1433 = vadd.xlane.f32.xlu0 %v1432
  %v1434 = vpop.xlane.xlu0 %1433
  %v1435 = vsel %vm885, %v780, 0.0
  %1436 = vadd.xlane.f32.xlu0 %v1435
  %v1437 = vpop.xlane.xlu0 %1436
  %v1438 = vsel %vm885, %v781, 0.0
  %1439 = vadd.xlane.f32.xlu0 %v1438
  %v1440 = vpop.xlane.xlu0 %1439
  %v1441 = vsel %vm885, %v782, 0.0
  %1442 = vadd.xlane.f32.xlu0 %v1441
  %v1443 = vpop.xlane.xlu0 %1442
  %v1444 = vsel %vm885, %v783, 0.0
  %1445 = vadd.xlane.f32.xlu0 %v1444
  %v1446 = vpop.xlane.xlu0 %1445
  %v1447 = vsel %vm885, %v784, 0.0
  %1448 = vadd.xlane.f32.xlu0 %v1447
  %v1449 = vpop.xlane.xlu0 %1448
  %v1450 = vsel %vm885, %v785, 0.0
  %1451 = vadd.xlane.f32.xlu0 %v1450
  %v1452 = vpop.xlane.xlu0 %1451
  %v1453 = vsel %vm885, %v786, 0.0
  %1454 = vadd.xlane.f32.xlu0 %v1453
  %v1455 = vpop.xlane.xlu0 %1454
  %v1456 = vsel %vm885, %v787, 0.0
  %1457 = vadd.xlane.f32.xlu0 %v1456
  %v1458 = vpop.xlane.xlu0 %1457
  %v1459 = vsel %vm885, %v788, 0.0
  %1460 = vadd.xlane.f32.xlu0 %v1459
  %v1461 = vpop.xlane.xlu0 %1460
  %v1462 = vsel %vm885, %v789, 0.0
  %1463 = vadd.xlane.f32.xlu0 %v1462
  %v1464 = vpop.xlane.xlu0 %1463
  %v1465 = vsel %vm885, %v790, 0.0
  %1466 = vadd.xlane.f32.xlu0 %v1465
  %v1467 = vpop.xlane.xlu0 %1466
  %v1468 = vsel %vm885, %v791, 0.0
  %1469 = vadd.xlane.f32.xlu0 %v1468
  %v1470 = vpop.xlane.xlu0 %1469
  %v1471 = vsel %vm885, %v792, 0.0
  %1472 = vadd.xlane.f32.xlu0 %v1471
  %v1473 = vpop.xlane.xlu0 %1472
  %v1474 = vsel %vm885, %v793, 0.0
  %1475 = vadd.xlane.f32.xlu0 %v1474
  %v1476 = vpop.xlane.xlu0 %1475
  %v1477 = vsel %vm885, %v794, 0.0
  %1478 = vadd.xlane.f32.xlu0 %v1477
  %v1479 = vpop.xlane.xlu0 %1478
  %v1480 = vsel %vm885, %v795, 0.0
  %1481 = vadd.xlane.f32.xlu0 %v1480
  %v1482 = vpop.xlane.xlu0 %1481
  %v1483 = vsel %vm885, %v796, 0.0
  %1484 = vadd.xlane.f32.xlu0 %v1483
  %v1485 = vpop.xlane.xlu0 %1484
  %v1486 = vsel %vm885, %v797, 0.0
  %1487 = vadd.xlane.f32.xlu0 %v1486
  %v1488 = vpop.xlane.xlu0 %1487
  %v1489 = vsel %vm885, %v798, 0.0
  %1490 = vadd.xlane.f32.xlu0 %v1489
  %v1491 = vpop.xlane.xlu0 %1490
  %v1492 = vsel %vm885, %v799, 0.0
  %1493 = vadd.xlane.f32.xlu0 %v1492
  %v1494 = vpop.xlane.xlu0 %1493
  %v1495 = vsel %vm885, %v800, 0.0
  %1496 = vadd.xlane.f32.xlu0 %v1495
  %v1497 = vpop.xlane.xlu0 %1496
  %v1498 = vsel %vm885, %v801, 0.0
  %1499 = vadd.xlane.f32.xlu0 %v1498
  %v1500 = vpop.xlane.xlu0 %1499
  %v1501 = vsel %vm885, %v802, 0.0
  %1502 = vadd.xlane.f32.xlu0 %v1501
  %v1503 = vpop.xlane.xlu0 %1502
  %v1504 = vsel %vm885, %v803, 0.0
  %1505 = vadd.xlane.f32.xlu0 %v1504
  %v1506 = vpop.xlane.xlu0 %1505
  %v1507 = vsel %vm885, %v804, 0.0
  %1508 = vadd.xlane.f32.xlu0 %v1507
  %v1509 = vpop.xlane.xlu0 %1508
  %v1510 = vsel %vm885, %v805, 0.0
  %1511 = vadd.xlane.f32.xlu0 %v1510
  %v1512 = vpop.xlane.xlu0 %1511
  %v1513 = vsel %vm885, %v806, 0.0
  %1514 = vadd.xlane.f32.xlu0 %v1513
  %v1515 = vpop.xlane.xlu0 %1514
  %v1516 = vsel %vm885, %v807, 0.0
  %1517 = vadd.xlane.f32.xlu0 %v1516
  %v1518 = vpop.xlane.xlu0 %1517
  %v1519 = vsel %vm885, %v808, 0.0
  %1520 = vadd.xlane.f32.xlu0 %v1519
  %v1521 = vpop.xlane.xlu0 %1520
  %v1522 = vsel %vm885, %v809, 0.0
  %1523 = vadd.xlane.f32.xlu0 %v1522
  %v1524 = vpop.xlane.xlu0 %1523
  %v1525 = vsel %vm885, %v810, 0.0
  %1526 = vadd.xlane.f32.xlu0 %v1525
  %v1527 = vpop.xlane.xlu0 %1526
  %v1528 = vsel %vm885, %v811, 0.0
  %1529 = vadd.xlane.f32.xlu0 %v1528
  %v1530 = vpop.xlane.xlu0 %1529
  %v1531 = vsel %vm885, %v812, 0.0
  %1532 = vadd.xlane.f32.xlu0 %v1531
  %v1533 = vpop.xlane.xlu0 %1532
  %v1534 = vsel %vm885, %v813, 0.0
  %1535 = vadd.xlane.f32.xlu0 %v1534
  %v1536 = vpop.xlane.xlu0 %1535
  %v1537 = vsel %vm885, %v814, 0.0
  %1538 = vadd.xlane.f32.xlu0 %v1537
  %v1539 = vpop.xlane.xlu0 %1538
  %v1540 = vsel %vm885, %v815, 0.0
  %1541 = vadd.xlane.f32.xlu0 %v1540
  %v1542 = vpop.xlane.xlu0 %1541
  %v1543 = vsel %vm885, %v816, 0.0
  %1544 = vadd.xlane.f32.xlu0 %v1543
  %v1545 = vpop.xlane.xlu0 %1544
  %v1546 = vsel %vm885, %v817, 0.0
  %1547 = vadd.xlane.f32.xlu0 %v1546
  %v1548 = vpop.xlane.xlu0 %1547
  %v1549 = vsel %vm885, %v818, 0.0
  %1550 = vadd.xlane.f32.xlu0 %v1549
  %v1551 = vpop.xlane.xlu0 %1550
  %v1552 = vsel %vm885, %v819, 0.0
  %1553 = vadd.xlane.f32.xlu0 %v1552
  %v1554 = vpop.xlane.xlu0 %1553
  %v1555 = vsel %vm885, %v820, 0.0
  %1556 = vadd.xlane.f32.xlu0 %v1555
  %v1557 = vpop.xlane.xlu0 %1556
  %v1558 = vsel %vm885, %v821, 0.0
  %1559 = vadd.xlane.f32.xlu0 %v1558
  %v1560 = vpop.xlane.xlu0 %1559
  %v1561 = vsel %vm885, %v822, 0.0
  %1562 = vadd.xlane.f32.xlu0 %v1561
  %v1563 = vpop.xlane.xlu0 %1562
  %v1564 = vsel %vm885, %v823, 0.0
  %1565 = vadd.xlane.f32.xlu0 %v1564
  %v1566 = vpop.xlane.xlu0 %1565
  %v1567 = vsel %vm885, %v824, 0.0
  %1568 = vadd.xlane.f32.xlu0 %v1567
  %v1569 = vpop.xlane.xlu0 %1568
  %v1570 = vsel %vm885, %v825, 0.0
  %1571 = vadd.xlane.f32.xlu0 %v1570
  %v1572 = vpop.xlane.xlu0 %1571
  %v1573 = vsel %vm885, %v826, 0.0
  %1574 = vadd.xlane.f32.xlu0 %v1573
  %v1575 = vpop.xlane.xlu0 %1574
  %v1576 = vsel %vm885, %v827, 0.0
  %1577 = vadd.xlane.f32.xlu0 %v1576
  %v1578 = vpop.xlane.xlu0 %1577
  %v1579 = vsel %vm885, %v828, 0.0
  %1580 = vadd.xlane.f32.xlu0 %v1579
  %v1581 = vpop.xlane.xlu0 %1580
  %v1582 = vsel %vm885, %v829, 0.0
  %1583 = vadd.xlane.f32.xlu0 %v1582
  %v1584 = vpop.xlane.xlu0 %1583
  %v1585 = vsel %vm885, %v830, 0.0
  %1586 = vadd.xlane.f32.xlu0 %v1585
  %v1587 = vpop.xlane.xlu0 %1586
  %v1588 = vsel %vm885, %v831, 0.0
  %1589 = vadd.xlane.f32.xlu0 %v1588
  %v1590 = vpop.xlane.xlu0 %1589
  %v1591 = vsel %vm885, %v832, 0.0
  %1592 = vadd.xlane.f32.xlu0 %v1591
  %v1593 = vpop.xlane.xlu0 %1592
  %v1594 = vsel %vm885, %v833, 0.0
  %1595 = vadd.xlane.f32.xlu0 %v1594
  %v1596 = vpop.xlane.xlu0 %1595
  %v1597 = vsel %vm885, %v834, 0.0
  %1598 = vadd.xlane.f32.xlu0 %v1597
  %v1599 = vpop.xlane.xlu0 %1598
  %v1600 = vsel %vm885, %v835, 0.0
  %1601 = vadd.xlane.f32.xlu0 %v1600
  %v1602 = vpop.xlane.xlu0 %1601
  %v1603 = vsel %vm885, %v836, 0.0
  %1604 = vadd.xlane.f32.xlu0 %v1603
  %v1605 = vpop.xlane.xlu0 %1604
  %v1606 = vsel %vm885, %v837, 0.0
  %1607 = vadd.xlane.f32.xlu0 %v1606
  %v1608 = vpop.xlane.xlu0 %1607
  %v1609 = vsel %vm885, %v838, 0.0
  %1610 = vadd.xlane.f32.xlu0 %v1609
  %v1611 = vpop.xlane.xlu0 %1610
  %v1612 = vsel %vm885, %v839, 0.0
  %1613 = vadd.xlane.f32.xlu0 %v1612
  %v1614 = vpop.xlane.xlu0 %1613
  %v1615 = vsel %vm885, %v840, 0.0
  %1616 = vadd.xlane.f32.xlu0 %v1615
  %v1617 = vpop.xlane.xlu0 %1616
  %v1618 = vsel %vm885, %v841, 0.0
  %1619 = vadd.xlane.f32.xlu0 %v1618
  %v1620 = vpop.xlane.xlu0 %1619
  %v1621 = vsel %vm885, %v842, 0.0
  %1622 = vadd.xlane.f32.xlu0 %v1621
  %v1623 = vpop.xlane.xlu0 %1622
  %v1624 = vsel %vm885, %v843, 0.0
  %1625 = vadd.xlane.f32.xlu0 %v1624
  %v1626 = vpop.xlane.xlu0 %1625
  %v1627 = vsel %vm885, %v844, 0.0
  %1628 = vadd.xlane.f32.xlu0 %v1627
  %v1629 = vpop.xlane.xlu0 %1628
  %v1630 = vsel %vm885, %v845, 0.0
  %1631 = vadd.xlane.f32.xlu0 %v1630
  %v1632 = vpop.xlane.xlu0 %1631
  %v1633 = vsel %vm885, %v846, 0.0
  %1634 = vadd.xlane.f32.xlu0 %v1633
  %v1635 = vpop.xlane.xlu0 %1634
  %v1636 = vsel %vm885, %v847, 0.0
  %1637 = vadd.xlane.f32.xlu0 %v1636
  %v1638 = vpop.xlane.xlu0 %1637
  %v1639 = vsel %vm885, %v848, 0.0
  %1640 = vadd.xlane.f32.xlu0 %v1639
  %v1641 = vpop.xlane.xlu0 %1640
  %v1642 = vsel %vm885, %v849, 0.0
  %1643 = vadd.xlane.f32.xlu0 %v1642
  %v1644 = vpop.xlane.xlu0 %1643
  %v1645 = vsel %vm885, %v850, 0.0
  %1646 = vadd.xlane.f32.xlu0 %v1645
  %v1647 = vpop.xlane.xlu0 %1646
  %v1648 = vsel %vm885, %v851, 0.0
  %1649 = vadd.xlane.f32.xlu0 %v1648
  %v1650 = vpop.xlane.xlu0 %1649
  %v1651 = vsel %vm885, %v852, 0.0
  %1652 = vadd.xlane.f32.xlu0 %v1651
  %v1653 = vpop.xlane.xlu0 %1652
  %v1654 = vsel %vm885, %v853, 0.0
  %1655 = vadd.xlane.f32.xlu0 %v1654
  %v1656 = vpop.xlane.xlu0 %1655
  %v1657 = vsel %vm885, %v854, 0.0
  %1658 = vadd.xlane.f32.xlu0 %v1657
  %v1659 = vpop.xlane.xlu0 %1658
  %v1660 = vsel %vm885, %v855, 0.0
  %1661 = vadd.xlane.f32.xlu0 %v1660
  %v1662 = vpop.xlane.xlu0 %1661
  %v1663 = vsel %vm885, %v856, 0.0
  %1664 = vadd.xlane.f32.xlu0 %v1663
  %v1665 = vpop.xlane.xlu0 %1664
  %v1666 = vsel %vm885, %v857, 0.0
  %1667 = vadd.xlane.f32.xlu0 %v1666
  %v1668 = vpop.xlane.xlu0 %1667
  %v1669 = vsel %vm885, %v858, 0.0
  %1670 = vadd.xlane.f32.xlu0 %v1669
  %v1671 = vpop.xlane.xlu0 %1670
  %v1672 = vsel %vm885, %v859, 0.0
  %1673 = vadd.xlane.f32.xlu0 %v1672
  %v1674 = vpop.xlane.xlu0 %1673
  %v1675 = vsel %vm885, %v860, 0.0
  %1676 = vadd.xlane.f32.xlu0 %v1675
  %v1677 = vpop.xlane.xlu0 %1676
  %v1678 = vsel %vm885, %v861, 0.0
  %1679 = vadd.xlane.f32.xlu0 %v1678
  %v1680 = vpop.xlane.xlu0 %1679
  %v1681 = vsel %vm885, %v862, 0.0
  %1682 = vadd.xlane.f32.xlu0 %v1681
  %v1683 = vpop.xlane.xlu0 %1682
  %v1684 = vsel %vm885, %v863, 0.0
  %1685 = vadd.xlane.f32.xlu0 %v1684
  %v1686 = vpop.xlane.xlu0 %1685
  %v1687 = vsel %vm885, %v864, 0.0
  %1688 = vadd.xlane.f32.xlu0 %v1687
  %v1689 = vpop.xlane.xlu0 %1688
  %v1690 = vsel %vm885, %v865, 0.0
  %1691 = vadd.xlane.f32.xlu0 %v1690
  %v1692 = vpop.xlane.xlu0 %1691
  %v1693 = vsel %vm885, %v866, 0.0
  %1694 = vadd.xlane.f32.xlu0 %v1693
  %v1695 = vpop.xlane.xlu0 %1694
  %v1696 = vsel %vm885, %v867, 0.0
  %1697 = vadd.xlane.f32.xlu0 %v1696
  %v1698 = vpop.xlane.xlu0 %1697
  %v1699 = vsel %vm885, %v868, 0.0
  %1700 = vadd.xlane.f32.xlu0 %v1699
  %v1701 = vpop.xlane.xlu0 %1700
  %v1702 = vsel %vm885, %v869, 0.0
  %1703 = vadd.xlane.f32.xlu0 %v1702
  %v1704 = vpop.xlane.xlu0 %1703
  %v1705 = vsel %vm885, %v870, 0.0
  %1706 = vadd.xlane.f32.xlu0 %v1705
  %v1707 = vpop.xlane.xlu0 %1706
  %v1708 = vsel %vm885, %v871, 0.0
  %1709 = vadd.xlane.f32.xlu0 %v1708
  %v1710 = vpop.xlane.xlu0 %1709
  %v1711 = vsel %vm885, %v872, 0.0
  %1712 = vadd.xlane.f32.xlu0 %v1711
  %v1713 = vpop.xlane.xlu0 %1712
  %v1714 = vsel %vm885, %v873, 0.0
  %1715 = vadd.xlane.f32.xlu0 %v1714
  %v1716 = vpop.xlane.xlu0 %1715
  %v1717 = vsel %vm885, %v874, 0.0
  %1718 = vadd.xlane.f32.xlu0 %v1717
  %v1719 = vpop.xlane.xlu0 %1718
  %v1720 = vsel %vm885, %v875, 0.0
  %1721 = vadd.xlane.f32.xlu0 %v1720
  %v1722 = vpop.xlane.xlu0 %1721
  %v1723 = vsel %vm885, %v876, 0.0
  %1724 = vadd.xlane.f32.xlu0 %v1723
  %v1725 = vpop.xlane.xlu0 %1724
  %v1726 = vsel %vm885, %v877, 0.0
  %1727 = vadd.xlane.f32.xlu0 %v1726
  %v1728 = vpop.xlane.xlu0 %1727
  %v1729 = vsel %vm885, %v878, 0.0
  %1730 = vadd.xlane.f32.xlu0 %v1729
  %v1731 = vpop.xlane.xlu0 %1730
  %v1732 = vsel %vm885, %v879, 0.0
  %1733 = vadd.xlane.f32.xlu0 %v1732
  %v1734 = vpop.xlane.xlu0 %1733
  %v1735 = vsel %vm885, %v880, 0.0
  %1736 = vadd.xlane.f32.xlu0 %v1735
  %v1737 = vpop.xlane.xlu0 %1736
  %v1738 = vsel %vm885, %v881, 0.0
  %1739 = vadd.xlane.f32.xlu0 %v1738
  %v1740 = vpop.xlane.xlu0 %1739
  %v1741 = vsel %vm885, %v882, 0.0
  %1742 = vadd.xlane.f32.xlu0 %v1741
  %v1743 = vpop.xlane.xlu0 %1742
  %v1744 = vsel %vm885, %v883, 0.0
  %1745 = vadd.xlane.f32.xlu0 %v1744
  %v1746 = vpop.xlane.xlu0 %1745
  %v1747 = vsel %vm885, %v884, 0.0
  %1748 = vadd.xlane.f32.xlu0 %v1747
  %v1749 = vpop.xlane.xlu0 %1748
  %v1750 = vxor.u32 %v888, 2147483648
  %v1751 = vxor.u32 %v891, 2147483648
  %v1752 = vxor.u32 %v894, 2147483648
  %v1753 = vxor.u32 %v897, 2147483648
  %v1754 = vxor.u32 %v900, 2147483648
  %v1755 = vxor.u32 %v903, 2147483648
  %v1756 = vxor.u32 %v906, 2147483648
  %v1757 = vxor.u32 %v909, 2147483648
  %v1758 = vxor.u32 %v912, 2147483648
  %v1759 = vxor.u32 %v915, 2147483648
  %v1760 = vxor.u32 %v918, 2147483648
  %v1761 = vxor.u32 %v921, 2147483648
  %v1762 = vxor.u32 %v924, 2147483648
  %v1763 = vxor.u32 %v927, 2147483648
  %v1764 = vxor.u32 %v930, 2147483648
  %v1765 = vxor.u32 %v933, 2147483648
  %v1766 = vxor.u32 %v936, 2147483648
  %v1767 = vxor.u32 %v939, 2147483648
  %v1768 = vxor.u32 %v942, 2147483648
  %v1769 = vxor.u32 %v945, 2147483648
  %v1770 = vxor.u32 %v948, 2147483648
  %v1771 = vxor.u32 %v951, 2147483648
  %v1772 = vxor.u32 %v954, 2147483648
  %v1773 = vxor.u32 %v957, 2147483648
  %v1774 = vxor.u32 %v960, 2147483648
  %v1775 = vxor.u32 %v963, 2147483648
  %v1776 = vxor.u32 %v966, 2147483648
  %v1777 = vxor.u32 %v969, 2147483648
  %v1778 = vxor.u32 %v972, 2147483648
  %v1779 = vxor.u32 %v975, 2147483648
  %v1780 = vxor.u32 %v978, 2147483648
  %v1781 = vxor.u32 %v981, 2147483648
  %v1782 = vxor.u32 %v984, 2147483648
  %v1783 = vxor.u32 %v987, 2147483648
  %v1784 = vxor.u32 %v990, 2147483648
  %v1785 = vxor.u32 %v993, 2147483648
  %v1786 = vxor.u32 %v996, 2147483648
  %v1787 = vxor.u32 %v999, 2147483648
  %v1788 = vxor.u32 %v1002, 2147483648
  %v1789 = vxor.u32 %v1005, 2147483648
  %v1790 = vxor.u32 %v1008, 2147483648
  %v1791 = vxor.u32 %v1011, 2147483648
  %v1792 = vxor.u32 %v1014, 2147483648
  %v1793 = vxor.u32 %v1017, 2147483648
  %v1794 = vxor.u32 %v1020, 2147483648
  %v1795 = vxor.u32 %v1023, 2147483648
  %v1796 = vxor.u32 %v1026, 2147483648
  %v1797 = vxor.u32 %v1029, 2147483648
  %v1798 = vxor.u32 %v1032, 2147483648
  %v1799 = vxor.u32 %v1035, 2147483648
  %v1800 = vxor.u32 %v1038, 2147483648
  %v1801 = vxor.u32 %v1041, 2147483648
  %v1802 = vxor.u32 %v1044, 2147483648
  %v1803 = vxor.u32 %v1047, 2147483648
  %v1804 = vxor.u32 %v1050, 2147483648
  %v1805 = vxor.u32 %v1053, 2147483648
  %v1806 = vxor.u32 %v1056, 2147483648
  %v1807 = vxor.u32 %v1059, 2147483648
  %v1808 = vxor.u32 %v1062, 2147483648
  %v1809 = vxor.u32 %v1065, 2147483648
  %v1810 = vxor.u32 %v1068, 2147483648
  %v1811 = vxor.u32 %v1071, 2147483648
  %v1812 = vxor.u32 %v1074, 2147483648
  %v1813 = vxor.u32 %v1077, 2147483648
  %v1814 = vxor.u32 %v1080, 2147483648
  %v1815 = vxor.u32 %v1083, 2147483648
  %v1816 = vxor.u32 %v1086, 2147483648
  %v1817 = vxor.u32 %v1089, 2147483648
  %v1818 = vxor.u32 %v1092, 2147483648
  %v1819 = vxor.u32 %v1095, 2147483648
  %v1820 = vxor.u32 %v1098, 2147483648
  %v1821 = vxor.u32 %v1101, 2147483648
  %v1822 = vxor.u32 %v1104, 2147483648
  %v1823 = vxor.u32 %v1107, 2147483648
  %v1824 = vxor.u32 %v1110, 2147483648
  %v1825 = vxor.u32 %v1113, 2147483648
  %v1826 = vxor.u32 %v1116, 2147483648
  %v1827 = vxor.u32 %v1119, 2147483648
  %v1828 = vxor.u32 %v1122, 2147483648
  %v1829 = vxor.u32 %v1125, 2147483648
  %v1830 = vxor.u32 %v1128, 2147483648
  %v1831 = vxor.u32 %v1131, 2147483648
  %v1832 = vxor.u32 %v1134, 2147483648
  %v1833 = vxor.u32 %v1137, 2147483648
  %v1834 = vxor.u32 %v1140, 2147483648
  %v1835 = vxor.u32 %v1143, 2147483648
  %v1836 = vxor.u32 %v1146, 2147483648
  %v1837 = vxor.u32 %v1149, 2147483648
  %v1838 = vxor.u32 %v1152, 2147483648
  %v1839 = vxor.u32 %v1155, 2147483648
  %v1840 = vxor.u32 %v1158, 2147483648
  %v1841 = vxor.u32 %v1161, 2147483648
  %v1842 = vxor.u32 %v1164, 2147483648
  %v1843 = vxor.u32 %v1167, 2147483648
  %v1844 = vxor.u32 %v1170, 2147483648
  %v1845 = vxor.u32 %v1173, 2147483648
  %v1846 = vxor.u32 %v1176, 2147483648
  %v1847 = vxor.u32 %v1179, 2147483648
  %v1848 = vxor.u32 %v1182, 2147483648
  %v1849 = vxor.u32 %v1185, 2147483648
  %v1850 = vxor.u32 %v1188, 2147483648
  %v1851 = vxor.u32 %v1191, 2147483648
  %v1852 = vxor.u32 %v1194, 2147483648
  %v1853 = vxor.u32 %v1197, 2147483648
  %v1854 = vxor.u32 %v1200, 2147483648
  %v1855 = vxor.u32 %v1203, 2147483648
  %v1856 = vxor.u32 %v1206, 2147483648
  %v1857 = vxor.u32 %v1209, 2147483648
  %v1858 = vxor.u32 %v1212, 2147483648
  %v1859 = vxor.u32 %v1215, 2147483648
  %v1860 = vxor.u32 %v1218, 2147483648
  %v1861 = vxor.u32 %v1221, 2147483648
  %v1862 = vxor.u32 %v1224, 2147483648
  %v1863 = vxor.u32 %v1227, 2147483648
  %v1864 = vxor.u32 %v1230, 2147483648
  %v1865 = vxor.u32 %v1233, 2147483648
  %v1866 = vxor.u32 %v1236, 2147483648
  %v1867 = vxor.u32 %v1239, 2147483648
  %v1868 = vxor.u32 %v1242, 2147483648
  %v1869 = vxor.u32 %v1245, 2147483648
  %v1870 = vxor.u32 %v1248, 2147483648
  %v1871 = vxor.u32 %v1251, 2147483648
  %v1872 = vxor.u32 %v1254, 2147483648
  %v1873 = vxor.u32 %v1257, 2147483648
  %v1874 = vxor.u32 %v1260, 2147483648
  %v1875 = vxor.u32 %v1263, 2147483648
  %v1876 = vxor.u32 %v1266, 2147483648
  %v1877 = vxor.u32 %v1269, 2147483648
  %v1878 = vxor.u32 %v1272, 2147483648
  %v1879 = vxor.u32 %v1275, 2147483648
  %v1880 = vxor.u32 %v1278, 2147483648
  %v1881 = vxor.u32 %v1281, 2147483648
  %v1882 = vxor.u32 %v1284, 2147483648
  %v1883 = vxor.u32 %v1287, 2147483648
  %v1884 = vxor.u32 %v1290, 2147483648
  %v1885 = vxor.u32 %v1293, 2147483648
  %v1886 = vxor.u32 %v1296, 2147483648
  %v1887 = vxor.u32 %v1299, 2147483648
  %v1888 = vxor.u32 %v1302, 2147483648
  %v1889 = vxor.u32 %v1305, 2147483648
  %v1890 = vxor.u32 %v1308, 2147483648
  %v1891 = vxor.u32 %v1311, 2147483648
  %v1892 = vxor.u32 %v1314, 2147483648
  %v1893 = vxor.u32 %v1317, 2147483648
  %v1894 = vxor.u32 %v1320, 2147483648
  %v1895 = vxor.u32 %v1323, 2147483648
  %v1896 = vxor.u32 %v1326, 2147483648
  %v1897 = vxor.u32 %v1329, 2147483648
  %v1898 = vxor.u32 %v1332, 2147483648
  %v1899 = vxor.u32 %v1335, 2147483648
  %v1900 = vxor.u32 %v1338, 2147483648
  %v1901 = vxor.u32 %v1341, 2147483648
  %v1902 = vxor.u32 %v1344, 2147483648
  %v1903 = vxor.u32 %v1347, 2147483648
  %v1904 = vxor.u32 %v1350, 2147483648
  %v1905 = vxor.u32 %v1353, 2147483648
  %v1906 = vxor.u32 %v1356, 2147483648
  %v1907 = vxor.u32 %v1359, 2147483648
  %v1908 = vxor.u32 %v1362, 2147483648
  %v1909 = vxor.u32 %v1365, 2147483648
  %v1910 = vxor.u32 %v1368, 2147483648
  %v1911 = vxor.u32 %v1371, 2147483648
  %v1912 = vxor.u32 %v1374, 2147483648
  %v1913 = vxor.u32 %v1377, 2147483648
  %v1914 = vxor.u32 %v1380, 2147483648
  %v1915 = vxor.u32 %v1383, 2147483648
  %v1916 = vxor.u32 %v1386, 2147483648
  %v1917 = vxor.u32 %v1389, 2147483648
  %v1918 = vxor.u32 %v1392, 2147483648
  %v1919 = vxor.u32 %v1395, 2147483648
  %v1920 = vxor.u32 %v1398, 2147483648
  %v1921 = vxor.u32 %v1401, 2147483648
  %v1922 = vxor.u32 %v1404, 2147483648
  %v1923 = vxor.u32 %v1407, 2147483648
  %v1924 = vxor.u32 %v1410, 2147483648
  %v1925 = vxor.u32 %v1413, 2147483648
  %v1926 = vxor.u32 %v1416, 2147483648
  %v1927 = vxor.u32 %v1419, 2147483648
  %v1928 = vxor.u32 %v1422, 2147483648
  %v1929 = vxor.u32 %v1425, 2147483648
  %v1930 = vxor.u32 %v1428, 2147483648
  %v1931 = vxor.u32 %v1431, 2147483648
  %v1932 = vxor.u32 %v1434, 2147483648
  %v1933 = vxor.u32 %v1437, 2147483648
  %v1934 = vxor.u32 %v1440, 2147483648
  %v1935 = vxor.u32 %v1443, 2147483648
  %v1936 = vxor.u32 %v1446, 2147483648
  %v1937 = vxor.u32 %v1449, 2147483648
  %v1938 = vxor.u32 %v1452, 2147483648
  %v1939 = vxor.u32 %v1455, 2147483648
  %v1940 = vxor.u32 %v1458, 2147483648
  %v1941 = vxor.u32 %v1461, 2147483648
  %v1942 = vxor.u32 %v1464, 2147483648
  %v1943 = vxor.u32 %v1467, 2147483648
  %v1944 = vxor.u32 %v1470, 2147483648
  %v1945 = vxor.u32 %v1473, 2147483648
  %v1946 = vxor.u32 %v1476, 2147483648
  %v1947 = vxor.u32 %v1479, 2147483648
  %v1948 = vxor.u32 %v1482, 2147483648
  %v1949 = vxor.u32 %v1485, 2147483648
  %v1950 = vxor.u32 %v1488, 2147483648
  %v1951 = vxor.u32 %v1491, 2147483648
  %v1952 = vxor.u32 %v1494, 2147483648
  %v1953 = vxor.u32 %v1497, 2147483648
  %v1954 = vxor.u32 %v1500, 2147483648
  %v1955 = vxor.u32 %v1503, 2147483648
  %v1956 = vxor.u32 %v1506, 2147483648
  %v1957 = vxor.u32 %v1509, 2147483648
  %v1958 = vxor.u32 %v1512, 2147483648
  %v1959 = vxor.u32 %v1515, 2147483648
  %v1960 = vxor.u32 %v1518, 2147483648
  %v1961 = vxor.u32 %v1521, 2147483648
  %v1962 = vxor.u32 %v1524, 2147483648
  %v1963 = vxor.u32 %v1527, 2147483648
  %v1964 = vxor.u32 %v1530, 2147483648
  %v1965 = vxor.u32 %v1533, 2147483648
  %v1966 = vxor.u32 %v1536, 2147483648
  %v1967 = vxor.u32 %v1539, 2147483648
  %v1968 = vxor.u32 %v1542, 2147483648
  %v1969 = vxor.u32 %v1545, 2147483648
  %v1970 = vxor.u32 %v1548, 2147483648
  %v1971 = vxor.u32 %v1551, 2147483648
  %v1972 = vxor.u32 %v1554, 2147483648
  %v1973 = vxor.u32 %v1557, 2147483648
  %v1974 = vxor.u32 %v1560, 2147483648
  %v1975 = vxor.u32 %v1563, 2147483648
  %v1976 = vxor.u32 %v1566, 2147483648
  %v1977 = vxor.u32 %v1569, 2147483648
  %v1978 = vxor.u32 %v1572, 2147483648
  %v1979 = vxor.u32 %v1575, 2147483648
  %v1980 = vxor.u32 %v1578, 2147483648
  %v1981 = vxor.u32 %v1581, 2147483648
  %v1982 = vxor.u32 %v1584, 2147483648
  %v1983 = vxor.u32 %v1587, 2147483648
  %v1984 = vxor.u32 %v1590, 2147483648
  %v1985 = vxor.u32 %v1593, 2147483648
  %v1986 = vxor.u32 %v1596, 2147483648
  %v1987 = vxor.u32 %v1599, 2147483648
  %v1988 = vxor.u32 %v1602, 2147483648
  %v1989 = vxor.u32 %v1605, 2147483648
  %v1990 = vxor.u32 %v1608, 2147483648
  %v1991 = vxor.u32 %v1611, 2147483648
  %v1992 = vxor.u32 %v1614, 2147483648
  %v1993 = vxor.u32 %v1617, 2147483648
  %v1994 = vxor.u32 %v1620, 2147483648
  %v1995 = vxor.u32 %v1623, 2147483648
  %v1996 = vxor.u32 %v1626, 2147483648
  %v1997 = vxor.u32 %v1629, 2147483648
  %v1998 = vxor.u32 %v1632, 2147483648
  %v1999 = vxor.u32 %v1635, 2147483648
  %v2000 = vxor.u32 %v1638, 2147483648
  %v2001 = vxor.u32 %v1641, 2147483648
  %v2002 = vxor.u32 %v1644, 2147483648
  %v2003 = vxor.u32 %v1647, 2147483648
  %v2004 = vxor.u32 %v1650, 2147483648
  %v2005 = vxor.u32 %v1653, 2147483648
  %v2006 = vxor.u32 %v1656, 2147483648
  %v2007 = vxor.u32 %v1659, 2147483648
  %v2008 = vxor.u32 %v1662, 2147483648
  %v2009 = vxor.u32 %v1665, 2147483648
  %v2010 = vxor.u32 %v1668, 2147483648
  %v2011 = vxor.u32 %v1671, 2147483648
  %v2012 = vxor.u32 %v1674, 2147483648
  %v2013 = vxor.u32 %v1677, 2147483648
  %v2014 = vxor.u32 %v1680, 2147483648
  %v2015 = vxor.u32 %v1683, 2147483648
  %v2016 = vxor.u32 %v1686, 2147483648
  %v2017 = vxor.u32 %v1689, 2147483648
  %v2018 = vxor.u32 %v1692, 2147483648
  %v2019 = vxor.u32 %v1695, 2147483648
  %v2020 = vxor.u32 %v1698, 2147483648
  %v2021 = vxor.u32 %v1701, 2147483648
  %v2022 = vxor.u32 %v1704, 2147483648
  %v2023 = vxor.u32 %v1707, 2147483648
  %v2024 = vxor.u32 %v1710, 2147483648
  %v2025 = vxor.u32 %v1713, 2147483648
  %v2026 = vxor.u32 %v1716, 2147483648
  %v2027 = vxor.u32 %v1719, 2147483648
  %v2028 = vxor.u32 %v1722, 2147483648
  %v2029 = vxor.u32 %v1725, 2147483648
  %v2030 = vxor.u32 %v1728, 2147483648
  %v2031 = vxor.u32 %v1731, 2147483648
  %v2032 = vxor.u32 %v1734, 2147483648
  %v2033 = vxor.u32 %v1737, 2147483648
  %v2034 = vxor.u32 %v1740, 2147483648
  %v2035 = vxor.u32 %v1743, 2147483648
  %v2036 = vxor.u32 %v1746, 2147483648
  %v2037 = vxor.u32 %v1749, 2147483648
  %v2038 = vmul.f32 %v1750, 1.442695
  %v2039 = vpow.pop %v2038
  %v2040 = vmul.f32 %v1751, 1.442695
  %v2041 = vpow.pop %v2040
  %v2042 = vmul.f32 %v1752, 1.442695
  %v2043 = vpow.pop %v2042
  %v2044 = vmul.f32 %v1753, 1.442695
  %v2045 = vpow.pop %v2044
  %v2046 = vmul.f32 %v1754, 1.442695
  %v2047 = vpow.pop %v2046
  %v2048 = vmul.f32 %v1755, 1.442695
  %v2049 = vpow.pop %v2048
  %v2050 = vmul.f32 %v1756, 1.442695
  %v2051 = vpow.pop %v2050
  %v2052 = vmul.f32 %v1757, 1.442695
  %v2053 = vpow.pop %v2052
  %v2054 = vmul.f32 %v1758, 1.442695
  %v2055 = vpow.pop %v2054
  %v2056 = vmul.f32 %v1759, 1.442695
  %v2057 = vpow.pop %v2056
  %v2058 = vmul.f32 %v1760, 1.442695
  %v2059 = vpow.pop %v2058
  %v2060 = vmul.f32 %v1761, 1.442695
  %v2061 = vpow.pop %v2060
  %v2062 = vmul.f32 %v1762, 1.442695
  %v2063 = vpow.pop %v2062
  %v2064 = vmul.f32 %v1763, 1.442695
  %v2065 = vpow.pop %v2064
  %v2066 = vmul.f32 %v1764, 1.442695
  %v2067 = vpow.pop %v2066
  %v2068 = vmul.f32 %v1765, 1.442695
  %v2069 = vpow.pop %v2068
  %v2070 = vmul.f32 %v1766, 1.442695
  %v2071 = vpow.pop %v2070
  %v2072 = vmul.f32 %v1767, 1.442695
  %v2073 = vpow.pop %v2072
  %v2074 = vmul.f32 %v1768, 1.442695
  %v2075 = vpow.pop %v2074
  %v2076 = vmul.f32 %v1769, 1.442695
  %v2077 = vpow.pop %v2076
  %v2078 = vmul.f32 %v1770, 1.442695
  %v2079 = vpow.pop %v2078
  %v2080 = vmul.f32 %v1771, 1.442695
  %v2081 = vpow.pop %v2080
  %v2082 = vmul.f32 %v1772, 1.442695
  %v2083 = vpow.pop %v2082
  %v2084 = vmul.f32 %v1773, 1.442695
  %v2085 = vpow.pop %v2084
  %v2086 = vmul.f32 %v1774, 1.442695
  %v2087 = vpow.pop %v2086
  %v2088 = vmul.f32 %v1775, 1.442695
  %v2089 = vpow.pop %v2088
  %v2090 = vmul.f32 %v1776, 1.442695
  %v2091 = vpow.pop %v2090
  %v2092 = vmul.f32 %v1777, 1.442695
  %v2093 = vpow.pop %v2092
  %v2094 = vmul.f32 %v1778, 1.442695
  %v2095 = vpow.pop %v2094
  %v2096 = vmul.f32 %v1779, 1.442695
  %v2097 = vpow.pop %v2096
  %v2098 = vmul.f32 %v1780, 1.442695
  %v2099 = vpow.pop %v2098
  %v2100 = vmul.f32 %v1781, 1.442695
  %v2101 = vpow.pop %v2100
  %v2102 = vmul.f32 %v1782, 1.442695
  %v2103 = vpow.pop %v2102
  %v2104 = vmul.f32 %v1783, 1.442695
  %v2105 = vpow.pop %v2104
  %v2106 = vmul.f32 %v1784, 1.442695
  %v2107 = vpow.pop %v2106
  %v2108 = vmul.f32 %v1785, 1.442695
  %v2109 = vpow.pop %v2108
  %v2110 = vmul.f32 %v1786, 1.442695
  %v2111 = vpow.pop %v2110
  %v2112 = vmul.f32 %v1787, 1.442695
  %v2113 = vpow.pop %v2112
  %v2114 = vmul.f32 %v1788, 1.442695
  %v2115 = vpow.pop %v2114
  %v2116 = vmul.f32 %v1789, 1.442695
  %v2117 = vpow.pop %v2116
  %v2118 = vmul.f32 %v1790, 1.442695
  %v2119 = vpow.pop %v2118
  %v2120 = vmul.f32 %v1791, 1.442695
  %v2121 = vpow.pop %v2120
  %v2122 = vmul.f32 %v1792, 1.442695
  %v2123 = vpow.pop %v2122
  %v2124 = vmul.f32 %v1793, 1.442695
  %v2125 = vpow.pop %v2124
  %v2126 = vmul.f32 %v1794, 1.442695
  %v2127 = vpow.pop %v2126
  %v2128 = vmul.f32 %v1795, 1.442695
  %v2129 = vpow.pop %v2128
  %v2130 = vmul.f32 %v1796, 1.442695
  %v2131 = vpow.pop %v2130
  %v2132 = vmul.f32 %v1797, 1.442695
  %v2133 = vpow.pop %v2132
  %v2134 = vmul.f32 %v1798, 1.442695
  %v2135 = vpow.pop %v2134
  %v2136 = vmul.f32 %v1799, 1.442695
  %v2137 = vpow.pop %v2136
  %v2138 = vmul.f32 %v1800, 1.442695
  %v2139 = vpow.pop %v2138
  %v2140 = vmul.f32 %v1801, 1.442695
  %v2141 = vpow.pop %v2140
  %v2142 = vmul.f32 %v1802, 1.442695
  %v2143 = vpow.pop %v2142
  %v2144 = vmul.f32 %v1803, 1.442695
  %v2145 = vpow.pop %v2144
  %v2146 = vmul.f32 %v1804, 1.442695
  %v2147 = vpow.pop %v2146
  %v2148 = vmul.f32 %v1805, 1.442695
  %v2149 = vpow.pop %v2148
  %v2150 = vmul.f32 %v1806, 1.442695
  %v2151 = vpow.pop %v2150
  %v2152 = vmul.f32 %v1807, 1.442695
  %v2153 = vpow.pop %v2152
  %v2154 = vmul.f32 %v1808, 1.442695
  %v2155 = vpow.pop %v2154
  %v2156 = vmul.f32 %v1809, 1.442695
  %v2157 = vpow.pop %v2156
  %v2158 = vmul.f32 %v1810, 1.442695
  %v2159 = vpow.pop %v2158
  %v2160 = vmul.f32 %v1811, 1.442695
  %v2161 = vpow.pop %v2160
  %v2162 = vmul.f32 %v1812, 1.442695
  %v2163 = vpow.pop %v2162
  %v2164 = vmul.f32 %v1813, 1.442695
  %v2165 = vpow.pop %v2164
  %v2166 = vmul.f32 %v1814, 1.442695
  %v2167 = vpow.pop %v2166
  %v2168 = vmul.f32 %v1815, 1.442695
  %v2169 = vpow.pop %v2168
  %v2170 = vmul.f32 %v1816, 1.442695
  %v2171 = vpow.pop %v2170
  %v2172 = vmul.f32 %v1817, 1.442695
  %v2173 = vpow.pop %v2172
  %v2174 = vmul.f32 %v1818, 1.442695
  %v2175 = vpow.pop %v2174
  %v2176 = vmul.f32 %v1819, 1.442695
  %v2177 = vpow.pop %v2176
  %v2178 = vmul.f32 %v1820, 1.442695
  %v2179 = vpow.pop %v2178
  %v2180 = vmul.f32 %v1821, 1.442695
  %v2181 = vpow.pop %v2180
  %v2182 = vmul.f32 %v1822, 1.442695
  %v2183 = vpow.pop %v2182
  %v2184 = vmul.f32 %v1823, 1.442695
  %v2185 = vpow.pop %v2184
  %v2186 = vmul.f32 %v1824, 1.442695
  %v2187 = vpow.pop %v2186
  %v2188 = vmul.f32 %v1825, 1.442695
  %v2189 = vpow.pop %v2188
  %v2190 = vmul.f32 %v1826, 1.442695
  %v2191 = vpow.pop %v2190
  %v2192 = vmul.f32 %v1827, 1.442695
  %v2193 = vpow.pop %v2192
  %v2194 = vmul.f32 %v1828, 1.442695
  %v2195 = vpow.pop %v2194
  %v2196 = vmul.f32 %v1829, 1.442695
  %v2197 = vpow.pop %v2196
  %v2198 = vmul.f32 %v1830, 1.442695
  %v2199 = vpow.pop %v2198
  %v2200 = vmul.f32 %v1831, 1.442695
  %v2201 = vpow.pop %v2200
  %v2202 = vmul.f32 %v1832, 1.442695
  %v2203 = vpow.pop %v2202
  %v2204 = vmul.f32 %v1833, 1.442695
  %v2205 = vpow.pop %v2204
  %v2206 = vmul.f32 %v1834, 1.442695
  %v2207 = vpow.pop %v2206
  %v2208 = vmul.f32 %v1835, 1.442695
  %v2209 = vpow.pop %v2208
  %v2210 = vmul.f32 %v1836, 1.442695
  %v2211 = vpow.pop %v2210
  %v2212 = vmul.f32 %v1837, 1.442695
  %v2213 = vpow.pop %v2212
  %v2214 = vmul.f32 %v1838, 1.442695
  %v2215 = vpow.pop %v2214
  %v2216 = vmul.f32 %v1839, 1.442695
  %v2217 = vpow.pop %v2216
  %v2218 = vmul.f32 %v1840, 1.442695
  %v2219 = vpow.pop %v2218
  %v2220 = vmul.f32 %v1841, 1.442695
  %v2221 = vpow.pop %v2220
  %v2222 = vmul.f32 %v1842, 1.442695
  %v2223 = vpow.pop %v2222
  %v2224 = vmul.f32 %v1843, 1.442695
  %v2225 = vpow.pop %v2224
  %v2226 = vmul.f32 %v1844, 1.442695
  %v2227 = vpow.pop %v2226
  %v2228 = vmul.f32 %v1845, 1.442695
  %v2229 = vpow.pop %v2228
  %v2230 = vmul.f32 %v1846, 1.442695
  %v2231 = vpow.pop %v2230
  %v2232 = vmul.f32 %v1847, 1.442695
  %v2233 = vpow.pop %v2232
  %v2234 = vmul.f32 %v1848, 1.442695
  %v2235 = vpow.pop %v2234
  %v2236 = vmul.f32 %v1849, 1.442695
  %v2237 = vpow.pop %v2236
  %v2238 = vmul.f32 %v1850, 1.442695
  %v2239 = vpow.pop %v2238
  %v2240 = vmul.f32 %v1851, 1.442695
  %v2241 = vpow.pop %v2240
  %v2242 = vmul.f32 %v1852, 1.442695
  %v2243 = vpow.pop %v2242
  %v2244 = vmul.f32 %v1853, 1.442695
  %v2245 = vpow.pop %v2244
  %v2246 = vmul.f32 %v1854, 1.442695
  %v2247 = vpow.pop %v2246
  %v2248 = vmul.f32 %v1855, 1.442695
  %v2249 = vpow.pop %v2248
  %v2250 = vmul.f32 %v1856, 1.442695
  %v2251 = vpow.pop %v2250
  %v2252 = vmul.f32 %v1857, 1.442695
  %v2253 = vpow.pop %v2252
  %v2254 = vmul.f32 %v1858, 1.442695
  %v2255 = vpow.pop %v2254
  %v2256 = vmul.f32 %v1859, 1.442695
  %v2257 = vpow.pop %v2256
  %v2258 = vmul.f32 %v1860, 1.442695
  %v2259 = vpow.pop %v2258
  %v2260 = vmul.f32 %v1861, 1.442695
  %v2261 = vpow.pop %v2260
  %v2262 = vmul.f32 %v1862, 1.442695
  %v2263 = vpow.pop %v2262
  %v2264 = vmul.f32 %v1863, 1.442695
  %v2265 = vpow.pop %v2264
  %v2266 = vmul.f32 %v1864, 1.442695
  %v2267 = vpow.pop %v2266
  %v2268 = vmul.f32 %v1865, 1.442695
  %v2269 = vpow.pop %v2268
  %v2270 = vmul.f32 %v1866, 1.442695
  %v2271 = vpow.pop %v2270
  %v2272 = vmul.f32 %v1867, 1.442695
  %v2273 = vpow.pop %v2272
  %v2274 = vmul.f32 %v1868, 1.442695
  %v2275 = vpow.pop %v2274
  %v2276 = vmul.f32 %v1869, 1.442695
  %v2277 = vpow.pop %v2276
  %v2278 = vmul.f32 %v1870, 1.442695
  %v2279 = vpow.pop %v2278
  %v2280 = vmul.f32 %v1871, 1.442695
  %v2281 = vpow.pop %v2280
  %v2282 = vmul.f32 %v1872, 1.442695
  %v2283 = vpow.pop %v2282
  %v2284 = vmul.f32 %v1873, 1.442695
  %v2285 = vpow.pop %v2284
  %v2286 = vmul.f32 %v1874, 1.442695
  %v2287 = vpow.pop %v2286
  %v2288 = vmul.f32 %v1875, 1.442695
  %v2289 = vpow.pop %v2288
  %v2290 = vmul.f32 %v1876, 1.442695
  %v2291 = vpow.pop %v2290
  %v2292 = vmul.f32 %v1877, 1.442695
  %v2293 = vpow.pop %v2292
  %v2294 = vmul.f32 %v1878, 1.442695
  %v2295 = vpow.pop %v2294
  %v2296 = vmul.f32 %v1879, 1.442695
  %v2297 = vpow.pop %v2296
  %v2298 = vmul.f32 %v1880, 1.442695
  %v2299 = vpow.pop %v2298
  %v2300 = vmul.f32 %v1881, 1.442695
  %v2301 = vpow.pop %v2300
  %v2302 = vmul.f32 %v1882, 1.442695
  %v2303 = vpow.pop %v2302
  %v2304 = vmul.f32 %v1883, 1.442695
  %v2305 = vpow.pop %v2304
  %v2306 = vmul.f32 %v1884, 1.442695
  %v2307 = vpow.pop %v2306
  %v2308 = vmul.f32 %v1885, 1.442695
  %v2309 = vpow.pop %v2308
  %v2310 = vmul.f32 %v1886, 1.442695
  %v2311 = vpow.pop %v2310
  %v2312 = vmul.f32 %v1887, 1.442695
  %v2313 = vpow.pop %v2312
  %v2314 = vmul.f32 %v1888, 1.442695
  %v2315 = vpow.pop %v2314
  %v2316 = vmul.f32 %v1889, 1.442695
  %v2317 = vpow.pop %v2316
  %v2318 = vmul.f32 %v1890, 1.442695
  %v2319 = vpow.pop %v2318
  %v2320 = vmul.f32 %v1891, 1.442695
  %v2321 = vpow.pop %v2320
  %v2322 = vmul.f32 %v1892, 1.442695
  %v2323 = vpow.pop %v2322
  %v2324 = vmul.f32 %v1893, 1.442695
  %v2325 = vpow.pop %v2324
  %v2326 = vmul.f32 %v1894, 1.442695
  %v2327 = vpow.pop %v2326
  %v2328 = vmul.f32 %v1895, 1.442695
  %v2329 = vpow.pop %v2328
  %v2330 = vmul.f32 %v1896, 1.442695
  %v2331 = vpow.pop %v2330
  %v2332 = vmul.f32 %v1897, 1.442695
  %v2333 = vpow.pop %v2332
  %v2334 = vmul.f32 %v1898, 1.442695
  %v2335 = vpow.pop %v2334
  %v2336 = vmul.f32 %v1899, 1.442695
  %v2337 = vpow.pop %v2336
  %v2338 = vmul.f32 %v1900, 1.442695
  %v2339 = vpow.pop %v2338
  %v2340 = vmul.f32 %v1901, 1.442695
  %v2341 = vpow.pop %v2340
  %v2342 = vmul.f32 %v1902, 1.442695
  %v2343 = vpow.pop %v2342
  %v2344 = vmul.f32 %v1903, 1.442695
  %v2345 = vpow.pop %v2344
  %v2346 = vmul.f32 %v1904, 1.442695
  %v2347 = vpow.pop %v2346
  %v2348 = vmul.f32 %v1905, 1.442695
  %v2349 = vpow.pop %v2348
  %v2350 = vmul.f32 %v1906, 1.442695
  %v2351 = vpow.pop %v2350
  %v2352 = vmul.f32 %v1907, 1.442695
  %v2353 = vpow.pop %v2352
  %v2354 = vmul.f32 %v1908, 1.442695
  %v2355 = vpow.pop %v2354
  %v2356 = vmul.f32 %v1909, 1.442695
  %v2357 = vpow.pop %v2356
  %v2358 = vmul.f32 %v1910, 1.442695
  %v2359 = vpow.pop %v2358
  %v2360 = vmul.f32 %v1911, 1.442695
  %v2361 = vpow.pop %v2360
  %v2362 = vmul.f32 %v1912, 1.442695
  %v2363 = vpow.pop %v2362
  %v2364 = vmul.f32 %v1913, 1.442695
  %v2365 = vpow.pop %v2364
  %v2366 = vmul.f32 %v1914, 1.442695
  %v2367 = vpow.pop %v2366
  %v2368 = vmul.f32 %v1915, 1.442695
  %v2369 = vpow.pop %v2368
  %v2370 = vmul.f32 %v1916, 1.442695
  %v2371 = vpow.pop %v2370
  %v2372 = vmul.f32 %v1917, 1.442695
  %v2373 = vpow.pop %v2372
  %v2374 = vmul.f32 %v1918, 1.442695
  %v2375 = vpow.pop %v2374
  %v2376 = vmul.f32 %v1919, 1.442695
  %v2377 = vpow.pop %v2376
  %v2378 = vmul.f32 %v1920, 1.442695
  %v2379 = vpow.pop %v2378
  %v2380 = vmul.f32 %v1921, 1.442695
  %v2381 = vpow.pop %v2380
  %v2382 = vmul.f32 %v1922, 1.442695
  %v2383 = vpow.pop %v2382
  %v2384 = vmul.f32 %v1923, 1.442695
  %v2385 = vpow.pop %v2384
  %v2386 = vmul.f32 %v1924, 1.442695
  %v2387 = vpow.pop %v2386
  %v2388 = vmul.f32 %v1925, 1.442695
  %v2389 = vpow.pop %v2388
  %v2390 = vmul.f32 %v1926, 1.442695
  %v2391 = vpow.pop %v2390
  %v2392 = vmul.f32 %v1927, 1.442695
  %v2393 = vpow.pop %v2392
  %v2394 = vmul.f32 %v1928, 1.442695
  %v2395 = vpow.pop %v2394
  %v2396 = vmul.f32 %v1929, 1.442695
  %v2397 = vpow.pop %v2396
  %v2398 = vmul.f32 %v1930, 1.442695
  %v2399 = vpow.pop %v2398
  %v2400 = vmul.f32 %v1931, 1.442695
  %v2401 = vpow.pop %v2400
  %v2402 = vmul.f32 %v1932, 1.442695
  %v2403 = vpow.pop %v2402
  %v2404 = vmul.f32 %v1933, 1.442695
  %v2405 = vpow.pop %v2404
  %v2406 = vmul.f32 %v1934, 1.442695
  %v2407 = vpow.pop %v2406
  %v2408 = vmul.f32 %v1935, 1.442695
  %v2409 = vpow.pop %v2408
  %v2410 = vmul.f32 %v1936, 1.442695
  %v2411 = vpow.pop %v2410
  %v2412 = vmul.f32 %v1937, 1.442695
  %v2413 = vpow.pop %v2412
  %v2414 = vmul.f32 %v1938, 1.442695
  %v2415 = vpow.pop %v2414
  %v2416 = vmul.f32 %v1939, 1.442695
  %v2417 = vpow.pop %v2416
  %v2418 = vmul.f32 %v1940, 1.442695
  %v2419 = vpow.pop %v2418
  %v2420 = vmul.f32 %v1941, 1.442695
  %v2421 = vpow.pop %v2420
  %v2422 = vmul.f32 %v1942, 1.442695
  %v2423 = vpow.pop %v2422
  %v2424 = vmul.f32 %v1943, 1.442695
  %v2425 = vpow.pop %v2424
  %v2426 = vmul.f32 %v1944, 1.442695
  %v2427 = vpow.pop %v2426
  %v2428 = vmul.f32 %v1945, 1.442695
  %v2429 = vpow.pop %v2428
  %v2430 = vmul.f32 %v1946, 1.442695
  %v2431 = vpow.pop %v2430
  %v2432 = vmul.f32 %v1947, 1.442695
  %v2433 = vpow.pop %v2432
  %v2434 = vmul.f32 %v1948, 1.442695
  %v2435 = vpow.pop %v2434
  %v2436 = vmul.f32 %v1949, 1.442695
  %v2437 = vpow.pop %v2436
  %v2438 = vmul.f32 %v1950, 1.442695
  %v2439 = vpow.pop %v2438
  %v2440 = vmul.f32 %v1951, 1.442695
  %v2441 = vpow.pop %v2440
  %v2442 = vmul.f32 %v1952, 1.442695
  %v2443 = vpow.pop %v2442
  %v2444 = vmul.f32 %v1953, 1.442695
  %v2445 = vpow.pop %v2444
  %v2446 = vmul.f32 %v1954, 1.442695
  %v2447 = vpow.pop %v2446
  %v2448 = vmul.f32 %v1955, 1.442695
  %v2449 = vpow.pop %v2448
  %v2450 = vmul.f32 %v1956, 1.442695
  %v2451 = vpow.pop %v2450
  %v2452 = vmul.f32 %v1957, 1.442695
  %v2453 = vpow.pop %v2452
  %v2454 = vmul.f32 %v1958, 1.442695
  %v2455 = vpow.pop %v2454
  %v2456 = vmul.f32 %v1959, 1.442695
  %v2457 = vpow.pop %v2456
  %v2458 = vmul.f32 %v1960, 1.442695
  %v2459 = vpow.pop %v2458
  %v2460 = vmul.f32 %v1961, 1.442695
  %v2461 = vpow.pop %v2460
  %v2462 = vmul.f32 %v1962, 1.442695
  %v2463 = vpow.pop %v2462
  %v2464 = vmul.f32 %v1963, 1.442695
  %v2465 = vpow.pop %v2464
  %v2466 = vmul.f32 %v1964, 1.442695
  %v2467 = vpow.pop %v2466
  %v2468 = vmul.f32 %v1965, 1.442695
  %v2469 = vpow.pop %v2468
  %v2470 = vmul.f32 %v1966, 1.442695
  %v2471 = vpow.pop %v2470
  %v2472 = vmul.f32 %v1967, 1.442695
  %v2473 = vpow.pop %v2472
  %v2474 = vmul.f32 %v1968, 1.442695
  %v2475 = vpow.pop %v2474
  %v2476 = vmul.f32 %v1969, 1.442695
  %v2477 = vpow.pop %v2476
  %v2478 = vmul.f32 %v1970, 1.442695
  %v2479 = vpow.pop %v2478
  %v2480 = vmul.f32 %v1971, 1.442695
  %v2481 = vpow.pop %v2480
  %v2482 = vmul.f32 %v1972, 1.442695
  %v2483 = vpow.pop %v2482
  %v2484 = vmul.f32 %v1973, 1.442695
  %v2485 = vpow.pop %v2484
  %v2486 = vmul.f32 %v1974, 1.442695
  %v2487 = vpow.pop %v2486
  %v2488 = vmul.f32 %v1975, 1.442695
  %v2489 = vpow.pop %v2488
  %v2490 = vmul.f32 %v1976, 1.442695
  %v2491 = vpow.pop %v2490
  %v2492 = vmul.f32 %v1977, 1.442695
  %v2493 = vpow.pop %v2492
  %v2494 = vmul.f32 %v1978, 1.442695
  %v2495 = vpow.pop %v2494
  %v2496 = vmul.f32 %v1979, 1.442695
  %v2497 = vpow.pop %v2496
  %v2498 = vmul.f32 %v1980, 1.442695
  %v2499 = vpow.pop %v2498
  %v2500 = vmul.f32 %v1981, 1.442695
  %v2501 = vpow.pop %v2500
  %v2502 = vmul.f32 %v1982, 1.442695
  %v2503 = vpow.pop %v2502
  %v2504 = vmul.f32 %v1983, 1.442695
  %v2505 = vpow.pop %v2504
  %v2506 = vmul.f32 %v1984, 1.442695
  %v2507 = vpow.pop %v2506
  %v2508 = vmul.f32 %v1985, 1.442695
  %v2509 = vpow.pop %v2508
  %v2510 = vmul.f32 %v1986, 1.442695
  %v2511 = vpow.pop %v2510
  %v2512 = vmul.f32 %v1987, 1.442695
  %v2513 = vpow.pop %v2512
  %v2514 = vmul.f32 %v1988, 1.442695
  %v2515 = vpow.pop %v2514
  %v2516 = vmul.f32 %v1989, 1.442695
  %v2517 = vpow.pop %v2516
  %v2518 = vmul.f32 %v1990, 1.442695
  %v2519 = vpow.pop %v2518
  %v2520 = vmul.f32 %v1991, 1.442695
  %v2521 = vpow.pop %v2520
  %v2522 = vmul.f32 %v1992, 1.442695
  %v2523 = vpow.pop %v2522
  %v2524 = vmul.f32 %v1993, 1.442695
  %v2525 = vpow.pop %v2524
  %v2526 = vmul.f32 %v1994, 1.442695
  %v2527 = vpow.pop %v2526
  %v2528 = vmul.f32 %v1995, 1.442695
  %v2529 = vpow.pop %v2528
  %v2530 = vmul.f32 %v1996, 1.442695
  %v2531 = vpow.pop %v2530
  %v2532 = vmul.f32 %v1997, 1.442695
  %v2533 = vpow.pop %v2532
  %v2534 = vmul.f32 %v1998, 1.442695
  %v2535 = vpow.pop %v2534
  %v2536 = vmul.f32 %v1999, 1.442695
  %v2537 = vpow.pop %v2536
  %v2538 = vmul.f32 %v2000, 1.442695
  %v2539 = vpow.pop %v2538
  %v2540 = vmul.f32 %v2001, 1.442695
  %v2541 = vpow.pop %v2540
  %v2542 = vmul.f32 %v2002, 1.442695
  %v2543 = vpow.pop %v2542
  %v2544 = vmul.f32 %v2003, 1.442695
  %v2545 = vpow.pop %v2544
  %v2546 = vmul.f32 %v2004, 1.442695
  %v2547 = vpow.pop %v2546
  %v2548 = vmul.f32 %v2005, 1.442695
  %v2549 = vpow.pop %v2548
  %v2550 = vmul.f32 %v2006, 1.442695
  %v2551 = vpow.pop %v2550
  %v2552 = vmul.f32 %v2007, 1.442695
  %v2553 = vpow.pop %v2552
  %v2554 = vmul.f32 %v2008, 1.442695
  %v2555 = vpow.pop %v2554
  %v2556 = vmul.f32 %v2009, 1.442695
  %v2557 = vpow.pop %v2556
  %v2558 = vmul.f32 %v2010, 1.442695
  %v2559 = vpow.pop %v2558
  %v2560 = vmul.f32 %v2011, 1.442695
  %v2561 = vpow.pop %v2560
  %v2562 = vmul.f32 %v2012, 1.442695
  %v2563 = vpow.pop %v2562
  %v2564 = vmul.f32 %v2013, 1.442695
  %v2565 = vpow.pop %v2564
  %v2566 = vmul.f32 %v2014, 1.442695
  %v2567 = vpow.pop %v2566
  %v2568 = vmul.f32 %v2015, 1.442695
  %v2569 = vpow.pop %v2568
  %v2570 = vmul.f32 %v2016, 1.442695
  %v2571 = vpow.pop %v2570
  %v2572 = vmul.f32 %v2017, 1.442695
  %v2573 = vpow.pop %v2572
  %v2574 = vmul.f32 %v2018, 1.442695
  %v2575 = vpow.pop %v2574
  %v2576 = vmul.f32 %v2019, 1.442695
  %v2577 = vpow.pop %v2576
  %v2578 = vmul.f32 %v2020, 1.442695
  %v2579 = vpow.pop %v2578
  %v2580 = vmul.f32 %v2021, 1.442695
  %v2581 = vpow.pop %v2580
  %v2582 = vmul.f32 %v2022, 1.442695
  %v2583 = vpow.pop %v2582
  %v2584 = vmul.f32 %v2023, 1.442695
  %v2585 = vpow.pop %v2584
  %v2586 = vmul.f32 %v2024, 1.442695
  %v2587 = vpow.pop %v2586
  %v2588 = vmul.f32 %v2025, 1.442695
  %v2589 = vpow.pop %v2588
  %v2590 = vmul.f32 %v2026, 1.442695
  %v2591 = vpow.pop %v2590
  %v2592 = vmul.f32 %v2027, 1.442695
  %v2593 = vpow.pop %v2592
  %v2594 = vmul.f32 %v2028, 1.442695
  %v2595 = vpow.pop %v2594
  %v2596 = vmul.f32 %v2029, 1.442695
  %v2597 = vpow.pop %v2596
  %v2598 = vmul.f32 %v2030, 1.442695
  %v2599 = vpow.pop %v2598
  %v2600 = vmul.f32 %v2031, 1.442695
  %v2601 = vpow.pop %v2600
  %v2602 = vmul.f32 %v2032, 1.442695
  %v2603 = vpow.pop %v2602
  %v2604 = vmul.f32 %v2033, 1.442695
  %v2605 = vpow.pop %v2604
  %v2606 = vmul.f32 %v2034, 1.442695
  %v2607 = vpow.pop %v2606
  %v2608 = vmul.f32 %v2035, 1.442695
  %v2609 = vpow.pop %v2608
  %v2610 = vmul.f32 %v2036, 1.442695
  %v2611 = vpow.pop %v2610
  %v2612 = vmul.f32 %v2037, 1.442695
  %v2613 = vpow.pop %v2612
  %v2614 = vadd.f32 %v2039, 1.0
  %v2615 = vadd.f32 %v2041, 1.0
  %v2616 = vadd.f32 %v2043, 1.0
  %v2617 = vadd.f32 %v2045, 1.0
  %v2618 = vadd.f32 %v2047, 1.0
  %v2619 = vadd.f32 %v2049, 1.0
  %v2620 = vadd.f32 %v2051, 1.0
  %v2621 = vadd.f32 %v2053, 1.0
  %v2622 = vadd.f32 %v2055, 1.0
  %v2623 = vadd.f32 %v2057, 1.0
  %v2624 = vadd.f32 %v2059, 1.0
  %v2625 = vadd.f32 %v2061, 1.0
  %v2626 = vadd.f32 %v2063, 1.0
  %v2627 = vadd.f32 %v2065, 1.0
  %v2628 = vadd.f32 %v2067, 1.0
  %v2629 = vadd.f32 %v2069, 1.0
  %v2630 = vadd.f32 %v2071, 1.0
  %v2631 = vadd.f32 %v2073, 1.0
  %v2632 = vadd.f32 %v2075, 1.0
  %v2633 = vadd.f32 %v2077, 1.0
  %v2634 = vadd.f32 %v2079, 1.0
  %v2635 = vadd.f32 %v2081, 1.0
  %v2636 = vadd.f32 %v2083, 1.0
  %v2637 = vadd.f32 %v2085, 1.0
  %v2638 = vadd.f32 %v2087, 1.0
  %v2639 = vadd.f32 %v2089, 1.0
  %v2640 = vadd.f32 %v2091, 1.0
  %v2641 = vadd.f32 %v2093, 1.0
  %v2642 = vadd.f32 %v2095, 1.0
  %v2643 = vadd.f32 %v2097, 1.0
  %v2644 = vadd.f32 %v2099, 1.0
  %v2645 = vadd.f32 %v2101, 1.0
  %v2646 = vadd.f32 %v2103, 1.0
  %v2647 = vadd.f32 %v2105, 1.0
  %v2648 = vadd.f32 %v2107, 1.0
  %v2649 = vadd.f32 %v2109, 1.0
  %v2650 = vadd.f32 %v2111, 1.0
  %v2651 = vadd.f32 %v2113, 1.0
  %v2652 = vadd.f32 %v2115, 1.0
  %v2653 = vadd.f32 %v2117, 1.0
  %v2654 = vadd.f32 %v2119, 1.0
  %v2655 = vadd.f32 %v2121, 1.0
  %v2656 = vadd.f32 %v2123, 1.0
  %v2657 = vadd.f32 %v2125, 1.0
  %v2658 = vadd.f32 %v2127, 1.0
  %v2659 = vadd.f32 %v2129, 1.0
  %v2660 = vadd.f32 %v2131, 1.0
  %v2661 = vadd.f32 %v2133, 1.0
  %v2662 = vadd.f32 %v2135, 1.0
  %v2663 = vadd.f32 %v2137, 1.0
  %v2664 = vadd.f32 %v2139, 1.0
  %v2665 = vadd.f32 %v2141, 1.0
  %v2666 = vadd.f32 %v2143, 1.0
  %v2667 = vadd.f32 %v2145, 1.0
  %v2668 = vadd.f32 %v2147, 1.0
  %v2669 = vadd.f32 %v2149, 1.0
  %v2670 = vadd.f32 %v2151, 1.0
  %v2671 = vadd.f32 %v2153, 1.0
  %v2672 = vadd.f32 %v2155, 1.0
  %v2673 = vadd.f32 %v2157, 1.0
  %v2674 = vadd.f32 %v2159, 1.0
  %v2675 = vadd.f32 %v2161, 1.0
  %v2676 = vadd.f32 %v2163, 1.0
  %v2677 = vadd.f32 %v2165, 1.0
  %v2678 = vadd.f32 %v2167, 1.0
  %v2679 = vadd.f32 %v2169, 1.0
  %v2680 = vadd.f32 %v2171, 1.0
  %v2681 = vadd.f32 %v2173, 1.0
  %v2682 = vadd.f32 %v2175, 1.0
  %v2683 = vadd.f32 %v2177, 1.0
  %v2684 = vadd.f32 %v2179, 1.0
  %v2685 = vadd.f32 %v2181, 1.0
  %v2686 = vadd.f32 %v2183, 1.0
  %v2687 = vadd.f32 %v2185, 1.0
  %v2688 = vadd.f32 %v2187, 1.0
  %v2689 = vadd.f32 %v2189, 1.0
  %v2690 = vadd.f32 %v2191, 1.0
  %v2691 = vadd.f32 %v2193, 1.0
  %v2692 = vadd.f32 %v2195, 1.0
  %v2693 = vadd.f32 %v2197, 1.0
  %v2694 = vadd.f32 %v2199, 1.0
  %v2695 = vadd.f32 %v2201, 1.0
  %v2696 = vadd.f32 %v2203, 1.0
  %v2697 = vadd.f32 %v2205, 1.0
  %v2698 = vadd.f32 %v2207, 1.0
  %v2699 = vadd.f32 %v2209, 1.0
  %v2700 = vadd.f32 %v2211, 1.0
  %v2701 = vadd.f32 %v2213, 1.0
  %v2702 = vadd.f32 %v2215, 1.0
  %v2703 = vadd.f32 %v2217, 1.0
  %v2704 = vadd.f32 %v2219, 1.0
  %v2705 = vadd.f32 %v2221, 1.0
  %v2706 = vadd.f32 %v2223, 1.0
  %v2707 = vadd.f32 %v2225, 1.0
  %v2708 = vadd.f32 %v2227, 1.0
  %v2709 = vadd.f32 %v2229, 1.0
  %v2710 = vadd.f32 %v2231, 1.0
  %v2711 = vadd.f32 %v2233, 1.0
  %v2712 = vadd.f32 %v2235, 1.0
  %v2713 = vadd.f32 %v2237, 1.0
  %v2714 = vadd.f32 %v2239, 1.0
  %v2715 = vadd.f32 %v2241, 1.0
  %v2716 = vadd.f32 %v2243, 1.0
  %v2717 = vadd.f32 %v2245, 1.0
  %v2718 = vadd.f32 %v2247, 1.0
  %v2719 = vadd.f32 %v2249, 1.0
  %v2720 = vadd.f32 %v2251, 1.0
  %v2721 = vadd.f32 %v2253, 1.0
  %v2722 = vadd.f32 %v2255, 1.0
  %v2723 = vadd.f32 %v2257, 1.0
  %v2724 = vadd.f32 %v2259, 1.0
  %v2725 = vadd.f32 %v2261, 1.0
  %v2726 = vadd.f32 %v2263, 1.0
  %v2727 = vadd.f32 %v2265, 1.0
  %v2728 = vadd.f32 %v2267, 1.0
  %v2729 = vadd.f32 %v2269, 1.0
  %v2730 = vadd.f32 %v2271, 1.0
  %v2731 = vadd.f32 %v2273, 1.0
  %v2732 = vadd.f32 %v2275, 1.0
  %v2733 = vadd.f32 %v2277, 1.0
  %v2734 = vadd.f32 %v2279, 1.0
  %v2735 = vadd.f32 %v2281, 1.0
  %v2736 = vadd.f32 %v2283, 1.0
  %v2737 = vadd.f32 %v2285, 1.0
  %v2738 = vadd.f32 %v2287, 1.0
  %v2739 = vadd.f32 %v2289, 1.0
  %v2740 = vadd.f32 %v2291, 1.0
  %v2741 = vadd.f32 %v2293, 1.0
  %v2742 = vadd.f32 %v2295, 1.0
  %v2743 = vadd.f32 %v2297, 1.0
  %v2744 = vadd.f32 %v2299, 1.0
  %v2745 = vadd.f32 %v2301, 1.0
  %v2746 = vadd.f32 %v2303, 1.0
  %v2747 = vadd.f32 %v2305, 1.0
  %v2748 = vadd.f32 %v2307, 1.0
  %v2749 = vadd.f32 %v2309, 1.0
  %v2750 = vadd.f32 %v2311, 1.0
  %v2751 = vadd.f32 %v2313, 1.0
  %v2752 = vadd.f32 %v2315, 1.0
  %v2753 = vadd.f32 %v2317, 1.0
  %v2754 = vadd.f32 %v2319, 1.0
  %v2755 = vadd.f32 %v2321, 1.0
  %v2756 = vadd.f32 %v2323, 1.0
  %v2757 = vadd.f32 %v2325, 1.0
  %v2758 = vadd.f32 %v2327, 1.0
  %v2759 = vadd.f32 %v2329, 1.0
  %v2760 = vadd.f32 %v2331, 1.0
  %v2761 = vadd.f32 %v2333, 1.0
  %v2762 = vadd.f32 %v2335, 1.0
  %v2763 = vadd.f32 %v2337, 1.0
  %v2764 = vadd.f32 %v2339, 1.0
  %v2765 = vadd.f32 %v2341, 1.0
  %v2766 = vadd.f32 %v2343, 1.0
  %v2767 = vadd.f32 %v2345, 1.0
  %v2768 = vadd.f32 %v2347, 1.0
  %v2769 = vadd.f32 %v2349, 1.0
  %v2770 = vadd.f32 %v2351, 1.0
  %v2771 = vadd.f32 %v2353, 1.0
  %v2772 = vadd.f32 %v2355, 1.0
  %v2773 = vadd.f32 %v2357, 1.0
  %v2774 = vadd.f32 %v2359, 1.0
  %v2775 = vadd.f32 %v2361, 1.0
  %v2776 = vadd.f32 %v2363, 1.0
  %v2777 = vadd.f32 %v2365, 1.0
  %v2778 = vadd.f32 %v2367, 1.0
  %v2779 = vadd.f32 %v2369, 1.0
  %v2780 = vadd.f32 %v2371, 1.0
  %v2781 = vadd.f32 %v2373, 1.0
  %v2782 = vadd.f32 %v2375, 1.0
  %v2783 = vadd.f32 %v2377, 1.0
  %v2784 = vadd.f32 %v2379, 1.0
  %v2785 = vadd.f32 %v2381, 1.0
  %v2786 = vadd.f32 %v2383, 1.0
  %v2787 = vadd.f32 %v2385, 1.0
  %v2788 = vadd.f32 %v2387, 1.0
  %v2789 = vadd.f32 %v2389, 1.0
  %v2790 = vadd.f32 %v2391, 1.0
  %v2791 = vadd.f32 %v2393, 1.0
  %v2792 = vadd.f32 %v2395, 1.0
  %v2793 = vadd.f32 %v2397, 1.0
  %v2794 = vadd.f32 %v2399, 1.0
  %v2795 = vadd.f32 %v2401, 1.0
  %v2796 = vadd.f32 %v2403, 1.0
  %v2797 = vadd.f32 %v2405, 1.0
  %v2798 = vadd.f32 %v2407, 1.0
  %v2799 = vadd.f32 %v2409, 1.0
  %v2800 = vadd.f32 %v2411, 1.0
  %v2801 = vadd.f32 %v2413, 1.0
  %v2802 = vadd.f32 %v2415, 1.0
  %v2803 = vadd.f32 %v2417, 1.0
  %v2804 = vadd.f32 %v2419, 1.0
  %v2805 = vadd.f32 %v2421, 1.0
  %v2806 = vadd.f32 %v2423, 1.0
  %v2807 = vadd.f32 %v2425, 1.0
  %v2808 = vadd.f32 %v2427, 1.0
  %v2809 = vadd.f32 %v2429, 1.0
  %v2810 = vadd.f32 %v2431, 1.0
  %v2811 = vadd.f32 %v2433, 1.0
  %v2812 = vadd.f32 %v2435, 1.0
  %v2813 = vadd.f32 %v2437, 1.0
  %v2814 = vadd.f32 %v2439, 1.0
  %v2815 = vadd.f32 %v2441, 1.0
  %v2816 = vadd.f32 %v2443, 1.0
  %v2817 = vadd.f32 %v2445, 1.0
  %v2818 = vadd.f32 %v2447, 1.0
  %v2819 = vadd.f32 %v2449, 1.0
  %v2820 = vadd.f32 %v2451, 1.0
  %v2821 = vadd.f32 %v2453, 1.0
  %v2822 = vadd.f32 %v2455, 1.0
  %v2823 = vadd.f32 %v2457, 1.0
  %v2824 = vadd.f32 %v2459, 1.0
  %v2825 = vadd.f32 %v2461, 1.0
  %v2826 = vadd.f32 %v2463, 1.0
  %v2827 = vadd.f32 %v2465, 1.0
  %v2828 = vadd.f32 %v2467, 1.0
  %v2829 = vadd.f32 %v2469, 1.0
  %v2830 = vadd.f32 %v2471, 1.0
  %v2831 = vadd.f32 %v2473, 1.0
  %v2832 = vadd.f32 %v2475, 1.0
  %v2833 = vadd.f32 %v2477, 1.0
  %v2834 = vadd.f32 %v2479, 1.0
  %v2835 = vadd.f32 %v2481, 1.0
  %v2836 = vadd.f32 %v2483, 1.0
  %v2837 = vadd.f32 %v2485, 1.0
  %v2838 = vadd.f32 %v2487, 1.0
  %v2839 = vadd.f32 %v2489, 1.0
  %v2840 = vadd.f32 %v2491, 1.0
  %v2841 = vadd.f32 %v2493, 1.0
  %v2842 = vadd.f32 %v2495, 1.0
  %v2843 = vadd.f32 %v2497, 1.0
  %v2844 = vadd.f32 %v2499, 1.0
  %v2845 = vadd.f32 %v2501, 1.0
  %v2846 = vadd.f32 %v2503, 1.0
  %v2847 = vadd.f32 %v2505, 1.0
  %v2848 = vadd.f32 %v2507, 1.0
  %v2849 = vadd.f32 %v2509, 1.0
  %v2850 = vadd.f32 %v2511, 1.0
  %v2851 = vadd.f32 %v2513, 1.0
  %v2852 = vadd.f32 %v2515, 1.0
  %v2853 = vadd.f32 %v2517, 1.0
  %v2854 = vadd.f32 %v2519, 1.0
  %v2855 = vadd.f32 %v2521, 1.0
  %v2856 = vadd.f32 %v2523, 1.0
  %v2857 = vadd.f32 %v2525, 1.0
  %v2858 = vadd.f32 %v2527, 1.0
  %v2859 = vadd.f32 %v2529, 1.0
  %v2860 = vadd.f32 %v2531, 1.0
  %v2861 = vadd.f32 %v2533, 1.0
  %v2862 = vadd.f32 %v2535, 1.0
  %v2863 = vadd.f32 %v2537, 1.0
  %v2864 = vadd.f32 %v2539, 1.0
  %v2865 = vadd.f32 %v2541, 1.0
  %v2866 = vadd.f32 %v2543, 1.0
  %v2867 = vadd.f32 %v2545, 1.0
  %v2868 = vadd.f32 %v2547, 1.0
  %v2869 = vadd.f32 %v2549, 1.0
  %v2870 = vadd.f32 %v2551, 1.0
  %v2871 = vadd.f32 %v2553, 1.0
  %v2872 = vadd.f32 %v2555, 1.0
  %v2873 = vadd.f32 %v2557, 1.0
  %v2874 = vadd.f32 %v2559, 1.0
  %v2875 = vadd.f32 %v2561, 1.0
  %v2876 = vadd.f32 %v2563, 1.0
  %v2877 = vadd.f32 %v2565, 1.0
  %v2878 = vadd.f32 %v2567, 1.0
  %v2879 = vadd.f32 %v2569, 1.0
  %v2880 = vadd.f32 %v2571, 1.0
  %v2881 = vadd.f32 %v2573, 1.0
  %v2882 = vadd.f32 %v2575, 1.0
  %v2883 = vadd.f32 %v2577, 1.0
  %v2884 = vadd.f32 %v2579, 1.0
  %v2885 = vadd.f32 %v2581, 1.0
  %v2886 = vadd.f32 %v2583, 1.0
  %v2887 = vadd.f32 %v2585, 1.0
  %v2888 = vadd.f32 %v2587, 1.0
  %v2889 = vadd.f32 %v2589, 1.0
  %v2890 = vadd.f32 %v2591, 1.0
  %v2891 = vadd.f32 %v2593, 1.0
  %v2892 = vadd.f32 %v2595, 1.0
  %v2893 = vadd.f32 %v2597, 1.0
  %v2894 = vadd.f32 %v2599, 1.0
  %v2895 = vadd.f32 %v2601, 1.0
  %v2896 = vadd.f32 %v2603, 1.0
  %v2897 = vadd.f32 %v2605, 1.0
  %v2898 = vadd.f32 %v2607, 1.0
  %v2899 = vadd.f32 %v2609, 1.0
  %v2900 = vadd.f32 %v2611, 1.0
  %v2901 = vadd.f32 %v2613, 1.0
  %v2902 = vrcp.pop %v2614
  %v2903 = vmul.f32 1.0, %v2902
  %v2904 = vrcp.pop %v2615
  %v2905 = vmul.f32 1.0, %v2904
  %v2906 = vrcp.pop %v2616
  %v2907 = vmul.f32 1.0, %v2906
  %v2908 = vrcp.pop %v2617
  %v2909 = vmul.f32 1.0, %v2908
  %v2910 = vrcp.pop %v2618
  %v2911 = vmul.f32 1.0, %v2910
  %v2912 = vrcp.pop %v2619
  %v2913 = vmul.f32 1.0, %v2912
  %v2914 = vrcp.pop %v2620
  %v2915 = vmul.f32 1.0, %v2914
  %v2916 = vrcp.pop %v2621
  %v2917 = vmul.f32 1.0, %v2916
  %v2918 = vrcp.pop %v2622
  %v2919 = vmul.f32 1.0, %v2918
  %v2920 = vrcp.pop %v2623
  %v2921 = vmul.f32 1.0, %v2920
  %v2922 = vrcp.pop %v2624
  %v2923 = vmul.f32 1.0, %v2922
  %v2924 = vrcp.pop %v2625
  %v2925 = vmul.f32 1.0, %v2924
  %v2926 = vrcp.pop %v2626
  %v2927 = vmul.f32 1.0, %v2926
  %v2928 = vrcp.pop %v2627
  %v2929 = vmul.f32 1.0, %v2928
  %v2930 = vrcp.pop %v2628
  %v2931 = vmul.f32 1.0, %v2930
  %v2932 = vrcp.pop %v2629
  %v2933 = vmul.f32 1.0, %v2932
  %v2934 = vrcp.pop %v2630
  %v2935 = vmul.f32 1.0, %v2934
  %v2936 = vrcp.pop %v2631
  %v2937 = vmul.f32 1.0, %v2936
  %v2938 = vrcp.pop %v2632
  %v2939 = vmul.f32 1.0, %v2938
  %v2940 = vrcp.pop %v2633
  %v2941 = vmul.f32 1.0, %v2940
  %v2942 = vrcp.pop %v2634
  %v2943 = vmul.f32 1.0, %v2942
  %v2944 = vrcp.pop %v2635
  %v2945 = vmul.f32 1.0, %v2944
  %v2946 = vrcp.pop %v2636
  %v2947 = vmul.f32 1.0, %v2946
  %v2948 = vrcp.pop %v2637
  %v2949 = vmul.f32 1.0, %v2948
  %v2950 = vrcp.pop %v2638
  %v2951 = vmul.f32 1.0, %v2950
  %v2952 = vrcp.pop %v2639
  %v2953 = vmul.f32 1.0, %v2952
  %v2954 = vrcp.pop %v2640
  %v2955 = vmul.f32 1.0, %v2954
  %v2956 = vrcp.pop %v2641
  %v2957 = vmul.f32 1.0, %v2956
  %v2958 = vrcp.pop %v2642
  %v2959 = vmul.f32 1.0, %v2958
  %v2960 = vrcp.pop %v2643
  %v2961 = vmul.f32 1.0, %v2960
  %v2962 = vrcp.pop %v2644
  %v2963 = vmul.f32 1.0, %v2962
  %v2964 = vrcp.pop %v2645
  %v2965 = vmul.f32 1.0, %v2964
  %v2966 = vrcp.pop %v2646
  %v2967 = vmul.f32 1.0, %v2966
  %v2968 = vrcp.pop %v2647
  %v2969 = vmul.f32 1.0, %v2968
  %v2970 = vrcp.pop %v2648
  %v2971 = vmul.f32 1.0, %v2970
  %v2972 = vrcp.pop %v2649
  %v2973 = vmul.f32 1.0, %v2972
  %v2974 = vrcp.pop %v2650
  %v2975 = vmul.f32 1.0, %v2974
  %v2976 = vrcp.pop %v2651
  %v2977 = vmul.f32 1.0, %v2976
  %v2978 = vrcp.pop %v2652
  %v2979 = vmul.f32 1.0, %v2978
  %v2980 = vrcp.pop %v2653
  %v2981 = vmul.f32 1.0, %v2980
  %v2982 = vrcp.pop %v2654
  %v2983 = vmul.f32 1.0, %v2982
  %v2984 = vrcp.pop %v2655
  %v2985 = vmul.f32 1.0, %v2984
  %v2986 = vrcp.pop %v2656
  %v2987 = vmul.f32 1.0, %v2986
  %v2988 = vrcp.pop %v2657
  %v2989 = vmul.f32 1.0, %v2988
  %v2990 = vrcp.pop %v2658
  %v2991 = vmul.f32 1.0, %v2990
  %v2992 = vrcp.pop %v2659
  %v2993 = vmul.f32 1.0, %v2992
  %v2994 = vrcp.pop %v2660
  %v2995 = vmul.f32 1.0, %v2994
  %v2996 = vrcp.pop %v2661
  %v2997 = vmul.f32 1.0, %v2996
  %v2998 = vrcp.pop %v2662
  %v2999 = vmul.f32 1.0, %v2998
  %v3000 = vrcp.pop %v2663
  %v3001 = vmul.f32 1.0, %v3000
  %v3002 = vrcp.pop %v2664
  %v3003 = vmul.f32 1.0, %v3002
  %v3004 = vrcp.pop %v2665
  %v3005 = vmul.f32 1.0, %v3004
  %v3006 = vrcp.pop %v2666
  %v3007 = vmul.f32 1.0, %v3006
  %v3008 = vrcp.pop %v2667
  %v3009 = vmul.f32 1.0, %v3008
  %v3010 = vrcp.pop %v2668
  %v3011 = vmul.f32 1.0, %v3010
  %v3012 = vrcp.pop %v2669
  %v3013 = vmul.f32 1.0, %v3012
  %v3014 = vrcp.pop %v2670
  %v3015 = vmul.f32 1.0, %v3014
  %v3016 = vrcp.pop %v2671
  %v3017 = vmul.f32 1.0, %v3016
  %v3018 = vrcp.pop %v2672
  %v3019 = vmul.f32 1.0, %v3018
  %v3020 = vrcp.pop %v2673
  %v3021 = vmul.f32 1.0, %v3020
  %v3022 = vrcp.pop %v2674
  %v3023 = vmul.f32 1.0, %v3022
  %v3024 = vrcp.pop %v2675
  %v3025 = vmul.f32 1.0, %v3024
  %v3026 = vrcp.pop %v2676
  %v3027 = vmul.f32 1.0, %v3026
  %v3028 = vrcp.pop %v2677
  %v3029 = vmul.f32 1.0, %v3028
  %v3030 = vrcp.pop %v2678
  %v3031 = vmul.f32 1.0, %v3030
  %v3032 = vrcp.pop %v2679
  %v3033 = vmul.f32 1.0, %v3032
  %v3034 = vrcp.pop %v2680
  %v3035 = vmul.f32 1.0, %v3034
  %v3036 = vrcp.pop %v2681
  %v3037 = vmul.f32 1.0, %v3036
  %v3038 = vrcp.pop %v2682
  %v3039 = vmul.f32 1.0, %v3038
  %v3040 = vrcp.pop %v2683
  %v3041 = vmul.f32 1.0, %v3040
  %v3042 = vrcp.pop %v2684
  %v3043 = vmul.f32 1.0, %v3042
  %v3044 = vrcp.pop %v2685
  %v3045 = vmul.f32 1.0, %v3044
  %v3046 = vrcp.pop %v2686
  %v3047 = vmul.f32 1.0, %v3046
  %v3048 = vrcp.pop %v2687
  %v3049 = vmul.f32 1.0, %v3048
  %v3050 = vrcp.pop %v2688
  %v3051 = vmul.f32 1.0, %v3050
  %v3052 = vrcp.pop %v2689
  %v3053 = vmul.f32 1.0, %v3052
  %v3054 = vrcp.pop %v2690
  %v3055 = vmul.f32 1.0, %v3054
  %v3056 = vrcp.pop %v2691
  %v3057 = vmul.f32 1.0, %v3056
  %v3058 = vrcp.pop %v2692
  %v3059 = vmul.f32 1.0, %v3058
  %v3060 = vrcp.pop %v2693
  %v3061 = vmul.f32 1.0, %v3060
  %v3062 = vrcp.pop %v2694
  %v3063 = vmul.f32 1.0, %v3062
  %v3064 = vrcp.pop %v2695
  %v3065 = vmul.f32 1.0, %v3064
  %v3066 = vrcp.pop %v2696
  %v3067 = vmul.f32 1.0, %v3066
  %v3068 = vrcp.pop %v2697
  %v3069 = vmul.f32 1.0, %v3068
  %v3070 = vrcp.pop %v2698
  %v3071 = vmul.f32 1.0, %v3070
  %v3072 = vrcp.pop %v2699
  %v3073 = vmul.f32 1.0, %v3072
  %v3074 = vrcp.pop %v2700
  %v3075 = vmul.f32 1.0, %v3074
  %v3076 = vrcp.pop %v2701
  %v3077 = vmul.f32 1.0, %v3076
  %v3078 = vrcp.pop %v2702
  %v3079 = vmul.f32 1.0, %v3078
  %v3080 = vrcp.pop %v2703
  %v3081 = vmul.f32 1.0, %v3080
  %v3082 = vrcp.pop %v2704
  %v3083 = vmul.f32 1.0, %v3082
  %v3084 = vrcp.pop %v2705
  %v3085 = vmul.f32 1.0, %v3084
  %v3086 = vrcp.pop %v2706
  %v3087 = vmul.f32 1.0, %v3086
  %v3088 = vrcp.pop %v2707
  %v3089 = vmul.f32 1.0, %v3088
  %v3090 = vrcp.pop %v2708
  %v3091 = vmul.f32 1.0, %v3090
  %v3092 = vrcp.pop %v2709
  %v3093 = vmul.f32 1.0, %v3092
  %v3094 = vrcp.pop %v2710
  %v3095 = vmul.f32 1.0, %v3094
  %v3096 = vrcp.pop %v2711
  %v3097 = vmul.f32 1.0, %v3096
  %v3098 = vrcp.pop %v2712
  %v3099 = vmul.f32 1.0, %v3098
  %v3100 = vrcp.pop %v2713
  %v3101 = vmul.f32 1.0, %v3100
  %v3102 = vrcp.pop %v2714
  %v3103 = vmul.f32 1.0, %v3102
  %v3104 = vrcp.pop %v2715
  %v3105 = vmul.f32 1.0, %v3104
  %v3106 = vrcp.pop %v2716
  %v3107 = vmul.f32 1.0, %v3106
  %v3108 = vrcp.pop %v2717
  %v3109 = vmul.f32 1.0, %v3108
  %v3110 = vrcp.pop %v2718
  %v3111 = vmul.f32 1.0, %v3110
  %v3112 = vrcp.pop %v2719
  %v3113 = vmul.f32 1.0, %v3112
  %v3114 = vrcp.pop %v2720
  %v3115 = vmul.f32 1.0, %v3114
  %v3116 = vrcp.pop %v2721
  %v3117 = vmul.f32 1.0, %v3116
  %v3118 = vrcp.pop %v2722
  %v3119 = vmul.f32 1.0, %v3118
  %v3120 = vrcp.pop %v2723
  %v3121 = vmul.f32 1.0, %v3120
  %v3122 = vrcp.pop %v2724
  %v3123 = vmul.f32 1.0, %v3122
  %v3124 = vrcp.pop %v2725
  %v3125 = vmul.f32 1.0, %v3124
  %v3126 = vrcp.pop %v2726
  %v3127 = vmul.f32 1.0, %v3126
  %v3128 = vrcp.pop %v2727
  %v3129 = vmul.f32 1.0, %v3128
  %v3130 = vrcp.pop %v2728
  %v3131 = vmul.f32 1.0, %v3130
  %v3132 = vrcp.pop %v2729
  %v3133 = vmul.f32 1.0, %v3132
  %v3134 = vrcp.pop %v2730
  %v3135 = vmul.f32 1.0, %v3134
  %v3136 = vrcp.pop %v2731
  %v3137 = vmul.f32 1.0, %v3136
  %v3138 = vrcp.pop %v2732
  %v3139 = vmul.f32 1.0, %v3138
  %v3140 = vrcp.pop %v2733
  %v3141 = vmul.f32 1.0, %v3140
  %v3142 = vrcp.pop %v2734
  %v3143 = vmul.f32 1.0, %v3142
  %v3144 = vrcp.pop %v2735
  %v3145 = vmul.f32 1.0, %v3144
  %v3146 = vrcp.pop %v2736
  %v3147 = vmul.f32 1.0, %v3146
  %v3148 = vrcp.pop %v2737
  %v3149 = vmul.f32 1.0, %v3148
  %v3150 = vrcp.pop %v2738
  %v3151 = vmul.f32 1.0, %v3150
  %v3152 = vrcp.pop %v2739
  %v3153 = vmul.f32 1.0, %v3152
  %v3154 = vrcp.pop %v2740
  %v3155 = vmul.f32 1.0, %v3154
  %v3156 = vrcp.pop %v2741
  %v3157 = vmul.f32 1.0, %v3156
  %v3158 = vrcp.pop %v2742
  %v3159 = vmul.f32 1.0, %v3158
  %v3160 = vrcp.pop %v2743
  %v3161 = vmul.f32 1.0, %v3160
  %v3162 = vrcp.pop %v2744
  %v3163 = vmul.f32 1.0, %v3162
  %v3164 = vrcp.pop %v2745
  %v3165 = vmul.f32 1.0, %v3164
  %v3166 = vrcp.pop %v2746
  %v3167 = vmul.f32 1.0, %v3166
  %v3168 = vrcp.pop %v2747
  %v3169 = vmul.f32 1.0, %v3168
  %v3170 = vrcp.pop %v2748
  %v3171 = vmul.f32 1.0, %v3170
  %v3172 = vrcp.pop %v2749
  %v3173 = vmul.f32 1.0, %v3172
  %v3174 = vrcp.pop %v2750
  %v3175 = vmul.f32 1.0, %v3174
  %v3176 = vrcp.pop %v2751
  %v3177 = vmul.f32 1.0, %v3176
  %v3178 = vrcp.pop %v2752
  %v3179 = vmul.f32 1.0, %v3178
  %v3180 = vrcp.pop %v2753
  %v3181 = vmul.f32 1.0, %v3180
  %v3182 = vrcp.pop %v2754
  %v3183 = vmul.f32 1.0, %v3182
  %v3184 = vrcp.pop %v2755
  %v3185 = vmul.f32 1.0, %v3184
  %v3186 = vrcp.pop %v2756
  %v3187 = vmul.f32 1.0, %v3186
  %v3188 = vrcp.pop %v2757
  %v3189 = vmul.f32 1.0, %v3188
  %v3190 = vrcp.pop %v2758
  %v3191 = vmul.f32 1.0, %v3190
  %v3192 = vrcp.pop %v2759
  %v3193 = vmul.f32 1.0, %v3192
  %v3194 = vrcp.pop %v2760
  %v3195 = vmul.f32 1.0, %v3194
  %v3196 = vrcp.pop %v2761
  %v3197 = vmul.f32 1.0, %v3196
  %v3198 = vrcp.pop %v2762
  %v3199 = vmul.f32 1.0, %v3198
  %v3200 = vrcp.pop %v2763
  %v3201 = vmul.f32 1.0, %v3200
  %v3202 = vrcp.pop %v2764
  %v3203 = vmul.f32 1.0, %v3202
  %v3204 = vrcp.pop %v2765
  %v3205 = vmul.f32 1.0, %v3204
  %v3206 = vrcp.pop %v2766
  %v3207 = vmul.f32 1.0, %v3206
  %v3208 = vrcp.pop %v2767
  %v3209 = vmul.f32 1.0, %v3208
  %v3210 = vrcp.pop %v2768
  %v3211 = vmul.f32 1.0, %v3210
  %v3212 = vrcp.pop %v2769
  %v3213 = vmul.f32 1.0, %v3212
  %v3214 = vrcp.pop %v2770
  %v3215 = vmul.f32 1.0, %v3214
  %v3216 = vrcp.pop %v2771
  %v3217 = vmul.f32 1.0, %v3216
  %v3218 = vrcp.pop %v2772
  %v3219 = vmul.f32 1.0, %v3218
  %v3220 = vrcp.pop %v2773
  %v3221 = vmul.f32 1.0, %v3220
  %v3222 = vrcp.pop %v2774
  %v3223 = vmul.f32 1.0, %v3222
  %v3224 = vrcp.pop %v2775
  %v3225 = vmul.f32 1.0, %v3224
  %v3226 = vrcp.pop %v2776
  %v3227 = vmul.f32 1.0, %v3226
  %v3228 = vrcp.pop %v2777
  %v3229 = vmul.f32 1.0, %v3228
  %v3230 = vrcp.pop %v2778
  %v3231 = vmul.f32 1.0, %v3230
  %v3232 = vrcp.pop %v2779
  %v3233 = vmul.f32 1.0, %v3232
  %v3234 = vrcp.pop %v2780
  %v3235 = vmul.f32 1.0, %v3234
  %v3236 = vrcp.pop %v2781
  %v3237 = vmul.f32 1.0, %v3236
  %v3238 = vrcp.pop %v2782
  %v3239 = vmul.f32 1.0, %v3238
  %v3240 = vrcp.pop %v2783
  %v3241 = vmul.f32 1.0, %v3240
  %v3242 = vrcp.pop %v2784
  %v3243 = vmul.f32 1.0, %v3242
  %v3244 = vrcp.pop %v2785
  %v3245 = vmul.f32 1.0, %v3244
  %v3246 = vrcp.pop %v2786
  %v3247 = vmul.f32 1.0, %v3246
  %v3248 = vrcp.pop %v2787
  %v3249 = vmul.f32 1.0, %v3248
  %v3250 = vrcp.pop %v2788
  %v3251 = vmul.f32 1.0, %v3250
  %v3252 = vrcp.pop %v2789
  %v3253 = vmul.f32 1.0, %v3252
  %v3254 = vrcp.pop %v2790
  %v3255 = vmul.f32 1.0, %v3254
  %v3256 = vrcp.pop %v2791
  %v3257 = vmul.f32 1.0, %v3256
  %v3258 = vrcp.pop %v2792
  %v3259 = vmul.f32 1.0, %v3258
  %v3260 = vrcp.pop %v2793
  %v3261 = vmul.f32 1.0, %v3260
  %v3262 = vrcp.pop %v2794
  %v3263 = vmul.f32 1.0, %v3262
  %v3264 = vrcp.pop %v2795
  %v3265 = vmul.f32 1.0, %v3264
  %v3266 = vrcp.pop %v2796
  %v3267 = vmul.f32 1.0, %v3266
  %v3268 = vrcp.pop %v2797
  %v3269 = vmul.f32 1.0, %v3268
  %v3270 = vrcp.pop %v2798
  %v3271 = vmul.f32 1.0, %v3270
  %v3272 = vrcp.pop %v2799
  %v3273 = vmul.f32 1.0, %v3272
  %v3274 = vrcp.pop %v2800
  %v3275 = vmul.f32 1.0, %v3274
  %v3276 = vrcp.pop %v2801
  %v3277 = vmul.f32 1.0, %v3276
  %v3278 = vrcp.pop %v2802
  %v3279 = vmul.f32 1.0, %v3278
  %v3280 = vrcp.pop %v2803
  %v3281 = vmul.f32 1.0, %v3280
  %v3282 = vrcp.pop %v2804
  %v3283 = vmul.f32 1.0, %v3282
  %v3284 = vrcp.pop %v2805
  %v3285 = vmul.f32 1.0, %v3284
  %v3286 = vrcp.pop %v2806
  %v3287 = vmul.f32 1.0, %v3286
  %v3288 = vrcp.pop %v2807
  %v3289 = vmul.f32 1.0, %v3288
  %v3290 = vrcp.pop %v2808
  %v3291 = vmul.f32 1.0, %v3290
  %v3292 = vrcp.pop %v2809
  %v3293 = vmul.f32 1.0, %v3292
  %v3294 = vrcp.pop %v2810
  %v3295 = vmul.f32 1.0, %v3294
  %v3296 = vrcp.pop %v2811
  %v3297 = vmul.f32 1.0, %v3296
  %v3298 = vrcp.pop %v2812
  %v3299 = vmul.f32 1.0, %v3298
  %v3300 = vrcp.pop %v2813
  %v3301 = vmul.f32 1.0, %v3300
  %v3302 = vrcp.pop %v2814
  %v3303 = vmul.f32 1.0, %v3302
  %v3304 = vrcp.pop %v2815
  %v3305 = vmul.f32 1.0, %v3304
  %v3306 = vrcp.pop %v2816
  %v3307 = vmul.f32 1.0, %v3306
  %v3308 = vrcp.pop %v2817
  %v3309 = vmul.f32 1.0, %v3308
  %v3310 = vrcp.pop %v2818
  %v3311 = vmul.f32 1.0, %v3310
  %v3312 = vrcp.pop %v2819
  %v3313 = vmul.f32 1.0, %v3312
  %v3314 = vrcp.pop %v2820
  %v3315 = vmul.f32 1.0, %v3314
  %v3316 = vrcp.pop %v2821
  %v3317 = vmul.f32 1.0, %v3316
  %v3318 = vrcp.pop %v2822
  %v3319 = vmul.f32 1.0, %v3318
  %v3320 = vrcp.pop %v2823
  %v3321 = vmul.f32 1.0, %v3320
  %v3322 = vrcp.pop %v2824
  %v3323 = vmul.f32 1.0, %v3322
  %v3324 = vrcp.pop %v2825
  %v3325 = vmul.f32 1.0, %v3324
  %v3326 = vrcp.pop %v2826
  %v3327 = vmul.f32 1.0, %v3326
  %v3328 = vrcp.pop %v2827
  %v3329 = vmul.f32 1.0, %v3328
  %v3330 = vrcp.pop %v2828
  %v3331 = vmul.f32 1.0, %v3330
  %v3332 = vrcp.pop %v2829
  %v3333 = vmul.f32 1.0, %v3332
  %v3334 = vrcp.pop %v2830
  %v3335 = vmul.f32 1.0, %v3334
  %v3336 = vrcp.pop %v2831
  %v3337 = vmul.f32 1.0, %v3336
  %v3338 = vrcp.pop %v2832
  %v3339 = vmul.f32 1.0, %v3338
  %v3340 = vrcp.pop %v2833
  %v3341 = vmul.f32 1.0, %v3340
  %v3342 = vrcp.pop %v2834
  %v3343 = vmul.f32 1.0, %v3342
  %v3344 = vrcp.pop %v2835
  %v3345 = vmul.f32 1.0, %v3344
  %v3346 = vrcp.pop %v2836
  %v3347 = vmul.f32 1.0, %v3346
  %v3348 = vrcp.pop %v2837
  %v3349 = vmul.f32 1.0, %v3348
  %v3350 = vrcp.pop %v2838
  %v3351 = vmul.f32 1.0, %v3350
  %v3352 = vrcp.pop %v2839
  %v3353 = vmul.f32 1.0, %v3352
  %v3354 = vrcp.pop %v2840
  %v3355 = vmul.f32 1.0, %v3354
  %v3356 = vrcp.pop %v2841
  %v3357 = vmul.f32 1.0, %v3356
  %v3358 = vrcp.pop %v2842
  %v3359 = vmul.f32 1.0, %v3358
  %v3360 = vrcp.pop %v2843
  %v3361 = vmul.f32 1.0, %v3360
  %v3362 = vrcp.pop %v2844
  %v3363 = vmul.f32 1.0, %v3362
  %v3364 = vrcp.pop %v2845
  %v3365 = vmul.f32 1.0, %v3364
  %v3366 = vrcp.pop %v2846
  %v3367 = vmul.f32 1.0, %v3366
  %v3368 = vrcp.pop %v2847
  %v3369 = vmul.f32 1.0, %v3368
  %v3370 = vrcp.pop %v2848
  %v3371 = vmul.f32 1.0, %v3370
  %v3372 = vrcp.pop %v2849
  %v3373 = vmul.f32 1.0, %v3372
  %v3374 = vrcp.pop %v2850
  %v3375 = vmul.f32 1.0, %v3374
  %v3376 = vrcp.pop %v2851
  %v3377 = vmul.f32 1.0, %v3376
  %v3378 = vrcp.pop %v2852
  %v3379 = vmul.f32 1.0, %v3378
  %v3380 = vrcp.pop %v2853
  %v3381 = vmul.f32 1.0, %v3380
  %v3382 = vrcp.pop %v2854
  %v3383 = vmul.f32 1.0, %v3382
  %v3384 = vrcp.pop %v2855
  %v3385 = vmul.f32 1.0, %v3384
  %v3386 = vrcp.pop %v2856
  %v3387 = vmul.f32 1.0, %v3386
  %v3388 = vrcp.pop %v2857
  %v3389 = vmul.f32 1.0, %v3388
  %v3390 = vrcp.pop %v2858
  %v3391 = vmul.f32 1.0, %v3390
  %v3392 = vrcp.pop %v2859
  %v3393 = vmul.f32 1.0, %v3392
  %v3394 = vrcp.pop %v2860
  %v3395 = vmul.f32 1.0, %v3394
  %v3396 = vrcp.pop %v2861
  %v3397 = vmul.f32 1.0, %v3396
  %v3398 = vrcp.pop %v2862
  %v3399 = vmul.f32 1.0, %v3398
  %v3400 = vrcp.pop %v2863
  %v3401 = vmul.f32 1.0, %v3400
  %v3402 = vrcp.pop %v2864
  %v3403 = vmul.f32 1.0, %v3402
  %v3404 = vrcp.pop %v2865
  %v3405 = vmul.f32 1.0, %v3404
  %v3406 = vrcp.pop %v2866
  %v3407 = vmul.f32 1.0, %v3406
  %v3408 = vrcp.pop %v2867
  %v3409 = vmul.f32 1.0, %v3408
  %v3410 = vrcp.pop %v2868
  %v3411 = vmul.f32 1.0, %v3410
  %v3412 = vrcp.pop %v2869
  %v3413 = vmul.f32 1.0, %v3412
  %v3414 = vrcp.pop %v2870
  %v3415 = vmul.f32 1.0, %v3414
  %v3416 = vrcp.pop %v2871
  %v3417 = vmul.f32 1.0, %v3416
  %v3418 = vrcp.pop %v2872
  %v3419 = vmul.f32 1.0, %v3418
  %v3420 = vrcp.pop %v2873
  %v3421 = vmul.f32 1.0, %v3420
  %v3422 = vrcp.pop %v2874
  %v3423 = vmul.f32 1.0, %v3422
  %v3424 = vrcp.pop %v2875
  %v3425 = vmul.f32 1.0, %v3424
  %v3426 = vrcp.pop %v2876
  %v3427 = vmul.f32 1.0, %v3426
  %v3428 = vrcp.pop %v2877
  %v3429 = vmul.f32 1.0, %v3428
  %v3430 = vrcp.pop %v2878
  %v3431 = vmul.f32 1.0, %v3430
  %v3432 = vrcp.pop %v2879
  %v3433 = vmul.f32 1.0, %v3432
  %v3434 = vrcp.pop %v2880
  %v3435 = vmul.f32 1.0, %v3434
  %v3436 = vrcp.pop %v2881
  %v3437 = vmul.f32 1.0, %v3436
  %v3438 = vrcp.pop %v2882
  %v3439 = vmul.f32 1.0, %v3438
  %v3440 = vrcp.pop %v2883
  %v3441 = vmul.f32 1.0, %v3440
  %v3442 = vrcp.pop %v2884
  %v3443 = vmul.f32 1.0, %v3442
  %v3444 = vrcp.pop %v2885
  %v3445 = vmul.f32 1.0, %v3444
  %v3446 = vrcp.pop %v2886
  %v3447 = vmul.f32 1.0, %v3446
  %v3448 = vrcp.pop %v2887
  %v3449 = vmul.f32 1.0, %v3448
  %v3450 = vrcp.pop %v2888
  %v3451 = vmul.f32 1.0, %v3450
  %v3452 = vrcp.pop %v2889
  %v3453 = vmul.f32 1.0, %v3452
  %v3454 = vrcp.pop %v2890
  %v3455 = vmul.f32 1.0, %v3454
  %v3456 = vrcp.pop %v2891
  %v3457 = vmul.f32 1.0, %v3456
  %v3458 = vrcp.pop %v2892
  %v3459 = vmul.f32 1.0, %v3458
  %v3460 = vrcp.pop %v2893
  %v3461 = vmul.f32 1.0, %v3460
  %v3462 = vrcp.pop %v2894
  %v3463 = vmul.f32 1.0, %v3462
  %v3464 = vrcp.pop %v2895
  %v3465 = vmul.f32 1.0, %v3464
  %v3466 = vrcp.pop %v2896
  %v3467 = vmul.f32 1.0, %v3466
  %v3468 = vrcp.pop %v2897
  %v3469 = vmul.f32 1.0, %v3468
  %v3470 = vrcp.pop %v2898
  %v3471 = vmul.f32 1.0, %v3470
  %v3472 = vrcp.pop %v2899
  %v3473 = vmul.f32 1.0, %v3472
  %v3474 = vrcp.pop %v2900
  %v3475 = vmul.f32 1.0, %v3474
  %v3476 = vrcp.pop %v2901
  %v3477 = vmul.f32 1.0, %v3476
  %v3478 = vld [vmem:[%s2] sm:$0xff]
  %v3479 = vld [vmem:[%s2 + $0x8] sm:$0xff]
  %v3480 = vld [vmem:[%s2 + $0x10] sm:$0xff]
  %v3481 = vld [vmem:[%s2 + $0x18] sm:$0xff]
  %v3482 = vld [vmem:[%s2 + $0x20] sm:$0xff]
  %v3483 = vld [vmem:[%s2 + $0x28] sm:$0xff]
  %v3484 = vld [vmem:[%s2 + $0x30] sm:$0xff]
  %v3485 = vld [vmem:[%s2 + $0x38] sm:$0xff]
  %v3486 = vld [vmem:[%s2 + $0x40] sm:$0xff]
  %v3487 = vld [vmem:[%s2 + $0x48] sm:$0xff]
  %v3488 = vld [vmem:[%s2 + $0x50] sm:$0xff]
  %v3489 = vld [vmem:[%s2 + $0x58] sm:$0xff]
  %v3490 = vld [vmem:[%s2 + $0x60] sm:$0xff]
  %v3491 = vld [vmem:[%s2 + $0x68] sm:$0xff]
  %v3492 = vld [vmem:[%s2 + $0x70] sm:$0xff]
  %v3493 = vld [vmem:[%s2 + $0x78] sm:$0xff]
  %v3494 = vld [vmem:[%s2 + $0x80] sm:$0xff]
  %v3495 = vld [vmem:[%s2 + $0x88] sm:$0xff]
  %v3496 = vld [vmem:[%s2 + $0x90] sm:$0xff]
  %v3497 = vld [vmem:[%s2 + $0x98] sm:$0xff]
  %v3498 = vld [vmem:[%s2 + $0xa0] sm:$0xff]
  %v3499 = vld [vmem:[%s2 + $0xa8] sm:$0xff]
  %v3500 = vld [vmem:[%s2 + $0xb0] sm:$0xff]
  %v3501 = vld [vmem:[%s2 + $0xb8] sm:$0xff]
  %v3502 = vld [vmem:[%s2 + $0xc0] sm:$0xff]
  %v3503 = vld [vmem:[%s2 + $0xc8] sm:$0xff]
  %v3504 = vld [vmem:[%s2 + $0xd0] sm:$0xff]
  %v3505 = vld [vmem:[%s2 + $0xd8] sm:$0xff]
  %v3506 = vld [vmem:[%s2 + $0xe0] sm:$0xff]
  %v3507 = vld [vmem:[%s2 + $0xe8] sm:$0xff]
  %v3508 = vld [vmem:[%s2 + $0xf0] sm:$0xff]
  %v3509 = vld [vmem:[%s2 + $0xf8] sm:$0xff]
  %v3510 = vld [vmem:[%s2 + $0x100] sm:$0xff]
  %v3511 = vld [vmem:[%s2 + $0x108] sm:$0xff]
  %v3512 = vld [vmem:[%s2 + $0x110] sm:$0xff]
  %v3513 = vld [vmem:[%s2 + $0x118] sm:$0xff]
  %v3514 = vld [vmem:[%s2 + $0x120] sm:$0xff]
  %v3515 = vld [vmem:[%s2 + $0x128] sm:$0xff]
  %v3516 = vld [vmem:[%s2 + $0x130] sm:$0xff]
  %v3517 = vld [vmem:[%s2 + $0x138] sm:$0xff]
  %v3518 = vld [vmem:[%s2 + $0x140] sm:$0xff]
  %v3519 = vld [vmem:[%s2 + $0x148] sm:$0xff]
  %v3520 = vld [vmem:[%s2 + $0x150] sm:$0xff]
  %v3521 = vld [vmem:[%s2 + $0x158] sm:$0xff]
  %v3522 = vld [vmem:[%s2 + $0x160] sm:$0xff]
  %v3523 = vld [vmem:[%s2 + $0x168] sm:$0xff]
  %v3524 = vld [vmem:[%s2 + $0x170] sm:$0xff]
  %v3525 = vld [vmem:[%s2 + $0x178] sm:$0xff]
  %v3526 = vld [vmem:[%s2 + $0x180] sm:$0xff]
  %v3527 = vld [vmem:[%s2 + $0x188] sm:$0xff]
  %v3528 = vld [vmem:[%s2 + $0x190] sm:$0xff]
  %v3529 = vld [vmem:[%s2 + $0x198] sm:$0xff]
  %v3530 = vld [vmem:[%s2 + $0x1a0] sm:$0xff]
  %v3531 = vld [vmem:[%s2 + $0x1a8] sm:$0xff]
  %v3532 = vld [vmem:[%s2 + $0x1b0] sm:$0xff]
  %v3533 = vld [vmem:[%s2 + $0x1b8] sm:$0xff]
  %v3534 = vld [vmem:[%s2 + $0x1c0] sm:$0xff]
  %v3535 = vld [vmem:[%s2 + $0x1c8] sm:$0xff]
  %v3536 = vld [vmem:[%s2 + $0x1d0] sm:$0xff]
  %v3537 = vld [vmem:[%s2 + $0x1d8] sm:$0xff]
  %v3538 = vld [vmem:[%s2 + $0x1e0] sm:$0xff]
  %v3539 = vld [vmem:[%s2 + $0x1e8] sm:$0xff]
  %v3540 = vld [vmem:[%s2 + $0x1f0] sm:$0xff]
  %v3541 = vld [vmem:[%s2 + $0x1f8] sm:$0xff]
  %v3542 = vld [vmem:[%s2 + $0x200] sm:$0xff]
  %v3543 = vld [vmem:[%s2 + $0x208] sm:$0xff]
  %v3544 = vld [vmem:[%s2 + $0x210] sm:$0xff]
  %v3545 = vld [vmem:[%s2 + $0x218] sm:$0xff]
  %v3546 = vld [vmem:[%s2 + $0x220] sm:$0xff]
  %v3547 = vld [vmem:[%s2 + $0x228] sm:$0xff]
  %v3548 = vld [vmem:[%s2 + $0x230] sm:$0xff]
  %v3549 = vld [vmem:[%s2 + $0x238] sm:$0xff]
  %v3550 = vld [vmem:[%s2 + $0x240] sm:$0xff]
  %v3551 = vld [vmem:[%s2 + $0x248] sm:$0xff]
  %v3552 = vld [vmem:[%s2 + $0x250] sm:$0xff]
  %v3553 = vld [vmem:[%s2 + $0x258] sm:$0xff]
  %v3554 = vld [vmem:[%s2 + $0x260] sm:$0xff]
  %v3555 = vld [vmem:[%s2 + $0x268] sm:$0xff]
  %v3556 = vld [vmem:[%s2 + $0x270] sm:$0xff]
  %v3557 = vld [vmem:[%s2 + $0x278] sm:$0xff]
  %v3558 = vld [vmem:[%s2 + $0x280] sm:$0xff]
  %v3559 = vld [vmem:[%s2 + $0x288] sm:$0xff]
  %v3560 = vld [vmem:[%s2 + $0x290] sm:$0xff]
  %v3561 = vld [vmem:[%s2 + $0x298] sm:$0xff]
  %v3562 = vld [vmem:[%s2 + $0x2a0] sm:$0xff]
  %v3563 = vld [vmem:[%s2 + $0x2a8] sm:$0xff]
  %v3564 = vld [vmem:[%s2 + $0x2b0] sm:$0xff]
  %v3565 = vld [vmem:[%s2 + $0x2b8] sm:$0xff]
  %v3566 = vld [vmem:[%s2 + $0x2c0] sm:$0xff]
  %v3567 = vld [vmem:[%s2 + $0x2c8] sm:$0xff]
  %v3568 = vld [vmem:[%s2 + $0x2d0] sm:$0xff]
  %v3569 = vld [vmem:[%s2 + $0x2d8] sm:$0xff]
  %v3570 = vld [vmem:[%s2 + $0x2e0] sm:$0xff]
  %v3571 = vld [vmem:[%s2 + $0x2e8] sm:$0xff]
  %v3572 = vld [vmem:[%s2 + $0x2f0] sm:$0xff]
  %v3573 = vld [vmem:[%s2 + $0x2f8] sm:$0xff]
  %v3574 = vld [vmem:[%s2 + $0x300] sm:$0xff]
  %v3575 = vld [vmem:[%s2 + $0x308] sm:$0xff]
  %v3576 = vld [vmem:[%s2 + $0x310] sm:$0xff]
  %v3577 = vld [vmem:[%s2 + $0x318] sm:$0xff]
  %v3578 = vld [vmem:[%s2 + $0x320] sm:$0xff]
  %v3579 = vld [vmem:[%s2 + $0x328] sm:$0xff]
  %v3580 = vld [vmem:[%s2 + $0x330] sm:$0xff]
  %v3581 = vld [vmem:[%s2 + $0x338] sm:$0xff]
  %v3582 = vld [vmem:[%s2 + $0x340] sm:$0xff]
  %v3583 = vld [vmem:[%s2 + $0x348] sm:$0xff]
  %v3584 = vld [vmem:[%s2 + $0x350] sm:$0xff]
  %v3585 = vld [vmem:[%s2 + $0x358] sm:$0xff]
  %v3586 = vld [vmem:[%s2 + $0x360] sm:$0xff]
  %v3587 = vld [vmem:[%s2 + $0x368] sm:$0xff]
  %v3588 = vld [vmem:[%s2 + $0x370] sm:$0xff]
  %v3589 = vld [vmem:[%s2 + $0x378] sm:$0xff]
  %v3590 = vld [vmem:[%s2 + $0x380] sm:$0xff]
  %v3591 = vld [vmem:[%s2 + $0x388] sm:$0xff]
  %v3592 = vld [vmem:[%s2 + $0x390] sm:$0xff]
  %v3593 = vld [vmem:[%s2 + $0x398] sm:$0xff]
  %v3594 = vld [vmem:[%s2 + $0x3a0] sm:$0xff]
  %v3595 = vld [vmem:[%s2 + $0x3a8] sm:$0xff]
  %v3596 = vld [vmem:[%s2 + $0x3b0] sm:$0xff]
  %v3597 = vld [vmem:[%s2 + $0x3b8] sm:$0xff]
  %v3598 = vld [vmem:[%s2 + $0x3c0] sm:$0xff]
  %v3599 = vld [vmem:[%s2 + $0x3c8] sm:$0xff]
  %v3600 = vld [vmem:[%s2 + $0x3d0] sm:$0xff]
  %v3601 = vld [vmem:[%s2 + $0x3d8] sm:$0xff]
  %v3602 = vld [vmem:[%s2 + $0x3e0] sm:$0xff]
  %v3603 = vld [vmem:[%s2 + $0x3e8] sm:$0xff]
  %v3604 = vld [vmem:[%s2 + $0x3f0] sm:$0xff]
  %v3605 = vld [vmem:[%s2 + $0x3f8] sm:$0xff]
  %v3606 = vld [vmem:[%s2 + $0x400] sm:$0xff]
  %v3607 = vld [vmem:[%s2 + $0x408] sm:$0xff]
  %v3608 = vld [vmem:[%s2 + $0x410] sm:$0xff]
  %v3609 = vld [vmem:[%s2 + $0x418] sm:$0xff]
  %v3610 = vld [vmem:[%s2 + $0x420] sm:$0xff]
  %v3611 = vld [vmem:[%s2 + $0x428] sm:$0xff]
  %v3612 = vld [vmem:[%s2 + $0x430] sm:$0xff]
  %v3613 = vld [vmem:[%s2 + $0x438] sm:$0xff]
  %v3614 = vld [vmem:[%s2 + $0x440] sm:$0xff]
  %v3615 = vld [vmem:[%s2 + $0x448] sm:$0xff]
  %v3616 = vld [vmem:[%s2 + $0x450] sm:$0xff]
  %v3617 = vld [vmem:[%s2 + $0x458] sm:$0xff]
  %v3618 = vld [vmem:[%s2 + $0x460] sm:$0xff]
  %v3619 = vld [vmem:[%s2 + $0x468] sm:$0xff]
  %v3620 = vld [vmem:[%s2 + $0x470] sm:$0xff]
  %v3621 = vld [vmem:[%s2 + $0x478] sm:$0xff]
  %v3622 = vld [vmem:[%s2 + $0x480] sm:$0xff]
  %v3623 = vld [vmem:[%s2 + $0x488] sm:$0xff]
  %v3624 = vld [vmem:[%s2 + $0x490] sm:$0xff]
  %v3625 = vld [vmem:[%s2 + $0x498] sm:$0xff]
  %v3626 = vld [vmem:[%s2 + $0x4a0] sm:$0xff]
  %v3627 = vld [vmem:[%s2 + $0x4a8] sm:$0xff]
  %v3628 = vld [vmem:[%s2 + $0x4b0] sm:$0xff]
  %v3629 = vld [vmem:[%s2 + $0x4b8] sm:$0xff]
  %v3630 = vld [vmem:[%s2 + $0x4c0] sm:$0xff]
  %v3631 = vld [vmem:[%s2 + $0x4c8] sm:$0xff]
  %v3632 = vld [vmem:[%s2 + $0x4d0] sm:$0xff]
  %v3633 = vld [vmem:[%s2 + $0x4d8] sm:$0xff]
  %v3634 = vld [vmem:[%s2 + $0x4e0] sm:$0xff]
  %v3635 = vld [vmem:[%s2 + $0x4e8] sm:$0xff]
  %v3636 = vld [vmem:[%s2 + $0x4f0] sm:$0xff]
  %v3637 = vld [vmem:[%s2 + $0x4f8] sm:$0xff]
  %v3638 = vld [vmem:[%s2 + $0x500] sm:$0xff]
  %v3639 = vld [vmem:[%s2 + $0x508] sm:$0xff]
  %v3640 = vld [vmem:[%s2 + $0x510] sm:$0xff]
  %v3641 = vld [vmem:[%s2 + $0x518] sm:$0xff]
  %v3642 = vld [vmem:[%s2 + $0x520] sm:$0xff]
  %v3643 = vld [vmem:[%s2 + $0x528] sm:$0xff]
  %v3644 = vld [vmem:[%s2 + $0x530] sm:$0xff]
  %v3645 = vld [vmem:[%s2 + $0x538] sm:$0xff]
  %v3646 = vld [vmem:[%s2 + $0x540] sm:$0xff]
  %v3647 = vld [vmem:[%s2 + $0x548] sm:$0xff]
  %v3648 = vld [vmem:[%s2 + $0x550] sm:$0xff]
  %v3649 = vld [vmem:[%s2 + $0x558] sm:$0xff]
  %v3650 = vld [vmem:[%s2 + $0x560] sm:$0xff]
  %v3651 = vld [vmem:[%s2 + $0x568] sm:$0xff]
  %v3652 = vld [vmem:[%s2 + $0x570] sm:$0xff]
  %v3653 = vld [vmem:[%s2 + $0x578] sm:$0xff]
  %v3654 = vld [vmem:[%s2 + $0x580] sm:$0xff]
  %v3655 = vld [vmem:[%s2 + $0x588] sm:$0xff]
  %v3656 = vld [vmem:[%s2 + $0x590] sm:$0xff]
  %v3657 = vld [vmem:[%s2 + $0x598] sm:$0xff]
  %v3658 = vld [vmem:[%s2 + $0x5a0] sm:$0xff]
  %v3659 = vld [vmem:[%s2 + $0x5a8] sm:$0xff]
  %v3660 = vld [vmem:[%s2 + $0x5b0] sm:$0xff]
  %v3661 = vld [vmem:[%s2 + $0x5b8] sm:$0xff]
  %v3662 = vld [vmem:[%s2 + $0x5c0] sm:$0xff]
  %v3663 = vld [vmem:[%s2 + $0x5c8] sm:$0xff]
  %v3664 = vld [vmem:[%s2 + $0x5d0] sm:$0xff]
  %v3665 = vld [vmem:[%s2 + $0x5d8] sm:$0xff]
  %v3666 = vld [vmem:[%s2 + $0x5e0] sm:$0xff]
  %v3667 = vld [vmem:[%s2 + $0x5e8] sm:$0xff]
  %v3668 = vld [vmem:[%s2 + $0x5f0] sm:$0xff]
  %v3669 = vld [vmem:[%s2 + $0x5f8] sm:$0xff]
  %v3670 = vld [vmem:[%s2 + $0x600] sm:$0xff]
  %v3671 = vld [vmem:[%s2 + $0x608] sm:$0xff]
  %v3672 = vld [vmem:[%s2 + $0x610] sm:$0xff]
  %v3673 = vld [vmem:[%s2 + $0x618] sm:$0xff]
  %v3674 = vld [vmem:[%s2 + $0x620] sm:$0xff]
  %v3675 = vld [vmem:[%s2 + $0x628] sm:$0xff]
  %v3676 = vld [vmem:[%s2 + $0x630] sm:$0xff]
  %v3677 = vld [vmem:[%s2 + $0x638] sm:$0xff]
  %v3678 = vld [vmem:[%s2 + $0x640] sm:$0xff]
  %v3679 = vld [vmem:[%s2 + $0x648] sm:$0xff]
  %v3680 = vld [vmem:[%s2 + $0x650] sm:$0xff]
  %v3681 = vld [vmem:[%s2 + $0x658] sm:$0xff]
  %v3682 = vld [vmem:[%s2 + $0x660] sm:$0xff]
  %v3683 = vld [vmem:[%s2 + $0x668] sm:$0xff]
  %v3684 = vld [vmem:[%s2 + $0x670] sm:$0xff]
  %v3685 = vld [vmem:[%s2 + $0x678] sm:$0xff]
  %v3686 = vld [vmem:[%s2 + $0x680] sm:$0xff]
  %v3687 = vld [vmem:[%s2 + $0x688] sm:$0xff]
  %v3688 = vld [vmem:[%s2 + $0x690] sm:$0xff]
  %v3689 = vld [vmem:[%s2 + $0x698] sm:$0xff]
  %v3690 = vld [vmem:[%s2 + $0x6a0] sm:$0xff]
  %v3691 = vld [vmem:[%s2 + $0x6a8] sm:$0xff]
  %v3692 = vld [vmem:[%s2 + $0x6b0] sm:$0xff]
  %v3693 = vld [vmem:[%s2 + $0x6b8] sm:$0xff]
  %v3694 = vld [vmem:[%s2 + $0x6c0] sm:$0xff]
  %v3695 = vld [vmem:[%s2 + $0x6c8] sm:$0xff]
  %v3696 = vld [vmem:[%s2 + $0x6d0] sm:$0xff]
  %v3697 = vld [vmem:[%s2 + $0x6d8] sm:$0xff]
  %v3698 = vld [vmem:[%s2 + $0x6e0] sm:$0xff]
  %v3699 = vld [vmem:[%s2 + $0x6e8] sm:$0xff]
  %v3700 = vld [vmem:[%s2 + $0x6f0] sm:$0xff]
  %v3701 = vld [vmem:[%s2 + $0x6f8] sm:$0xff]
  %v3702 = vld [vmem:[%s2 + $0x700] sm:$0xff]
  %v3703 = vld [vmem:[%s2 + $0x708] sm:$0xff]
  %v3704 = vld [vmem:[%s2 + $0x710] sm:$0xff]
  %v3705 = vld [vmem:[%s2 + $0x718] sm:$0xff]
  %v3706 = vld [vmem:[%s2 + $0x720] sm:$0xff]
  %v3707 = vld [vmem:[%s2 + $0x728] sm:$0xff]
  %v3708 = vld [vmem:[%s2 + $0x730] sm:$0xff]
  %v3709 = vld [vmem:[%s2 + $0x738] sm:$0xff]
  %v3710 = vld [vmem:[%s2 + $0x740] sm:$0xff]
  %v3711 = vld [vmem:[%s2 + $0x748] sm:$0xff]
  %v3712 = vld [vmem:[%s2 + $0x750] sm:$0xff]
  %v3713 = vld [vmem:[%s2 + $0x758] sm:$0xff]
  %v3714 = vld [vmem:[%s2 + $0x760] sm:$0xff]
  %v3715 = vld [vmem:[%s2 + $0x768] sm:$0xff]
  %v3716 = vld [vmem:[%s2 + $0x770] sm:$0xff]
  %v3717 = vld [vmem:[%s2 + $0x778] sm:$0xff]
  %v3718 = vld [vmem:[%s2 + $0x780] sm:$0xff]
  %v3719 = vld [vmem:[%s2 + $0x788] sm:$0xff]
  %v3720 = vld [vmem:[%s2 + $0x790] sm:$0xff]
  %v3721 = vld [vmem:[%s2 + $0x798] sm:$0xff]
  %v3722 = vld [vmem:[%s2 + $0x7a0] sm:$0xff]
  %v3723 = vld [vmem:[%s2 + $0x7a8] sm:$0xff]
  %v3724 = vld [vmem:[%s2 + $0x7b0] sm:$0xff]
  %v3725 = vld [vmem:[%s2 + $0x7b8] sm:$0xff]
  %v3726 = vld [vmem:[%s2 + $0x7c0] sm:$0xff]
  %v3727 = vld [vmem:[%s2 + $0x7c8] sm:$0xff]
  %v3728 = vld [vmem:[%s2 + $0x7d0] sm:$0xff]
  %v3729 = vld [vmem:[%s2 + $0x7d8] sm:$0xff]
  %v3730 = vld [vmem:[%s2 + $0x7e0] sm:$0xff]
  %v3731 = vld [vmem:[%s2 + $0x7e8] sm:$0xff]
  %v3732 = vld [vmem:[%s2 + $0x7f0] sm:$0xff]
  %v3733 = vld [vmem:[%s2 + $0x7f8] sm:$0xff]
  %v3734 = vld [vmem:[%s2 + $0x800] sm:$0xff]
  %v3735 = vld [vmem:[%s2 + $0x808] sm:$0xff]
  %v3736 = vld [vmem:[%s2 + $0x810] sm:$0xff]
  %v3737 = vld [vmem:[%s2 + $0x818] sm:$0xff]
  %v3738 = vld [vmem:[%s2 + $0x820] sm:$0xff]
  %v3739 = vld [vmem:[%s2 + $0x828] sm:$0xff]
  %v3740 = vld [vmem:[%s2 + $0x830] sm:$0xff]
  %v3741 = vld [vmem:[%s2 + $0x838] sm:$0xff]
  %v3742 = vld [vmem:[%s2 + $0x840] sm:$0xff]
  %v3743 = vld [vmem:[%s2 + $0x848] sm:$0xff]
  %v3744 = vld [vmem:[%s2 + $0x850] sm:$0xff]
  %v3745 = vld [vmem:[%s2 + $0x858] sm:$0xff]
  %v3746 = vld [vmem:[%s2 + $0x860] sm:$0xff]
  %v3747 = vld [vmem:[%s2 + $0x868] sm:$0xff]
  %v3748 = vld [vmem:[%s2 + $0x870] sm:$0xff]
  %v3749 = vld [vmem:[%s2 + $0x878] sm:$0xff]
  %v3750 = vld [vmem:[%s2 + $0x880] sm:$0xff]
  %v3751 = vld [vmem:[%s2 + $0x888] sm:$0xff]
  %v3752 = vld [vmem:[%s2 + $0x890] sm:$0xff]
  %v3753 = vld [vmem:[%s2 + $0x898] sm:$0xff]
  %v3754 = vld [vmem:[%s2 + $0x8a0] sm:$0xff]
  %v3755 = vld [vmem:[%s2 + $0x8a8] sm:$0xff]
  %v3756 = vld [vmem:[%s2 + $0x8b0] sm:$0xff]
  %v3757 = vld [vmem:[%s2 + $0x8b8] sm:$0xff]
  %v3758 = vld [vmem:[%s2 + $0x8c0] sm:$0xff]
  %v3759 = vld [vmem:[%s2 + $0x8c8] sm:$0xff]
  %v3760 = vld [vmem:[%s2 + $0x8d0] sm:$0xff]
  %v3761 = vld [vmem:[%s2 + $0x8d8] sm:$0xff]
  %v3762 = vld [vmem:[%s2 + $0x8e0] sm:$0xff]
  %v3763 = vld [vmem:[%s2 + $0x8e8] sm:$0xff]
  %v3764 = vld [vmem:[%s2 + $0x8f0] sm:$0xff]
  %v3765 = vld [vmem:[%s2 + $0x8f8] sm:$0xff]
  %v3766 = vmul.f32 %v3478, %v2903
  %v3767 = vmul.f32 %v3479, %v2905
  %v3768 = vmul.f32 %v3480, %v2907
  %v3769 = vmul.f32 %v3481, %v2909
  %v3770 = vmul.f32 %v3482, %v2911
  %v3771 = vmul.f32 %v3483, %v2913
  %v3772 = vmul.f32 %v3484, %v2915
  %v3773 = vmul.f32 %v3485, %v2917
  %v3774 = vmul.f32 %v3486, %v2919
  %v3775 = vmul.f32 %v3487, %v2921
  %v3776 = vmul.f32 %v3488, %v2923
  %v3777 = vmul.f32 %v3489, %v2925
  %v3778 = vmul.f32 %v3490, %v2927
  %v3779 = vmul.f32 %v3491, %v2929
  %v3780 = vmul.f32 %v3492, %v2931
  %v3781 = vmul.f32 %v3493, %v2933
  %v3782 = vmul.f32 %v3494, %v2935
  %v3783 = vmul.f32 %v3495, %v2937
  %v3784 = vmul.f32 %v3496, %v2939
  %v3785 = vmul.f32 %v3497, %v2941
  %v3786 = vmul.f32 %v3498, %v2943
  %v3787 = vmul.f32 %v3499, %v2945
  %v3788 = vmul.f32 %v3500, %v2947
  %v3789 = vmul.f32 %v3501, %v2949
  %v3790 = vmul.f32 %v3502, %v2951
  %v3791 = vmul.f32 %v3503, %v2953
  %v3792 = vmul.f32 %v3504, %v2955
  %v3793 = vmul.f32 %v3505, %v2957
  %v3794 = vmul.f32 %v3506, %v2959
  %v3795 = vmul.f32 %v3507, %v2961
  %v3796 = vmul.f32 %v3508, %v2963
  %v3797 = vmul.f32 %v3509, %v2965
  %v3798 = vmul.f32 %v3510, %v2967
  %v3799 = vmul.f32 %v3511, %v2969
  %v3800 = vmul.f32 %v3512, %v2971
  %v3801 = vmul.f32 %v3513, %v2973
  %v3802 = vmul.f32 %v3514, %v2975
  %v3803 = vmul.f32 %v3515, %v2977
  %v3804 = vmul.f32 %v3516, %v2979
  %v3805 = vmul.f32 %v3517, %v2981
  %v3806 = vmul.f32 %v3518, %v2983
  %v3807 = vmul.f32 %v3519, %v2985
  %v3808 = vmul.f32 %v3520, %v2987
  %v3809 = vmul.f32 %v3521, %v2989
  %v3810 = vmul.f32 %v3522, %v2991
  %v3811 = vmul.f32 %v3523, %v2993
  %v3812 = vmul.f32 %v3524, %v2995
  %v3813 = vmul.f32 %v3525, %v2997
  %v3814 = vmul.f32 %v3526, %v2999
  %v3815 = vmul.f32 %v3527, %v3001
  %v3816 = vmul.f32 %v3528, %v3003
  %v3817 = vmul.f32 %v3529, %v3005
  %v3818 = vmul.f32 %v3530, %v3007
  %v3819 = vmul.f32 %v3531, %v3009
  %v3820 = vmul.f32 %v3532, %v3011
  %v3821 = vmul.f32 %v3533, %v3013
  %v3822 = vmul.f32 %v3534, %v3015
  %v3823 = vmul.f32 %v3535, %v3017
  %v3824 = vmul.f32 %v3536, %v3019
  %v3825 = vmul.f32 %v3537, %v3021
  %v3826 = vmul.f32 %v3538, %v3023
  %v3827 = vmul.f32 %v3539, %v3025
  %v3828 = vmul.f32 %v3540, %v3027
  %v3829 = vmul.f32 %v3541, %v3029
  %v3830 = vmul.f32 %v3542, %v3031
  %v3831 = vmul.f32 %v3543, %v3033
  %v3832 = vmul.f32 %v3544, %v3035
  %v3833 = vmul.f32 %v3545, %v3037
  %v3834 = vmul.f32 %v3546, %v3039
  %v3835 = vmul.f32 %v3547, %v3041
  %v3836 = vmul.f32 %v3548, %v3043
  %v3837 = vmul.f32 %v3549, %v3045
  %v3838 = vmul.f32 %v3550, %v3047
  %v3839 = vmul.f32 %v3551, %v3049
  %v3840 = vmul.f32 %v3552, %v3051
  %v3841 = vmul.f32 %v3553, %v3053
  %v3842 = vmul.f32 %v3554, %v3055
  %v3843 = vmul.f32 %v3555, %v3057
  %v3844 = vmul.f32 %v3556, %v3059
  %v3845 = vmul.f32 %v3557, %v3061
  %v3846 = vmul.f32 %v3558, %v3063
  %v3847 = vmul.f32 %v3559, %v3065
  %v3848 = vmul.f32 %v3560, %v3067
  %v3849 = vmul.f32 %v3561, %v3069
  %v3850 = vmul.f32 %v3562, %v3071
  %v3851 = vmul.f32 %v3563, %v3073
  %v3852 = vmul.f32 %v3564, %v3075
  %v3853 = vmul.f32 %v3565, %v3077
  %v3854 = vmul.f32 %v3566, %v3079
  %v3855 = vmul.f32 %v3567, %v3081
  %v3856 = vmul.f32 %v3568, %v3083
  %v3857 = vmul.f32 %v3569, %v3085
  %v3858 = vmul.f32 %v3570, %v3087
  %v3859 = vmul.f32 %v3571, %v3089
  %v3860 = vmul.f32 %v3572, %v3091
  %v3861 = vmul.f32 %v3573, %v3093
  %v3862 = vmul.f32 %v3574, %v3095
  %v3863 = vmul.f32 %v3575, %v3097
  %v3864 = vmul.f32 %v3576, %v3099
  %v3865 = vmul.f32 %v3577, %v3101
  %v3866 = vmul.f32 %v3578, %v3103
  %v3867 = vmul.f32 %v3579, %v3105
  %v3868 = vmul.f32 %v3580, %v3107
  %v3869 = vmul.f32 %v3581, %v3109
  %v3870 = vmul.f32 %v3582, %v3111
  %v3871 = vmul.f32 %v3583, %v3113
  %v3872 = vmul.f32 %v3584, %v3115
  %v3873 = vmul.f32 %v3585, %v3117
  %v3874 = vmul.f32 %v3586, %v3119
  %v3875 = vmul.f32 %v3587, %v3121
  %v3876 = vmul.f32 %v3588, %v3123
  %v3877 = vmul.f32 %v3589, %v3125
  %v3878 = vmul.f32 %v3590, %v3127
  %v3879 = vmul.f32 %v3591, %v3129
  %v3880 = vmul.f32 %v3592, %v3131
  %v3881 = vmul.f32 %v3593, %v3133
  %v3882 = vmul.f32 %v3594, %v3135
  %v3883 = vmul.f32 %v3595, %v3137
  %v3884 = vmul.f32 %v3596, %v3139
  %v3885 = vmul.f32 %v3597, %v3141
  %v3886 = vmul.f32 %v3598, %v3143
  %v3887 = vmul.f32 %v3599, %v3145
  %v3888 = vmul.f32 %v3600, %v3147
  %v3889 = vmul.f32 %v3601, %v3149
  %v3890 = vmul.f32 %v3602, %v3151
  %v3891 = vmul.f32 %v3603, %v3153
  %v3892 = vmul.f32 %v3604, %v3155
  %v3893 = vmul.f32 %v3605, %v3157
  %v3894 = vmul.f32 %v3606, %v3159
  %v3895 = vmul.f32 %v3607, %v3161
  %v3896 = vmul.f32 %v3608, %v3163
  %v3897 = vmul.f32 %v3609, %v3165
  %v3898 = vmul.f32 %v3610, %v3167
  %v3899 = vmul.f32 %v3611, %v3169
  %v3900 = vmul.f32 %v3612, %v3171
  %v3901 = vmul.f32 %v3613, %v3173
  %v3902 = vmul.f32 %v3614, %v3175
  %v3903 = vmul.f32 %v3615, %v3177
  %v3904 = vmul.f32 %v3616, %v3179
  %v3905 = vmul.f32 %v3617, %v3181
  %v3906 = vmul.f32 %v3618, %v3183
  %v3907 = vmul.f32 %v3619, %v3185
  %v3908 = vmul.f32 %v3620, %v3187
  %v3909 = vmul.f32 %v3621, %v3189
  %v3910 = vmul.f32 %v3622, %v3191
  %v3911 = vmul.f32 %v3623, %v3193
  %v3912 = vmul.f32 %v3624, %v3195
  %v3913 = vmul.f32 %v3625, %v3197
  %v3914 = vmul.f32 %v3626, %v3199
  %v3915 = vmul.f32 %v3627, %v3201
  %v3916 = vmul.f32 %v3628, %v3203
  %v3917 = vmul.f32 %v3629, %v3205
  %v3918 = vmul.f32 %v3630, %v3207
  %v3919 = vmul.f32 %v3631, %v3209
  %v3920 = vmul.f32 %v3632, %v3211
  %v3921 = vmul.f32 %v3633, %v3213
  %v3922 = vmul.f32 %v3634, %v3215
  %v3923 = vmul.f32 %v3635, %v3217
  %v3924 = vmul.f32 %v3636, %v3219
  %v3925 = vmul.f32 %v3637, %v3221
  %v3926 = vmul.f32 %v3638, %v3223
  %v3927 = vmul.f32 %v3639, %v3225
  %v3928 = vmul.f32 %v3640, %v3227
  %v3929 = vmul.f32 %v3641, %v3229
  %v3930 = vmul.f32 %v3642, %v3231
  %v3931 = vmul.f32 %v3643, %v3233
  %v3932 = vmul.f32 %v3644, %v3235
  %v3933 = vmul.f32 %v3645, %v3237
  %v3934 = vmul.f32 %v3646, %v3239
  %v3935 = vmul.f32 %v3647, %v3241
  %v3936 = vmul.f32 %v3648, %v3243
  %v3937 = vmul.f32 %v3649, %v3245
  %v3938 = vmul.f32 %v3650, %v3247
  %v3939 = vmul.f32 %v3651, %v3249
  %v3940 = vmul.f32 %v3652, %v3251
  %v3941 = vmul.f32 %v3653, %v3253
  %v3942 = vmul.f32 %v3654, %v3255
  %v3943 = vmul.f32 %v3655, %v3257
  %v3944 = vmul.f32 %v3656, %v3259
  %v3945 = vmul.f32 %v3657, %v3261
  %v3946 = vmul.f32 %v3658, %v3263
  %v3947 = vmul.f32 %v3659, %v3265
  %v3948 = vmul.f32 %v3660, %v3267
  %v3949 = vmul.f32 %v3661, %v3269
  %v3950 = vmul.f32 %v3662, %v3271
  %v3951 = vmul.f32 %v3663, %v3273
  %v3952 = vmul.f32 %v3664, %v3275
  %v3953 = vmul.f32 %v3665, %v3277
  %v3954 = vmul.f32 %v3666, %v3279
  %v3955 = vmul.f32 %v3667, %v3281
  %v3956 = vmul.f32 %v3668, %v3283
  %v3957 = vmul.f32 %v3669, %v3285
  %v3958 = vmul.f32 %v3670, %v3287
  %v3959 = vmul.f32 %v3671, %v3289
  %v3960 = vmul.f32 %v3672, %v3291
  %v3961 = vmul.f32 %v3673, %v3293
  %v3962 = vmul.f32 %v3674, %v3295
  %v3963 = vmul.f32 %v3675, %v3297
  %v3964 = vmul.f32 %v3676, %v3299
  %v3965 = vmul.f32 %v3677, %v3301
  %v3966 = vmul.f32 %v3678, %v3303
  %v3967 = vmul.f32 %v3679, %v3305
  %v3968 = vmul.f32 %v3680, %v3307
  %v3969 = vmul.f32 %v3681, %v3309
  %v3970 = vmul.f32 %v3682, %v3311
  %v3971 = vmul.f32 %v3683, %v3313
  %v3972 = vmul.f32 %v3684, %v3315
  %v3973 = vmul.f32 %v3685, %v3317
  %v3974 = vmul.f32 %v3686, %v3319
  %v3975 = vmul.f32 %v3687, %v3321
  %v3976 = vmul.f32 %v3688, %v3323
  %v3977 = vmul.f32 %v3689, %v3325
  %v3978 = vmul.f32 %v3690, %v3327
  %v3979 = vmul.f32 %v3691, %v3329
  %v3980 = vmul.f32 %v3692, %v3331
  %v3981 = vmul.f32 %v3693, %v3333
  %v3982 = vmul.f32 %v3694, %v3335
  %v3983 = vmul.f32 %v3695, %v3337
  %v3984 = vmul.f32 %v3696, %v3339
  %v3985 = vmul.f32 %v3697, %v3341
  %v3986 = vmul.f32 %v3698, %v3343
  %v3987 = vmul.f32 %v3699, %v3345
  %v3988 = vmul.f32 %v3700, %v3347
  %v3989 = vmul.f32 %v3701, %v3349
  %v3990 = vmul.f32 %v3702, %v3351
  %v3991 = vmul.f32 %v3703, %v3353
  %v3992 = vmul.f32 %v3704, %v3355
  %v3993 = vmul.f32 %v3705, %v3357
  %v3994 = vmul.f32 %v3706, %v3359
  %v3995 = vmul.f32 %v3707, %v3361
  %v3996 = vmul.f32 %v3708, %v3363
  %v3997 = vmul.f32 %v3709, %v3365
  %v3998 = vmul.f32 %v3710, %v3367
  %v3999 = vmul.f32 %v3711, %v3369
  %v4000 = vmul.f32 %v3712, %v3371
  %v4001 = vmul.f32 %v3713, %v3373
  %v4002 = vmul.f32 %v3714, %v3375
  %v4003 = vmul.f32 %v3715, %v3377
  %v4004 = vmul.f32 %v3716, %v3379
  %v4005 = vmul.f32 %v3717, %v3381
  %v4006 = vmul.f32 %v3718, %v3383
  %v4007 = vmul.f32 %v3719, %v3385
  %v4008 = vmul.f32 %v3720, %v3387
  %v4009 = vmul.f32 %v3721, %v3389
  %v4010 = vmul.f32 %v3722, %v3391
  %v4011 = vmul.f32 %v3723, %v3393
  %v4012 = vmul.f32 %v3724, %v3395
  %v4013 = vmul.f32 %v3725, %v3397
  %v4014 = vmul.f32 %v3726, %v3399
  %v4015 = vmul.f32 %v3727, %v3401
  %v4016 = vmul.f32 %v3728, %v3403
  %v4017 = vmul.f32 %v3729, %v3405
  %v4018 = vmul.f32 %v3730, %v3407
  %v4019 = vmul.f32 %v3731, %v3409
  %v4020 = vmul.f32 %v3732, %v3411
  %v4021 = vmul.f32 %v3733, %v3413
  %v4022 = vmul.f32 %v3734, %v3415
  %v4023 = vmul.f32 %v3735, %v3417
  %v4024 = vmul.f32 %v3736, %v3419
  %v4025 = vmul.f32 %v3737, %v3421
  %v4026 = vmul.f32 %v3738, %v3423
  %v4027 = vmul.f32 %v3739, %v3425
  %v4028 = vmul.f32 %v3740, %v3427
  %v4029 = vmul.f32 %v3741, %v3429
  %v4030 = vmul.f32 %v3742, %v3431
  %v4031 = vmul.f32 %v3743, %v3433
  %v4032 = vmul.f32 %v3744, %v3435
  %v4033 = vmul.f32 %v3745, %v3437
  %v4034 = vmul.f32 %v3746, %v3439
  %v4035 = vmul.f32 %v3747, %v3441
  %v4036 = vmul.f32 %v3748, %v3443
  %v4037 = vmul.f32 %v3749, %v3445
  %v4038 = vmul.f32 %v3750, %v3447
  %v4039 = vmul.f32 %v3751, %v3449
  %v4040 = vmul.f32 %v3752, %v3451
  %v4041 = vmul.f32 %v3753, %v3453
  %v4042 = vmul.f32 %v3754, %v3455
  %v4043 = vmul.f32 %v3755, %v3457
  %v4044 = vmul.f32 %v3756, %v3459
  %v4045 = vmul.f32 %v3757, %v3461
  %v4046 = vmul.f32 %v3758, %v3463
  %v4047 = vmul.f32 %v3759, %v3465
  %v4048 = vmul.f32 %v3760, %v3467
  %v4049 = vmul.f32 %v3761, %v3469
  %v4050 = vmul.f32 %v3762, %v3471
  %v4051 = vmul.f32 %v3763, %v3473
  %v4052 = vmul.f32 %v3764, %v3475
  %v4053 = vmul.f32 %v3765, %v3477
  %vm4054 = vcmask 400384
  %4055 = vst.msk [vmem:[%s3] sm:$0xff] %vm4054, %v3766
  %4056 = vst.msk [vmem:[%s3 + $0x8] sm:$0xff] %vm4054, %v3767
  %4057 = vst.msk [vmem:[%s3 + $0x10] sm:$0xff] %vm4054, %v3768
  %4058 = vst.msk [vmem:[%s3 + $0x18] sm:$0xff] %vm4054, %v3769
  %4059 = vst.msk [vmem:[%s3 + $0x20] sm:$0xff] %vm4054, %v3770
  %4060 = vst.msk [vmem:[%s3 + $0x28] sm:$0xff] %vm4054, %v3771
  %4061 = vst.msk [vmem:[%s3 + $0x30] sm:$0xff] %vm4054, %v3772
  %4062 = vst.msk [vmem:[%s3 + $0x38] sm:$0xff] %vm4054, %v3773
  %4063 = vst.msk [vmem:[%s3 + $0x40] sm:$0xff] %vm4054, %v3774
  %4064 = vst.msk [vmem:[%s3 + $0x48] sm:$0xff] %vm4054, %v3775
  %4065 = vst.msk [vmem:[%s3 + $0x50] sm:$0xff] %vm4054, %v3776
  %4066 = vst.msk [vmem:[%s3 + $0x58] sm:$0xff] %vm4054, %v3777
  %4067 = vst.msk [vmem:[%s3 + $0x60] sm:$0xff] %vm4054, %v3778
  %4068 = vst.msk [vmem:[%s3 + $0x68] sm:$0xff] %vm4054, %v3779
  %4069 = vst.msk [vmem:[%s3 + $0x70] sm:$0xff] %vm4054, %v3780
  %4070 = vst.msk [vmem:[%s3 + $0x78] sm:$0xff] %vm4054, %v3781
  %4071 = vst.msk [vmem:[%s3 + $0x80] sm:$0xff] %vm4054, %v3782
  %4072 = vst.msk [vmem:[%s3 + $0x88] sm:$0xff] %vm4054, %v3783
  %4073 = vst.msk [vmem:[%s3 + $0x90] sm:$0xff] %vm4054, %v3784
  %4074 = vst.msk [vmem:[%s3 + $0x98] sm:$0xff] %vm4054, %v3785
  %4075 = vst.msk [vmem:[%s3 + $0xa0] sm:$0xff] %vm4054, %v3786
  %4076 = vst.msk [vmem:[%s3 + $0xa8] sm:$0xff] %vm4054, %v3787
  %4077 = vst.msk [vmem:[%s3 + $0xb0] sm:$0xff] %vm4054, %v3788
  %4078 = vst.msk [vmem:[%s3 + $0xb8] sm:$0xff] %vm4054, %v3789
  %4079 = vst.msk [vmem:[%s3 + $0xc0] sm:$0xff] %vm4054, %v3790
  %4080 = vst.msk [vmem:[%s3 + $0xc8] sm:$0xff] %vm4054, %v3791
  %4081 = vst.msk [vmem:[%s3 + $0xd0] sm:$0xff] %vm4054, %v3792
  %4082 = vst.msk [vmem:[%s3 + $0xd8] sm:$0xff] %vm4054, %v3793
  %4083 = vst.msk [vmem:[%s3 + $0xe0] sm:$0xff] %vm4054, %v3794
  %4084 = vst.msk [vmem:[%s3 + $0xe8] sm:$0xff] %vm4054, %v3795
  %4085 = vst.msk [vmem:[%s3 + $0xf0] sm:$0xff] %vm4054, %v3796
  %4086 = vst.msk [vmem:[%s3 + $0xf8] sm:$0xff] %vm4054, %v3797
  %4087 = vst.msk [vmem:[%s3 + $0x100] sm:$0xff] %vm4054, %v3798
  %4088 = vst.msk [vmem:[%s3 + $0x108] sm:$0xff] %vm4054, %v3799
  %4089 = vst.msk [vmem:[%s3 + $0x110] sm:$0xff] %vm4054, %v3800
  %4090 = vst.msk [vmem:[%s3 + $0x118] sm:$0xff] %vm4054, %v3801
  %4091 = vst.msk [vmem:[%s3 + $0x120] sm:$0xff] %vm4054, %v3802
  %4092 = vst.msk [vmem:[%s3 + $0x128] sm:$0xff] %vm4054, %v3803
  %4093 = vst.msk [vmem:[%s3 + $0x130] sm:$0xff] %vm4054, %v3804
  %4094 = vst.msk [vmem:[%s3 + $0x138] sm:$0xff] %vm4054, %v3805
  %4095 = vst.msk [vmem:[%s3 + $0x140] sm:$0xff] %vm4054, %v3806
  %4096 = vst.msk [vmem:[%s3 + $0x148] sm:$0xff] %vm4054, %v3807
  %4097 = vst.msk [vmem:[%s3 + $0x150] sm:$0xff] %vm4054, %v3808
  %4098 = vst.msk [vmem:[%s3 + $0x158] sm:$0xff] %vm4054, %v3809
  %4099 = vst.msk [vmem:[%s3 + $0x160] sm:$0xff] %vm4054, %v3810
  %4100 = vst.msk [vmem:[%s3 + $0x168] sm:$0xff] %vm4054, %v3811
  %4101 = vst.msk [vmem:[%s3 + $0x170] sm:$0xff] %vm4054, %v3812
  %4102 = vst.msk [vmem:[%s3 + $0x178] sm:$0xff] %vm4054, %v3813
  %4103 = vst.msk [vmem:[%s3 + $0x180] sm:$0xff] %vm4054, %v3814
  %4104 = vst.msk [vmem:[%s3 + $0x188] sm:$0xff] %vm4054, %v3815
  %4105 = vst.msk [vmem:[%s3 + $0x190] sm:$0xff] %vm4054, %v3816
  %4106 = vst.msk [vmem:[%s3 + $0x198] sm:$0xff] %vm4054, %v3817
  %4107 = vst.msk [vmem:[%s3 + $0x1a0] sm:$0xff] %vm4054, %v3818
  %4108 = vst.msk [vmem:[%s3 + $0x1a8] sm:$0xff] %vm4054, %v3819
  %4109 = vst.msk [vmem:[%s3 + $0x1b0] sm:$0xff] %vm4054, %v3820
  %4110 = vst.msk [vmem:[%s3 + $0x1b8] sm:$0xff] %vm4054, %v3821
  %4111 = vst.msk [vmem:[%s3 + $0x1c0] sm:$0xff] %vm4054, %v3822
  %4112 = vst.msk [vmem:[%s3 + $0x1c8] sm:$0xff] %vm4054, %v3823
  %4113 = vst.msk [vmem:[%s3 + $0x1d0] sm:$0xff] %vm4054, %v3824
  %4114 = vst.msk [vmem:[%s3 + $0x1d8] sm:$0xff] %vm4054, %v3825
  %4115 = vst.msk [vmem:[%s3 + $0x1e0] sm:$0xff] %vm4054, %v3826
  %4116 = vst.msk [vmem:[%s3 + $0x1e8] sm:$0xff] %vm4054, %v3827
  %4117 = vst.msk [vmem:[%s3 + $0x1f0] sm:$0xff] %vm4054, %v3828
  %4118 = vst.msk [vmem:[%s3 + $0x1f8] sm:$0xff] %vm4054, %v3829
  %4119 = vst.msk [vmem:[%s3 + $0x200] sm:$0xff] %vm4054, %v3830
  %4120 = vst.msk [vmem:[%s3 + $0x208] sm:$0xff] %vm4054, %v3831
  %4121 = vst.msk [vmem:[%s3 + $0x210] sm:$0xff] %vm4054, %v3832
  %4122 = vst.msk [vmem:[%s3 + $0x218] sm:$0xff] %vm4054, %v3833
  %4123 = vst.msk [vmem:[%s3 + $0x220] sm:$0xff] %vm4054, %v3834
  %4124 = vst.msk [vmem:[%s3 + $0x228] sm:$0xff] %vm4054, %v3835
  %4125 = vst.msk [vmem:[%s3 + $0x230] sm:$0xff] %vm4054, %v3836
  %4126 = vst.msk [vmem:[%s3 + $0x238] sm:$0xff] %vm4054, %v3837
  %4127 = vst.msk [vmem:[%s3 + $0x240] sm:$0xff] %vm4054, %v3838
  %4128 = vst.msk [vmem:[%s3 + $0x248] sm:$0xff] %vm4054, %v3839
  %4129 = vst.msk [vmem:[%s3 + $0x250] sm:$0xff] %vm4054, %v3840
  %4130 = vst.msk [vmem:[%s3 + $0x258] sm:$0xff] %vm4054, %v3841
  %4131 = vst.msk [vmem:[%s3 + $0x260] sm:$0xff] %vm4054, %v3842
  %4132 = vst.msk [vmem:[%s3 + $0x268] sm:$0xff] %vm4054, %v3843
  %4133 = vst.msk [vmem:[%s3 + $0x270] sm:$0xff] %vm4054, %v3844
  %4134 = vst.msk [vmem:[%s3 + $0x278] sm:$0xff] %vm4054, %v3845
  %4135 = vst.msk [vmem:[%s3 + $0x280] sm:$0xff] %vm4054, %v3846
  %4136 = vst.msk [vmem:[%s3 + $0x288] sm:$0xff] %vm4054, %v3847
  %4137 = vst.msk [vmem:[%s3 + $0x290] sm:$0xff] %vm4054, %v3848
  %4138 = vst.msk [vmem:[%s3 + $0x298] sm:$0xff] %vm4054, %v3849
  %4139 = vst.msk [vmem:[%s3 + $0x2a0] sm:$0xff] %vm4054, %v3850
  %4140 = vst.msk [vmem:[%s3 + $0x2a8] sm:$0xff] %vm4054, %v3851
  %4141 = vst.msk [vmem:[%s3 + $0x2b0] sm:$0xff] %vm4054, %v3852
  %4142 = vst.msk [vmem:[%s3 + $0x2b8] sm:$0xff] %vm4054, %v3853
  %4143 = vst.msk [vmem:[%s3 + $0x2c0] sm:$0xff] %vm4054, %v3854
  %4144 = vst.msk [vmem:[%s3 + $0x2c8] sm:$0xff] %vm4054, %v3855
  %4145 = vst.msk [vmem:[%s3 + $0x2d0] sm:$0xff] %vm4054, %v3856
  %4146 = vst.msk [vmem:[%s3 + $0x2d8] sm:$0xff] %vm4054, %v3857
  %4147 = vst.msk [vmem:[%s3 + $0x2e0] sm:$0xff] %vm4054, %v3858
  %4148 = vst.msk [vmem:[%s3 + $0x2e8] sm:$0xff] %vm4054, %v3859
  %4149 = vst.msk [vmem:[%s3 + $0x2f0] sm:$0xff] %vm4054, %v3860
  %4150 = vst.msk [vmem:[%s3 + $0x2f8] sm:$0xff] %vm4054, %v3861
  %4151 = vst.msk [vmem:[%s3 + $0x300] sm:$0xff] %vm4054, %v3862
  %4152 = vst.msk [vmem:[%s3 + $0x308] sm:$0xff] %vm4054, %v3863
  %4153 = vst.msk [vmem:[%s3 + $0x310] sm:$0xff] %vm4054, %v3864
  %4154 = vst.msk [vmem:[%s3 + $0x318] sm:$0xff] %vm4054, %v3865
  %4155 = vst.msk [vmem:[%s3 + $0x320] sm:$0xff] %vm4054, %v3866
  %4156 = vst.msk [vmem:[%s3 + $0x328] sm:$0xff] %vm4054, %v3867
  %4157 = vst.msk [vmem:[%s3 + $0x330] sm:$0xff] %vm4054, %v3868
  %4158 = vst.msk [vmem:[%s3 + $0x338] sm:$0xff] %vm4054, %v3869
  %4159 = vst.msk [vmem:[%s3 + $0x340] sm:$0xff] %vm4054, %v3870
  %4160 = vst.msk [vmem:[%s3 + $0x348] sm:$0xff] %vm4054, %v3871
  %4161 = vst.msk [vmem:[%s3 + $0x350] sm:$0xff] %vm4054, %v3872
  %4162 = vst.msk [vmem:[%s3 + $0x358] sm:$0xff] %vm4054, %v3873
  %4163 = vst.msk [vmem:[%s3 + $0x360] sm:$0xff] %vm4054, %v3874
  %4164 = vst.msk [vmem:[%s3 + $0x368] sm:$0xff] %vm4054, %v3875
  %4165 = vst.msk [vmem:[%s3 + $0x370] sm:$0xff] %vm4054, %v3876
  %4166 = vst.msk [vmem:[%s3 + $0x378] sm:$0xff] %vm4054, %v3877
  %4167 = vst.msk [vmem:[%s3 + $0x380] sm:$0xff] %vm4054, %v3878
  %4168 = vst.msk [vmem:[%s3 + $0x388] sm:$0xff] %vm4054, %v3879
  %4169 = vst.msk [vmem:[%s3 + $0x390] sm:$0xff] %vm4054, %v3880
  %4170 = vst.msk [vmem:[%s3 + $0x398] sm:$0xff] %vm4054, %v3881
  %4171 = vst.msk [vmem:[%s3 + $0x3a0] sm:$0xff] %vm4054, %v3882
  %4172 = vst.msk [vmem:[%s3 + $0x3a8] sm:$0xff] %vm4054, %v3883
  %4173 = vst.msk [vmem:[%s3 + $0x3b0] sm:$0xff] %vm4054, %v3884
  %4174 = vst.msk [vmem:[%s3 + $0x3b8] sm:$0xff] %vm4054, %v3885
  %4175 = vst.msk [vmem:[%s3 + $0x3c0] sm:$0xff] %vm4054, %v3886
  %4176 = vst.msk [vmem:[%s3 + $0x3c8] sm:$0xff] %vm4054, %v3887
  %4177 = vst.msk [vmem:[%s3 + $0x3d0] sm:$0xff] %vm4054, %v3888
  %4178 = vst.msk [vmem:[%s3 + $0x3d8] sm:$0xff] %vm4054, %v3889
  %4179 = vst.msk [vmem:[%s3 + $0x3e0] sm:$0xff] %vm4054, %v3890
  %4180 = vst.msk [vmem:[%s3 + $0x3e8] sm:$0xff] %vm4054, %v3891
  %4181 = vst.msk [vmem:[%s3 + $0x3f0] sm:$0xff] %vm4054, %v3892
  %4182 = vst.msk [vmem:[%s3 + $0x3f8] sm:$0xff] %vm4054, %v3893
  %4183 = vst.msk [vmem:[%s3 + $0x400] sm:$0xff] %vm4054, %v3894
  %4184 = vst.msk [vmem:[%s3 + $0x408] sm:$0xff] %vm4054, %v3895
  %4185 = vst.msk [vmem:[%s3 + $0x410] sm:$0xff] %vm4054, %v3896
  %4186 = vst.msk [vmem:[%s3 + $0x418] sm:$0xff] %vm4054, %v3897
  %4187 = vst.msk [vmem:[%s3 + $0x420] sm:$0xff] %vm4054, %v3898
  %4188 = vst.msk [vmem:[%s3 + $0x428] sm:$0xff] %vm4054, %v3899
  %4189 = vst.msk [vmem:[%s3 + $0x430] sm:$0xff] %vm4054, %v3900
  %4190 = vst.msk [vmem:[%s3 + $0x438] sm:$0xff] %vm4054, %v3901
  %4191 = vst.msk [vmem:[%s3 + $0x440] sm:$0xff] %vm4054, %v3902
  %4192 = vst.msk [vmem:[%s3 + $0x448] sm:$0xff] %vm4054, %v3903
  %4193 = vst.msk [vmem:[%s3 + $0x450] sm:$0xff] %vm4054, %v3904
  %4194 = vst.msk [vmem:[%s3 + $0x458] sm:$0xff] %vm4054, %v3905
  %4195 = vst.msk [vmem:[%s3 + $0x460] sm:$0xff] %vm4054, %v3906
  %4196 = vst.msk [vmem:[%s3 + $0x468] sm:$0xff] %vm4054, %v3907
  %4197 = vst.msk [vmem:[%s3 + $0x470] sm:$0xff] %vm4054, %v3908
  %4198 = vst.msk [vmem:[%s3 + $0x478] sm:$0xff] %vm4054, %v3909
  %4199 = vst.msk [vmem:[%s3 + $0x480] sm:$0xff] %vm4054, %v3910
  %4200 = vst.msk [vmem:[%s3 + $0x488] sm:$0xff] %vm4054, %v3911
  %4201 = vst.msk [vmem:[%s3 + $0x490] sm:$0xff] %vm4054, %v3912
  %4202 = vst.msk [vmem:[%s3 + $0x498] sm:$0xff] %vm4054, %v3913
  %4203 = vst.msk [vmem:[%s3 + $0x4a0] sm:$0xff] %vm4054, %v3914
  %4204 = vst.msk [vmem:[%s3 + $0x4a8] sm:$0xff] %vm4054, %v3915
  %4205 = vst.msk [vmem:[%s3 + $0x4b0] sm:$0xff] %vm4054, %v3916
  %4206 = vst.msk [vmem:[%s3 + $0x4b8] sm:$0xff] %vm4054, %v3917
  %4207 = vst.msk [vmem:[%s3 + $0x4c0] sm:$0xff] %vm4054, %v3918
  %4208 = vst.msk [vmem:[%s3 + $0x4c8] sm:$0xff] %vm4054, %v3919
  %4209 = vst.msk [vmem:[%s3 + $0x4d0] sm:$0xff] %vm4054, %v3920
  %4210 = vst.msk [vmem:[%s3 + $0x4d8] sm:$0xff] %vm4054, %v3921
  %4211 = vst.msk [vmem:[%s3 + $0x4e0] sm:$0xff] %vm4054, %v3922
  %4212 = vst.msk [vmem:[%s3 + $0x4e8] sm:$0xff] %vm4054, %v3923
  %4213 = vst.msk [vmem:[%s3 + $0x4f0] sm:$0xff] %vm4054, %v3924
  %4214 = vst.msk [vmem:[%s3 + $0x4f8] sm:$0xff] %vm4054, %v3925
  %4215 = vst.msk [vmem:[%s3 + $0x500] sm:$0xff] %vm4054, %v3926
  %4216 = vst.msk [vmem:[%s3 + $0x508] sm:$0xff] %vm4054, %v3927
  %4217 = vst.msk [vmem:[%s3 + $0x510] sm:$0xff] %vm4054, %v3928
  %4218 = vst.msk [vmem:[%s3 + $0x518] sm:$0xff] %vm4054, %v3929
  %4219 = vst.msk [vmem:[%s3 + $0x520] sm:$0xff] %vm4054, %v3930
  %4220 = vst.msk [vmem:[%s3 + $0x528] sm:$0xff] %vm4054, %v3931
  %4221 = vst.msk [vmem:[%s3 + $0x530] sm:$0xff] %vm4054, %v3932
  %4222 = vst.msk [vmem:[%s3 + $0x538] sm:$0xff] %vm4054, %v3933
  %4223 = vst.msk [vmem:[%s3 + $0x540] sm:$0xff] %vm4054, %v3934
  %4224 = vst.msk [vmem:[%s3 + $0x548] sm:$0xff] %vm4054, %v3935
  %4225 = vst.msk [vmem:[%s3 + $0x550] sm:$0xff] %vm4054, %v3936
  %4226 = vst.msk [vmem:[%s3 + $0x558] sm:$0xff] %vm4054, %v3937
  %4227 = vst.msk [vmem:[%s3 + $0x560] sm:$0xff] %vm4054, %v3938
  %4228 = vst.msk [vmem:[%s3 + $0x568] sm:$0xff] %vm4054, %v3939
  %4229 = vst.msk [vmem:[%s3 + $0x570] sm:$0xff] %vm4054, %v3940
  %4230 = vst.msk [vmem:[%s3 + $0x578] sm:$0xff] %vm4054, %v3941
  %4231 = vst.msk [vmem:[%s3 + $0x580] sm:$0xff] %vm4054, %v3942
  %4232 = vst.msk [vmem:[%s3 + $0x588] sm:$0xff] %vm4054, %v3943
  %4233 = vst.msk [vmem:[%s3 + $0x590] sm:$0xff] %vm4054, %v3944
  %4234 = vst.msk [vmem:[%s3 + $0x598] sm:$0xff] %vm4054, %v3945
  %4235 = vst.msk [vmem:[%s3 + $0x5a0] sm:$0xff] %vm4054, %v3946
  %4236 = vst.msk [vmem:[%s3 + $0x5a8] sm:$0xff] %vm4054, %v3947
  %4237 = vst.msk [vmem:[%s3 + $0x5b0] sm:$0xff] %vm4054, %v3948
  %4238 = vst.msk [vmem:[%s3 + $0x5b8] sm:$0xff] %vm4054, %v3949
  %4239 = vst.msk [vmem:[%s3 + $0x5c0] sm:$0xff] %vm4054, %v3950
  %4240 = vst.msk [vmem:[%s3 + $0x5c8] sm:$0xff] %vm4054, %v3951
  %4241 = vst.msk [vmem:[%s3 + $0x5d0] sm:$0xff] %vm4054, %v3952
  %4242 = vst.msk [vmem:[%s3 + $0x5d8] sm:$0xff] %vm4054, %v3953
  %4243 = vst.msk [vmem:[%s3 + $0x5e0] sm:$0xff] %vm4054, %v3954
  %4244 = vst.msk [vmem:[%s3 + $0x5e8] sm:$0xff] %vm4054, %v3955
  %4245 = vst.msk [vmem:[%s3 + $0x5f0] sm:$0xff] %vm4054, %v3956
  %4246 = vst.msk [vmem:[%s3 + $0x5f8] sm:$0xff] %vm4054, %v3957
  %4247 = vst.msk [vmem:[%s3 + $0x600] sm:$0xff] %vm4054, %v3958
  %4248 = vst.msk [vmem:[%s3 + $0x608] sm:$0xff] %vm4054, %v3959
  %4249 = vst.msk [vmem:[%s3 + $0x610] sm:$0xff] %vm4054, %v3960
  %4250 = vst.msk [vmem:[%s3 + $0x618] sm:$0xff] %vm4054, %v3961
  %4251 = vst.msk [vmem:[%s3 + $0x620] sm:$0xff] %vm4054, %v3962
  %4252 = vst.msk [vmem:[%s3 + $0x628] sm:$0xff] %vm4054, %v3963
  %4253 = vst.msk [vmem:[%s3 + $0x630] sm:$0xff] %vm4054, %v3964
  %4254 = vst.msk [vmem:[%s3 + $0x638] sm:$0xff] %vm4054, %v3965
  %4255 = vst.msk [vmem:[%s3 + $0x640] sm:$0xff] %vm4054, %v3966
  %4256 = vst.msk [vmem:[%s3 + $0x648] sm:$0xff] %vm4054, %v3967
  %4257 = vst.msk [vmem:[%s3 + $0x650] sm:$0xff] %vm4054, %v3968
  %4258 = vst.msk [vmem:[%s3 + $0x658] sm:$0xff] %vm4054, %v3969
  %4259 = vst.msk [vmem:[%s3 + $0x660] sm:$0xff] %vm4054, %v3970
  %4260 = vst.msk [vmem:[%s3 + $0x668] sm:$0xff] %vm4054, %v3971
  %4261 = vst.msk [vmem:[%s3 + $0x670] sm:$0xff] %vm4054, %v3972
  %4262 = vst.msk [vmem:[%s3 + $0x678] sm:$0xff] %vm4054, %v3973
  %4263 = vst.msk [vmem:[%s3 + $0x680] sm:$0xff] %vm4054, %v3974
  %4264 = vst.msk [vmem:[%s3 + $0x688] sm:$0xff] %vm4054, %v3975
  %4265 = vst.msk [vmem:[%s3 + $0x690] sm:$0xff] %vm4054, %v3976
  %4266 = vst.msk [vmem:[%s3 + $0x698] sm:$0xff] %vm4054, %v3977
  %4267 = vst.msk [vmem:[%s3 + $0x6a0] sm:$0xff] %vm4054, %v3978
  %4268 = vst.msk [vmem:[%s3 + $0x6a8] sm:$0xff] %vm4054, %v3979
  %4269 = vst.msk [vmem:[%s3 + $0x6b0] sm:$0xff] %vm4054, %v3980
  %4270 = vst.msk [vmem:[%s3 + $0x6b8] sm:$0xff] %vm4054, %v3981
  %4271 = vst.msk [vmem:[%s3 + $0x6c0] sm:$0xff] %vm4054, %v3982
  %4272 = vst.msk [vmem:[%s3 + $0x6c8] sm:$0xff] %vm4054, %v3983
  %4273 = vst.msk [vmem:[%s3 + $0x6d0] sm:$0xff] %vm4054, %v3984
  %4274 = vst.msk [vmem:[%s3 + $0x6d8] sm:$0xff] %vm4054, %v3985
  %4275 = vst.msk [vmem:[%s3 + $0x6e0] sm:$0xff] %vm4054, %v3986
  %4276 = vst.msk [vmem:[%s3 + $0x6e8] sm:$0xff] %vm4054, %v3987
  %4277 = vst.msk [vmem:[%s3 + $0x6f0] sm:$0xff] %vm4054, %v3988
  %4278 = vst.msk [vmem:[%s3 + $0x6f8] sm:$0xff] %vm4054, %v3989
  %4279 = vst.msk [vmem:[%s3 + $0x700] sm:$0xff] %vm4054, %v3990
  %4280 = vst.msk [vmem:[%s3 + $0x708] sm:$0xff] %vm4054, %v3991
  %4281 = vst.msk [vmem:[%s3 + $0x710] sm:$0xff] %vm4054, %v3992
  %4282 = vst.msk [vmem:[%s3 + $0x718] sm:$0xff] %vm4054, %v3993
  %4283 = vst.msk [vmem:[%s3 + $0x720] sm:$0xff] %vm4054, %v3994
  %4284 = vst.msk [vmem:[%s3 + $0x728] sm:$0xff] %vm4054, %v3995
  %4285 = vst.msk [vmem:[%s3 + $0x730] sm:$0xff] %vm4054, %v3996
  %4286 = vst.msk [vmem:[%s3 + $0x738] sm:$0xff] %vm4054, %v3997
  %4287 = vst.msk [vmem:[%s3 + $0x740] sm:$0xff] %vm4054, %v3998
  %4288 = vst.msk [vmem:[%s3 + $0x748] sm:$0xff] %vm4054, %v3999
  %4289 = vst.msk [vmem:[%s3 + $0x750] sm:$0xff] %vm4054, %v4000
  %4290 = vst.msk [vmem:[%s3 + $0x758] sm:$0xff] %vm4054, %v4001
  %4291 = vst.msk [vmem:[%s3 + $0x760] sm:$0xff] %vm4054, %v4002
  %4292 = vst.msk [vmem:[%s3 + $0x768] sm:$0xff] %vm4054, %v4003
  %4293 = vst.msk [vmem:[%s3 + $0x770] sm:$0xff] %vm4054, %v4004
  %4294 = vst.msk [vmem:[%s3 + $0x778] sm:$0xff] %vm4054, %v4005
  %4295 = vst.msk [vmem:[%s3 + $0x780] sm:$0xff] %vm4054, %v4006
  %4296 = vst.msk [vmem:[%s3 + $0x788] sm:$0xff] %vm4054, %v4007
  %4297 = vst.msk [vmem:[%s3 + $0x790] sm:$0xff] %vm4054, %v4008
  %4298 = vst.msk [vmem:[%s3 + $0x798] sm:$0xff] %vm4054, %v4009
  %4299 = vst.msk [vmem:[%s3 + $0x7a0] sm:$0xff] %vm4054, %v4010
  %4300 = vst.msk [vmem:[%s3 + $0x7a8] sm:$0xff] %vm4054, %v4011
  %4301 = vst.msk [vmem:[%s3 + $0x7b0] sm:$0xff] %vm4054, %v4012
  %4302 = vst.msk [vmem:[%s3 + $0x7b8] sm:$0xff] %vm4054, %v4013
  %4303 = vst.msk [vmem:[%s3 + $0x7c0] sm:$0xff] %vm4054, %v4014
  %4304 = vst.msk [vmem:[%s3 + $0x7c8] sm:$0xff] %vm4054, %v4015
  %4305 = vst.msk [vmem:[%s3 + $0x7d0] sm:$0xff] %vm4054, %v4016
  %4306 = vst.msk [vmem:[%s3 + $0x7d8] sm:$0xff] %vm4054, %v4017
  %4307 = vst.msk [vmem:[%s3 + $0x7e0] sm:$0xff] %vm4054, %v4018
  %4308 = vst.msk [vmem:[%s3 + $0x7e8] sm:$0xff] %vm4054, %v4019
  %4309 = vst.msk [vmem:[%s3 + $0x7f0] sm:$0xff] %vm4054, %v4020
  %4310 = vst.msk [vmem:[%s3 + $0x7f8] sm:$0xff] %vm4054, %v4021
  %4311 = vst.msk [vmem:[%s3 + $0x800] sm:$0xff] %vm4054, %v4022
  %4312 = vst.msk [vmem:[%s3 + $0x808] sm:$0xff] %vm4054, %v4023
  %4313 = vst.msk [vmem:[%s3 + $0x810] sm:$0xff] %vm4054, %v4024
  %4314 = vst.msk [vmem:[%s3 + $0x818] sm:$0xff] %vm4054, %v4025
  %4315 = vst.msk [vmem:[%s3 + $0x820] sm:$0xff] %vm4054, %v4026
  %4316 = vst.msk [vmem:[%s3 + $0x828] sm:$0xff] %vm4054, %v4027
  %4317 = vst.msk [vmem:[%s3 + $0x830] sm:$0xff] %vm4054, %v4028
  %4318 = vst.msk [vmem:[%s3 + $0x838] sm:$0xff] %vm4054, %v4029
  %4319 = vst.msk [vmem:[%s3 + $0x840] sm:$0xff] %vm4054, %v4030
  %4320 = vst.msk [vmem:[%s3 + $0x848] sm:$0xff] %vm4054, %v4031
  %4321 = vst.msk [vmem:[%s3 + $0x850] sm:$0xff] %vm4054, %v4032
  %4322 = vst.msk [vmem:[%s3 + $0x858] sm:$0xff] %vm4054, %v4033
  %4323 = vst.msk [vmem:[%s3 + $0x860] sm:$0xff] %vm4054, %v4034
  %4324 = vst.msk [vmem:[%s3 + $0x868] sm:$0xff] %vm4054, %v4035
  %4325 = vst.msk [vmem:[%s3 + $0x870] sm:$0xff] %vm4054, %v4036
  %4326 = vst.msk [vmem:[%s3 + $0x878] sm:$0xff] %vm4054, %v4037
  %4327 = vst.msk [vmem:[%s3 + $0x880] sm:$0xff] %vm4054, %v4038
  %4328 = vst.msk [vmem:[%s3 + $0x888] sm:$0xff] %vm4054, %v4039
  %4329 = vst.msk [vmem:[%s3 + $0x890] sm:$0xff] %vm4054, %v4040
  %4330 = vst.msk [vmem:[%s3 + $0x898] sm:$0xff] %vm4054, %v4041
  %4331 = vst.msk [vmem:[%s3 + $0x8a0] sm:$0xff] %vm4054, %v4042
  %4332 = vst.msk [vmem:[%s3 + $0x8a8] sm:$0xff] %vm4054, %v4043
  %4333 = vst.msk [vmem:[%s3 + $0x8b0] sm:$0xff] %vm4054, %v4044
  %4334 = vst.msk [vmem:[%s3 + $0x8b8] sm:$0xff] %vm4054, %v4045
  %4335 = vst.msk [vmem:[%s3 + $0x8c0] sm:$0xff] %vm4054, %v4046
  %4336 = vst.msk [vmem:[%s3 + $0x8c8] sm:$0xff] %vm4054, %v4047
  %4337 = vst.msk [vmem:[%s3 + $0x8d0] sm:$0xff] %vm4054, %v4048
  %4338 = vst.msk [vmem:[%s3 + $0x8d8] sm:$0xff] %vm4054, %v4049
  %4339 = vst.msk [vmem:[%s3 + $0x8e0] sm:$0xff] %vm4054, %v4050
  %4340 = vst.msk [vmem:[%s3 + $0x8e8] sm:$0xff] %vm4054, %v4051
  %4341 = vst.msk [vmem:[%s3 + $0x8f0] sm:$0xff] %vm4054, %v4052
  %4342 = vst.msk [vmem:[%s3 + $0x8f8] sm:$0xff] %vm4054, %v4053
  // Predicated region
  $region14: #{se_gate.1} parent=0 // pred_check
    _
  $region15: #{se_gate.1} parent=0 // pred_check_branch
    %4344 = sbr.rel (0) target = $region17
  $region16: #{se_gate.1} parent=0 // pred_region
    _
  $region17: #{se_gate.1} parent=0 // pred_fallthru
    _
  // Predicated region
  $region18: #{se_gate.1} parent=0 // pred_check
    _
  $region19: #{se_gate.1} parent=0 // pred_check_branch
    %4346 = sbr.rel (0) target = $region21
  $region20: #{se_gate.1} parent=0 // pred_region
    _
  $region21: #{se_gate.1} parent=0 // pred_fallthru
    _

</llo_original>
